<compile_context>
chip_gen: v5e
topology: v5e:2x2
jax: 0.10.0
libtpu: 0.0.40
codegen_flags: <defaults>
</compile_context>

<pallas_src>
import numpy as np
import jax
import jax.numpy as jnp
from jax import lax
from jax.experimental import pallas as pl
from jax.experimental.pallas import tpu as pltpu

# ---------------- config (synthetic, deterministic) -------------------------
SR = 16000
N_FFT = 64
WIN_LENGTH = 64
HOP_LENGTH = 16
F_MIN = 0.0
F_MAX = 8000.0
N_MELS = 8
POWER = 1.0            # self.mel_spectrogram.spectrogram.power
LOG_CLAMP = 1e-5

N_FREQS = N_FFT // 2 + 1          # 33 rFFT bins
DFT_LANES = 128                   # lane-padded width of the fused (cos|sin) constant
SIN_LANE_OFFSET = 64              # imag part lives at lanes [64, 64 + N_FREQS)
MAX_TILE_ROWS = 1024              # frames per grid step (fits v5e/v6e/v7x VMEM easily)

assert N_FFT % HOP_LENGTH == 0
assert N_FREQS <= SIN_LANE_OFFSET and SIN_LANE_OFFSET + N_FREQS <= DFT_LANES


# ---------------- parameter construction (plain numpy, deterministic) -------
def _hz_to_mel_slaney(f):
    f = np.asarray(f, dtype=np.float64)
    f_sp = 200.0 / 3.0
    mels = f / f_sp
    min_log_hz = 1000.0
    min_log_mel = min_log_hz / f_sp
    logstep = np.log(6.4) / 27.0
    return np.where(f >= min_log_hz,
                    min_log_mel + np.log(np.maximum(f, min_log_hz) / min_log_hz) / logstep,
                    mels)


def _mel_to_hz_slaney(m):
    m = np.asarray(m, dtype=np.float64)
    f_sp = 200.0 / 3.0
    freqs = f_sp * m
    min_log_hz = 1000.0
    min_log_mel = min_log_hz / f_sp
    logstep = np.log(6.4) / 27.0
    return np.where(m >= min_log_mel,
                    min_log_hz * np.exp(logstep * (m - min_log_mel)),
                    freqs)


def librosa_mel_fb(sr, n_fft, n_mels, fmin, fmax):
    """librosa.filters.mel (htk=False, norm='slaney'), returned as [n_freqs, n_mels]."""
    n_freqs = n_fft // 2 + 1
    fftfreqs = np.linspace(0.0, sr / 2.0, n_freqs)
    mel_pts = np.linspace(_hz_to_mel_slaney(fmin), _hz_to_mel_slaney(fmax), n_mels + 2)
    hz_pts = _mel_to_hz_slaney(mel_pts)
    fdiff = np.diff(hz_pts)
    ramps = hz_pts[:, None] - fftfreqs[None, :]
    lower = -ramps[:-2] / fdiff[:-1, None]
    upper = ramps[2:] / fdiff[1:, None]
    weights = np.maximum(0.0, np.minimum(lower, upper))
    enorm = 2.0 / (hz_pts[2:n_mels + 2] - hz_pts[:n_mels])
    weights = weights * enorm[:, None]                      # [n_mels, n_freqs]
    return np.asarray(weights.T, dtype=np.float32)          # [n_freqs, n_mels]


def hann_window(win_length, n_fft):
    n = np.arange(win_length, dtype=np.float64)
    w = 0.5 * (1.0 - np.cos(2.0 * np.pi * n / win_length))  # periodic hann
    if win_length < n_fft:                                   # center-pad to n_fft
        lpad = (n_fft - win_length) // 2
        w = np.pad(w, (lpad, n_fft - win_length - lpad))
    return np.asarray(w, dtype=np.float32)


_CONST_CACHE = None


def _mel_constants():
    """Fused windowed-DFT constant [n_fft, 128] and zero-padded mel fb [n_mels, 128]."""
    global _CONST_CACHE
    if _CONST_CACHE is None:
        win = hann_window(WIN_LENGTH, N_FFT).astype(np.float64)
        n = np.arange(N_FFT, dtype=np.float64)[:, None]
        k = np.arange(N_FREQS, dtype=np.float64)[None, :]
        ang = 2.0 * np.pi * n * k / N_FFT
        wdft = np.zeros((N_FFT, DFT_LANES), dtype=np.float32)
        wdft[:, :N_FREQS] = (win[:, None] * np.cos(ang)).astype(np.float32)
        wdft[:, SIN_LANE_OFFSET:SIN_LANE_OFFSET + N_FREQS] = \
            (win[:, None] * (-np.sin(ang))).astype(np.float32)
        fbt = np.zeros((N_MELS, DFT_LANES), dtype=np.float32)
        fbt[:, :N_FREQS] = librosa_mel_fb(SR, N_FFT, N_MELS, F_MIN, F_MAX).T
        _CONST_CACHE = (jnp.asarray(wdft), jnp.asarray(fbt))
    return _CONST_CACHE


# ---------------- Pallas kernel ---------------------------------------------
def mel_kernel(frames_ref, wdft_ref, fbt_ref, out_ref):
    # frames: [TILE, n_fft]        (hann already folded into wdft)
    # wdft:   [n_fft, 128]         (cos @ lanes 0..32, -sin @ lanes 64..96, zeros elsewhere)
    # fbt:    [n_mels, 128]        (mel fb transposed, zero outside lanes 0..32)
    # out:    [n_mels, TILE]       (lane-dense: frame axis on lanes)
    y = jnp.dot(frames_ref[...], wdft_ref[...],
                preferred_element_type=jnp.float32)                     # [TILE, 128]
    y2 = y * y
    # re^2 + im^2 lands in lanes [0, n_freqs); junk/duplicate lanes are zeroed by fbt.
    pw = y2 + pltpu.roll(y2, shift=SIN_LANE_OFFSET, axis=1)
    if POWER == 2.0:
        spec = pw
    elif POWER == 1.0:
        spec = jnp.sqrt(pw)
    else:
        spec = jnp.power(pw, POWER * 0.5)
    # transposed mel: contract the freq-lane axis of both operands -> [n_mels, TILE]
    mel = lax.dot_general(fbt_ref[...], spec,
                          dimension_numbers=(((1,), (1,)), ((), ())),
                          preferred_element_type=jnp.float32)
    out_ref[...] = jnp.log(jnp.maximum(mel, LOG_CLAMP))


def _pallas_mel(frames, wdft, fbt, tile):
    """frames: [B, n_frames_pad, n_fft] -> [B, n_mels, n_frames_pad]"""
    B, n_frames_pad, n_fft = frames.shape
    grid = (B, n_frames_pad // tile)
    return pl.pallas_call(
        mel_kernel,
        out_shape=jax.ShapeDtypeStruct((B, N_MELS, n_frames_pad), jnp.float32),
        grid_spec=pltpu.PrefetchScalarGridSpec(
            num_scalar_prefetch=0,
            grid=grid,
            in_specs=[
                # streamed frame tiles: double-buffered DMA overlapped with compute
                pl.BlockSpec((None, tile, n_fft), lambda b, i: (b, i, 0)),
                # small constants: constant index_map -> fetched once, VMEM-resident
                pl.BlockSpec((n_fft, DFT_LANES), lambda b, i: (0, 0)),
                pl.BlockSpec((N_MELS, DFT_LANES), lambda b, i: (0, 0)),
            ],
            out_specs=pl.BlockSpec((None, N_MELS, tile), lambda b, i: (b, 0, i)),
        ),
        compiler_params=pltpu.CompilerParams(
            dimension_semantics=("parallel", "parallel")),
    )(frames, wdft, fbt)


# ---------------- wrapper (glue in plain JAX) --------------------------------
def _round_up(x, m):
    return (x + m - 1) // m * m


def mel_spectrogram(audio):
    """audio: [B, T] float32  ->  [B, n_mels, T'] with T' = 1 + (T-1)//hop_length."""
    x = audio[:, :-1].astype(jnp.float32)                       # audio[..., :-1]
    B, T = x.shape
    pad = N_FFT // 2
    xp = jnp.pad(x, ((0, 0), (pad, pad)), mode="reflect")       # center=True, reflect
    n_frames = 1 + T // HOP_LENGTH
    r = N_FFT // HOP_LENGTH                                     # frame/hop overlap factor
    n_hops = n_frames + r - 1
    xp = xp[:, : n_hops * HOP_LENGTH]                           # samples past last frame unused
    hops = xp.reshape(B, n_hops, HOP_LENGTH)
    # Framing without an XLA gather: r shifted hop views concatenated on the sample axis.
    # TODO(synk): build frames in-kernel from a once-read contiguous audio chunk to cut the
    # streamed HBM input another ~4x (samples are still duplicated n_fft/hop times here).
    frames = jnp.concatenate([hops[:, j:j + n_frames, :] for j in range(r)], axis=-1)

    # pad the frame axis (per batch) to a multiple of the row tile; pad rows sliced off below
    tile = min(MAX_TILE_ROWS, max(128, _round_up(n_frames, 128)))
    n_frames_pad = _round_up(n_frames, tile)
    if n_frames_pad != n_frames:
        frames = jnp.pad(frames, ((0, 0), (0, n_frames_pad - n_frames), (0, 0)))

    wdft, fbt = _mel_constants()
    # TODO(synk): optional bf16 cast of frames/wdft for v6e/v7x (halves input bytes) once
    # validated against the accuracy budget; kept f32 here to preserve <=1e-4 agreement.
    out = _pallas_mel(frames, wdft, fbt, tile)                  # [B, n_mels, n_frames_pad]
    return out[:, :, :n_frames]


# ---------------- demo / sanity check ----------------------------------------
if __name__ == "__main__":
    key = jax.random.PRNGKey(0)
    B, T = 2, 19201                      # T-1 = 19200 samples -> 1201 frames, 2 tiles/batch
    audio = jax.random.normal(key, (B, T), dtype=jnp.float32)

    out = jax.block_until_ready(mel_spectrogram(audio))

    # pure-JAX reference of the same math
    x = audio[:, :-1]
    pad = N_FFT // 2
    xp = jnp.pad(x, ((0, 0), (pad, pad)), mode="reflect")
    n_frames = 1 + (T - 1) // HOP_LENGTH
    starts = np.arange(n_frames) * HOP_LENGTH
    idx = starts[:, None] + np.arange(N_FFT)[None, :]
    frames = xp[:, idx].reshape(B * n_frames, N_FFT)
    win = jnp.asarray(hann_window(WIN_LENGTH, N_FFT))
    w = frames * win[None, :]
    n = np.arange(N_FFT, dtype=np.float64)[:, None]
    k = np.arange(N_FREQS, dtype=np.float64)[None, :]
    ang = 2.0 * np.pi * n * k / N_FFT
    cos_m = jnp.asarray(np.cos(ang).astype(np.float32))
    sin_m = jnp.asarray((-np.sin(ang)).astype(np.float32))
    hp = jax.lax.Precision.HIGHEST
    re = jnp.dot(w, cos_m, precision=hp)
    im = jnp.dot(w, sin_m, precision=hp)
    spec = jnp.sqrt(re * re + im * im)
    fb = jnp.asarray(librosa_mel_fb(SR, N_FFT, N_MELS, F_MIN, F_MAX))
    ref = jnp.log(jnp.maximum(jnp.dot(spec, fb, precision=hp), LOG_CLAMP))
    ref = ref.reshape(B, n_frames, N_MELS).transpose(0, 2, 1)

    assert out.shape == (B, N_MELS, n_frames), out.shape
    np.testing.assert_allclose(np.asarray(out), np.asarray(ref), rtol=5e-4, atol=5e-4)
    print("KERNEL_OK")
</pallas_src>

<mosaic_0001>
module attributes {stable_mosaic.version = 11 : i64} {
  func.func @mel_kernel(%arg0: i32, %arg1: i32, %arg2: memref<1x1024x64xf32, #tpu.memory_space<vmem>>, %arg3: memref<64x128xf32, #tpu.memory_space<vmem>>, %arg4: memref<8x128xf32, #tpu.memory_space<vmem>>, %arg5: memref<1x8x1024xf32, #tpu.memory_space<vmem>>) attributes {dimension_semantics = [#tpu.dimension_semantics<parallel>, #tpu.dimension_semantics<parallel>], iteration_bounds = array<i64: 2, 2>, scalar_prefetch = 0 : i64, scratch_operands = 0 : i64, tpu.core_type = #tpu.core_type<tc>, window_params = [{transform_indices = @transform_0, window_bounds = array<i64: 1, 1024, 64>}, {pipeline_mode = #tpu.pipeline_mode<synchronous>, transform_indices = @transform_1, window_bounds = array<i64: 64, 128>}, {pipeline_mode = #tpu.pipeline_mode<synchronous>, transform_indices = @transform_2, window_bounds = array<i64: 8, 128>}, {transform_indices = @transform_3, window_bounds = array<i64: 1, 8, 1024>}]} {
    %c0 = arith.constant 0 : index
    %c0_0 = arith.constant 0 : index
    %c0_1 = arith.constant 0 : index
    %0 = vector.load %arg2[%c0, %c0_0, %c0_1] : memref<1x1024x64xf32, #tpu.memory_space<vmem>>, vector<1x1024x64xf32>
    %1 = vector.shape_cast %0 : vector<1x1024x64xf32> to vector<1024x64xf32>
    %c0_2 = arith.constant 0 : index
    %c0_3 = arith.constant 0 : index
    %2 = vector.load %arg3[%c0_2, %c0_3] : memref<64x128xf32, #tpu.memory_space<vmem>>, vector<64x128xf32>
    %cst = arith.constant dense<0.000000e+00> : vector<1024x128xf32>
    %3 = tpu.matmul %1, %2, %cst {dimension_numbers = #tpu.dot_dimension_numbers<[1], [0], [0], [1], [0, 0, 1, 1], [], []>} : vector<1024x64xf32>, vector<64x128xf32>, vector<1024x128xf32> -> vector<1024x128xf32>
    %4 = arith.mulf %3, %3 : vector<1024x128xf32>
    %c64_i32 = arith.constant 64 : i32
    %5 = tpu.dynamic_rotate %4 by %c64_i32 dim 1 : vector<1024x128xf32>, i32 -> vector<1024x128xf32>
    %6 = arith.addf %4, %5 : vector<1024x128xf32>
    %7 = math.sqrt %6 : vector<1024x128xf32>
    %c0_4 = arith.constant 0 : index
    %c0_5 = arith.constant 0 : index
    %8 = vector.load %arg4[%c0_4, %c0_5] : memref<8x128xf32, #tpu.memory_space<vmem>>, vector<8x128xf32>
    %cst_6 = arith.constant dense<0.000000e+00> : vector<8x1024xf32>
    %9 = tpu.matmul %8, %7, %cst_6 {dimension_numbers = #tpu.dot_dimension_numbers<[1], [1], [0], [0], [0, 0, 1, 0], [], []>} : vector<8x128xf32>, vector<1024x128xf32>, vector<8x1024xf32> -> vector<8x1024xf32>
    %cst_7 = arith.constant 9.99999974E-6 : f32
    %10 = vector.broadcast %cst_7 : f32 to vector<8x1024xf32>
    %11 = arith.maximumf %9, %10 : vector<8x1024xf32>
    %12 = math.log %11 : vector<8x1024xf32>
    %c0_8 = arith.constant 0 : index
    %c0_9 = arith.constant 0 : index
    %c0_10 = arith.constant 0 : index
    %13 = vector.load %arg5[%c0_8, %c0_9, %c0_10] : memref<1x8x1024xf32, #tpu.memory_space<vmem>>, vector<1x8x1024xf32>
    %14 = vector.shape_cast %13 : vector<1x8x1024xf32> to vector<8x1024xf32>
    %15 = vector.shape_cast %12 : vector<8x1024xf32> to vector<1x8x1024xf32>
    tpu.vector_store %arg5[%c0_8, %c0_9, %c0_10], %15 {strides = array<i32>} : memref<1x8x1024xf32, #tpu.memory_space<vmem>>, vector<1x8x1024xf32>,
    return
  }
  func.func @transform_0(%arg0: i32, %arg1: i32) -> (i32, i32, i32) {
    %c0_i32 = arith.constant 0 : i32
    %c0_i32_0 = arith.constant 0 : i32
    return %arg0, %arg1, %c0_i32 : i32, i32, i32
  }
  func.func @transform_1(%arg0: i32, %arg1: i32) -> (i32, i32) {
    %c0_i32 = arith.constant 0 : i32
    %c0_i32_0 = arith.constant 0 : i32
    %c0_i32_1 = arith.constant 0 : i32
    return %c0_i32, %c0_i32_0 : i32, i32
  }
  func.func @transform_2(%arg0: i32, %arg1: i32) -> (i32, i32) {
    %c0_i32 = arith.constant 0 : i32
    %c0_i32_0 = arith.constant 0 : i32
    %c0_i32_1 = arith.constant 0 : i32
    return %c0_i32, %c0_i32_0 : i32, i32
  }
  func.func @transform_3(%arg0: i32, %arg1: i32) -> (i32, i32, i32) {
    %c0_i32 = arith.constant 0 : i32
    %c0_i32_0 = arith.constant 0 : i32
    return %arg0, %c0_i32, %arg1 : i32, i32, i32
  }
}

</mosaic_0001>

<llo_original>
// kernel: tpu_custom_call.1
$region0: #{tpu_custom_call.1}
  #allocation0 [shape = 'u32[]', space=smem, size = 0x4, offset = 0x4, fixed_abs, tag = 'smem constant byte address 0x4 - core index']
  #allocation1 [shape = 'u32[72,128]{1,0:T(1,128)}', space=vmem, size = 0x9000, scoped, tag = 'internal scratch']
  %s0 = inlined_call_operand.vmem [shape: f32[2,2048,64], index: 0, kind: input, shape index: {}]
  %s1 = inlined_call_operand.vmem [shape: f32[64,128], index: 1, kind: input, shape index: {}]
  %s2 = inlined_call_operand.vmem [shape: f32[8,128], index: 2, kind: input, shape index: {}]
  %s3 = inlined_call_operand.hbm [shape: f32[2,8,2048], index: 3, kind: output, shape index: {}]
  %s4 = sld [smem:[#allocation0]]
  $region45: #{tpu_custom_call.1} parent=0
    _
  %s6 = ssub.s32 1, %s4
  %s7 = scalar_select 0, %s6, %s4
  $region1: #{tpu_custom_call.1} parent=0
    #allocation2 [shape = 'u8[65536]{0}', space=vmem, size = 0x10000, scoped, tag = 'output window, operand 0']
    #allocation3 [shape = 's32[2]{0}', space=sflag, size = 0x8, scoped, tag = 'scoped memory for tpu_custom_call.1']
    %8 = vsyncpa [#allocation3], 0
    %s9 = scalar_lea.sflag [#allocation3], 1
    %10 = vsyncpa %s9, 0
    loop: start=0, step=1, limit=6
    $region2: #{tpu_custom_call.1} parent=1 // loop_pre_header
      _
    $region3: #{tpu_custom_call.1} parent=1 // loop_header
      %s12 = sphi 0, %s16
      %p13 = scmp.ge.s32.totalorder %s12, 6
      %s19 = sphi 0, %s31
      %s20 = sphi 0, %s27
      %s21 = sphi 0, %s19
      %s22 = sphi 0, %s20
      %s23 = sphi 0, %s21
      %s24 = sphi 0, %s22
      %s36 = sphi 0, %s38
      %s39 = sphi 0, %s36
      %s40 = sphi 0, %s39
      %s56 = sphi 0, %s40
      %s60 = sphi 0, %s60
      %s62 = sphi 0, %s60
      %s63 = sphi 0, %s62
      %s77 = sphi 0, %s63
      %s81 = sphi 0, %s81
      %s83 = sphi 0, %s81
      %s84 = sphi 0, %s83
      %s98 = sphi 0, %s84
      %s106 = sphi 0, %s108
      %s109 = sphi 0, %s106
      %s110 = sphi 0, %s109
      %s126 = sphi 0, %s110
    $region4: #{tpu_custom_call.1} parent=1 // loop_header_branch
      %15 = sbr.rel (%p13) target = $region8
    $region5: #{tpu_custom_call.1} parent=1 // loop_body
      %s17 = ssub.s32 %s12, 1
      %s18 = ssub.s32 %s12, 2
      %s25 = sadd.s32 1, %s20
      %p26 = scmp.ge.s32.totalorder %s25, 2
      %s27 = scalar_select %p26, 0, %s25
      %s28 = sadd.s32 1, %s19
      %s29 = scalar_select %p26, %s28, %s19
      %p30 = scmp.ge.s32.totalorder %s29, 2
      %s31 = scalar_select %p30, 0, %s29
      %s32 = ssub.s32 %s19, %s31
      %s33 = ssub.s32 %s20, %s27
      %s34 = sor.u32 %s32, %s33
      %p35 = scmp.eq.s32.totalorder %s34, 0
      %s37 = sadd.s32 %s36, 1
      %s38 = scalar_select %p35, %s36, %s37
      %p41 = pneg %p35
      %p42 = scmp.eq.s32.totalorder %s12, 3
      %p43 = por %p41, %p42
      %p44 = scmp.ne.s32.totalorder %s36, %s39
      %p45 = scmp.eq.s32.totalorder %s12, 0
      %p46 = por %p44, %p45
      %p47 = scmp.ne.s32.totalorder %s36, %s39
      %p48 = scmp.eq.s32.totalorder %s17, 3
      %p49 = por %p47, %p48
      %p50 = scmp.ne.s32.totalorder %s39, %s40
      %p51 = scmp.eq.s32.totalorder %s17, 0
      %p52 = por %p50, %p51
      %p53 = scmp.ne.s32.totalorder %s39, %s40
      %p54 = scmp.eq.s32.totalorder %s18, 3
      %p55 = por %p53, %p54
      %p57 = scmp.ne.s32.totalorder %s40, %s56
      %p58 = scmp.eq.s32.totalorder %s18, 0
      %p59 = por %p57, %p58
      %s61 = sadd.s32 %s60, 1
      %p64 = scmp.eq.s32.totalorder %s12, 3
      %p65 = scmp.ne.s32.totalorder %s60, %s62
      %p66 = scmp.eq.s32.totalorder %s12, 0
      %p67 = por %p65, %p66
      %p68 = scmp.ne.s32.totalorder %s60, %s62
      %p69 = scmp.eq.s32.totalorder %s17, 3
      %p70 = por %p68, %p69
      %p71 = scmp.ne.s32.totalorder %s62, %s63
      %p72 = scmp.eq.s32.totalorder %s17, 0
      %p73 = por %p71, %p72
      %p74 = scmp.ne.s32.totalorder %s62, %s63
      %p75 = scmp.eq.s32.totalorder %s18, 3
      %p76 = por %p74, %p75
      %p78 = scmp.ne.s32.totalorder %s63, %s77
      %p79 = scmp.eq.s32.totalorder %s18, 0
      %p80 = por %p78, %p79
      %s82 = sadd.s32 %s81, 1
      %p85 = scmp.eq.s32.totalorder %s12, 3
      %p86 = scmp.ne.s32.totalorder %s81, %s83
      %p87 = scmp.eq.s32.totalorder %s12, 0
      %p88 = por %p86, %p87
      %p89 = scmp.ne.s32.totalorder %s81, %s83
      %p90 = scmp.eq.s32.totalorder %s17, 3
      %p91 = por %p89, %p90
      %p92 = scmp.ne.s32.totalorder %s83, %s84
      %p93 = scmp.eq.s32.totalorder %s17, 0
      %p94 = por %p92, %p93
      %p95 = scmp.ne.s32.totalorder %s83, %s84
      %p96 = scmp.eq.s32.totalorder %s18, 3
      %p97 = por %p95, %p96
      %p99 = scmp.ne.s32.totalorder %s84, %s98
      %p100 = scmp.eq.s32.totalorder %s18, 0
      %p101 = por %p99, %p100
      %s102 = ssub.s32 %s19, %s31
      %s103 = ssub.s32 %s20, %s27
      %s104 = sor.u32 %s102, %s103
      %p105 = scmp.eq.s32.totalorder %s104, 0
      %s107 = sadd.s32 %s106, 1
      %s108 = scalar_select %p105, %s106, %s107
      %p111 = pneg %p105
      %p112 = scmp.eq.s32.totalorder %s12, 3
      %p113 = por %p111, %p112
      %p114 = scmp.ne.s32.totalorder %s106, %s109
      %p115 = scmp.eq.s32.totalorder %s12, 0
      %p116 = por %p114, %p115
      %p117 = scmp.ne.s32.totalorder %s106, %s109
      %p118 = scmp.eq.s32.totalorder %s17, 3
      %p119 = por %p117, %p118
      %p120 = scmp.ne.s32.totalorder %s109, %s110
      %p121 = scmp.eq.s32.totalorder %s17, 0
      %p122 = por %p120, %p121
      %p123 = scmp.ne.s32.totalorder %s109, %s110
      %p124 = scmp.eq.s32.totalorder %s18, 3
      %p125 = por %p123, %p124
      %p127 = scmp.ne.s32.totalorder %s110, %s126
      %p128 = scmp.eq.s32.totalorder %s18, 0
      %p129 = por %p127, %p128
      %p130 = scmp.le.s32.totalorder 1, %s12
      %p131 = scmp.lt.s32.totalorder %s12, 5
      %p132 = pnand %p130, %p131
      %p133 = pneg %p132
      // Predicated region
      $region9: #{tpu_custom_call.1} parent=5 // pred_check
        _
      $region10: #{tpu_custom_call.1} parent=5 // pred_check_branch
        %135 = sbr.rel (%p132) target = $region12
      $region11: #{tpu_custom_call.1} parent=5 // pred_region
        %s136 = ssub.s32 %s12, 1
        // Predicated region
        $region13: #{tpu_custom_call.1} parent=11 // pred_check
          %p137 = pneg %p73
        $region14: #{tpu_custom_call.1} parent=11 // pred_check_branch
          %139 = sbr.rel (%p137) target = $region16
        $region15: #{tpu_custom_call.1} parent=11 // pred_region
          _
        $region16: #{tpu_custom_call.1} parent=11 // pred_fallthru
          _
        // Predicated region
        $region17: #{tpu_custom_call.1} parent=11 // pred_check
          %p140 = pneg %p94
        $region18: #{tpu_custom_call.1} parent=11 // pred_check_branch
          %142 = sbr.rel (%p140) target = $region20
        $region19: #{tpu_custom_call.1} parent=11 // pred_region
          _
        $region20: #{tpu_custom_call.1} parent=11 // pred_fallthru
          _
      $region12: #{tpu_custom_call.1} parent=5 // pred_fallthru
        _
      %p143 = scmp.lt.s32.totalorder %s12, 4
      // Predicated region
      $region21: #{tpu_custom_call.1} parent=5 // pred_check
        %p144 = pneg %p143
      $region22: #{tpu_custom_call.1} parent=5 // pred_check_branch
        %146 = sbr.rel (%p144) target = $region24
      $region23: #{tpu_custom_call.1} parent=5 // pred_region
        // Predicated region
        $region25: #{tpu_custom_call.1} parent=23 // pred_check
          %p147 = pneg %p46
        $region26: #{tpu_custom_call.1} parent=23 // pred_check_branch
          %149 = sbr.rel (%p147) target = $region28
        $region27: #{tpu_custom_call.1} parent=23 // pred_region
          %s150 = smul.u32 128, %s20
          %p151 = scmp.lt.s32.totalorder %s19, 1
          %s152 = scalar_select %p151, %s19, 1
          %p153 = scmp.lt.s32.totalorder %s150, 255
          %s154 = scalar_select %p153, %s150, 255
          %s155 = smul.addr %s152, 256
          %s156 = sadd.s32 %s154, %s155
          %s157 = smul.addr %s156, 8
          %s158 = scalar_lea.vmem %s0, %s157
          %s159 = smul.u32 128, %s20
        $region28: #{tpu_custom_call.1} parent=23 // pred_fallthru
          _
      $region24: #{tpu_custom_call.1} parent=5 // pred_fallthru
        _
      %p160 = scmp.le.s32.totalorder 1, %s12
      %p161 = scmp.lt.s32.totalorder %s12, 5
      %p162 = pnand %p160, %p161
      %p163 = pneg %p162
      // Predicated region
      $region29: #{tpu_custom_call.1} parent=5 // pred_check
        _
      $region30: #{tpu_custom_call.1} parent=5 // pred_check_branch
        %165 = sbr.rel (%p162) target = $region32
      $region31: #{tpu_custom_call.1} parent=5 // pred_region
        %s166 = ssub.s32 %s12, 1
        %s167 = smul.u32 128, %s22
        %p168 = scmp.lt.s32.totalorder %s21, 1
        %s169 = scalar_select %p168, %s21, 1
        %p170 = scmp.lt.s32.totalorder %s167, 255
        %s171 = scalar_select %p170, %s167, 255
        %s172 = smul.addr %s169, 256
        %s173 = sadd.s32 %s171, %s172
        %s174 = smul.addr %s173, 8
        %s175 = scalar_lea.vmem %s0, %s174
        %p176 = pneg %p52
        %p177 = pneg %p49
        %p178 = pneg %p73
        %p179 = pneg %p70
        %p180 = pneg %p94
        %p181 = pneg %p91
        %p182 = pneg %p122
        %p183 = pneg %p119
        %s184 = sand.u32 %s109, 1
        %s185 = scalar_lea.sflag [#allocation3], %s184
        %s186 = sand.u32 %s109, 1
        %s187 = smul.addr %s186, 64
        %s188 = scalar_lea.vmem [#allocation2], %s187
        %s189 = smul.u32 128, %s22
        %p190 = scmp.lt.s32.totalorder %s21, 1
        %s191 = scalar_select %p190, %s21, 1
        %p192 = scmp.lt.s32.totalorder %s189, 255
        %s193 = scalar_select %p192, %s189, 255
        %s194 = smul.addr %s191, 256
        %s195 = sadd.s32 %s193, %s194
        %s196 = smul.addr %s195, 8
        %s197 = scalar_lea.vmem %s0, %s196
        %s198 = smul.u32 128, %s22
        %s199 = smul.u32 8, %s22
        %v200 = vld [vmem:[%s197] sm:$0xff]
        %v201 = vld [vmem:[%s197 + $0x8] sm:$0xff]
        %v202 = vld [vmem:[%s197 + $0x10] sm:$0xff]
        %v203 = vld [vmem:[%s197 + $0x18] sm:$0xff]
        %v204 = vld [vmem:[%s197 + $0x20] sm:$0xff]
        %v205 = vld [vmem:[%s197 + $0x28] sm:$0xff]
        %v206 = vld [vmem:[%s197 + $0x30] sm:$0xff]
        %v207 = vld [vmem:[%s197 + $0x38] sm:$0xff]
        %v208 = vld [vmem:[%s197 + $0x40] sm:$0xff]
        %v209 = vld [vmem:[%s197 + $0x48] sm:$0xff]
        %v210 = vld [vmem:[%s197 + $0x50] sm:$0xff]
        %v211 = vld [vmem:[%s197 + $0x58] sm:$0xff]
        %v212 = vld [vmem:[%s197 + $0x60] sm:$0xff]
        %v213 = vld [vmem:[%s197 + $0x68] sm:$0xff]
        %v214 = vld [vmem:[%s197 + $0x70] sm:$0xff]
        %v215 = vld [vmem:[%s197 + $0x78] sm:$0xff]
        %v216 = vld [vmem:[%s197 + $0x80] sm:$0xff]
        %v217 = vld [vmem:[%s197 + $0x88] sm:$0xff]
        %v218 = vld [vmem:[%s197 + $0x90] sm:$0xff]
        %v219 = vld [vmem:[%s197 + $0x98] sm:$0xff]
        %v220 = vld [vmem:[%s197 + $0xa0] sm:$0xff]
        %v221 = vld [vmem:[%s197 + $0xa8] sm:$0xff]
        %v222 = vld [vmem:[%s197 + $0xb0] sm:$0xff]
        %v223 = vld [vmem:[%s197 + $0xb8] sm:$0xff]
        %v224 = vld [vmem:[%s197 + $0xc0] sm:$0xff]
        %v225 = vld [vmem:[%s197 + $0xc8] sm:$0xff]
        %v226 = vld [vmem:[%s197 + $0xd0] sm:$0xff]
        %v227 = vld [vmem:[%s197 + $0xd8] sm:$0xff]
        %v228 = vld [vmem:[%s197 + $0xe0] sm:$0xff]
        %v229 = vld [vmem:[%s197 + $0xe8] sm:$0xff]
        %v230 = vld [vmem:[%s197 + $0xf0] sm:$0xff]
        %v231 = vld [vmem:[%s197 + $0xf8] sm:$0xff]
        %v232 = vld [vmem:[%s197 + $0x100] sm:$0xff]
        %v233 = vld [vmem:[%s197 + $0x108] sm:$0xff]
        %v234 = vld [vmem:[%s197 + $0x110] sm:$0xff]
        %v235 = vld [vmem:[%s197 + $0x118] sm:$0xff]
        %v236 = vld [vmem:[%s197 + $0x120] sm:$0xff]
        %v237 = vld [vmem:[%s197 + $0x128] sm:$0xff]
        %v238 = vld [vmem:[%s197 + $0x130] sm:$0xff]
        %v239 = vld [vmem:[%s197 + $0x138] sm:$0xff]
        %v240 = vld [vmem:[%s197 + $0x140] sm:$0xff]
        %v241 = vld [vmem:[%s197 + $0x148] sm:$0xff]
        %v242 = vld [vmem:[%s197 + $0x150] sm:$0xff]
        %v243 = vld [vmem:[%s197 + $0x158] sm:$0xff]
        %v244 = vld [vmem:[%s197 + $0x160] sm:$0xff]
        %v245 = vld [vmem:[%s197 + $0x168] sm:$0xff]
        %v246 = vld [vmem:[%s197 + $0x170] sm:$0xff]
        %v247 = vld [vmem:[%s197 + $0x178] sm:$0xff]
        %v248 = vld [vmem:[%s197 + $0x180] sm:$0xff]
        %v249 = vld [vmem:[%s197 + $0x188] sm:$0xff]
        %v250 = vld [vmem:[%s197 + $0x190] sm:$0xff]
        %v251 = vld [vmem:[%s197 + $0x198] sm:$0xff]
        %v252 = vld [vmem:[%s197 + $0x1a0] sm:$0xff]
        %v253 = vld [vmem:[%s197 + $0x1a8] sm:$0xff]
        %v254 = vld [vmem:[%s197 + $0x1b0] sm:$0xff]
        %v255 = vld [vmem:[%s197 + $0x1b8] sm:$0xff]
        %v256 = vld [vmem:[%s197 + $0x1c0] sm:$0xff]
        %v257 = vld [vmem:[%s197 + $0x1c8] sm:$0xff]
        %v258 = vld [vmem:[%s197 + $0x1d0] sm:$0xff]
        %v259 = vld [vmem:[%s197 + $0x1d8] sm:$0xff]
        %v260 = vld [vmem:[%s197 + $0x1e0] sm:$0xff]
        %v261 = vld [vmem:[%s197 + $0x1e8] sm:$0xff]
        %v262 = vld [vmem:[%s197 + $0x1f0] sm:$0xff]
        %v263 = vld [vmem:[%s197 + $0x1f8] sm:$0xff]
        %v264 = vld [vmem:[%s197 + $0x200] sm:$0xff]
        %v265 = vld [vmem:[%s197 + $0x208] sm:$0xff]
        %v266 = vld [vmem:[%s197 + $0x210] sm:$0xff]
        %v267 = vld [vmem:[%s197 + $0x218] sm:$0xff]
        %v268 = vld [vmem:[%s197 + $0x220] sm:$0xff]
        %v269 = vld [vmem:[%s197 + $0x228] sm:$0xff]
        %v270 = vld [vmem:[%s197 + $0x230] sm:$0xff]
        %v271 = vld [vmem:[%s197 + $0x238] sm:$0xff]
        %v272 = vld [vmem:[%s197 + $0x240] sm:$0xff]
        %v273 = vld [vmem:[%s197 + $0x248] sm:$0xff]
        %v274 = vld [vmem:[%s197 + $0x250] sm:$0xff]
        %v275 = vld [vmem:[%s197 + $0x258] sm:$0xff]
        %v276 = vld [vmem:[%s197 + $0x260] sm:$0xff]
        %v277 = vld [vmem:[%s197 + $0x268] sm:$0xff]
        %v278 = vld [vmem:[%s197 + $0x270] sm:$0xff]
        %v279 = vld [vmem:[%s197 + $0x278] sm:$0xff]
        %v280 = vld [vmem:[%s197 + $0x280] sm:$0xff]
        %v281 = vld [vmem:[%s197 + $0x288] sm:$0xff]
        %v282 = vld [vmem:[%s197 + $0x290] sm:$0xff]
        %v283 = vld [vmem:[%s197 + $0x298] sm:$0xff]
        %v284 = vld [vmem:[%s197 + $0x2a0] sm:$0xff]
        %v285 = vld [vmem:[%s197 + $0x2a8] sm:$0xff]
        %v286 = vld [vmem:[%s197 + $0x2b0] sm:$0xff]
        %v287 = vld [vmem:[%s197 + $0x2b8] sm:$0xff]
        %v288 = vld [vmem:[%s197 + $0x2c0] sm:$0xff]
        %v289 = vld [vmem:[%s197 + $0x2c8] sm:$0xff]
        %v290 = vld [vmem:[%s197 + $0x2d0] sm:$0xff]
        %v291 = vld [vmem:[%s197 + $0x2d8] sm:$0xff]
        %v292 = vld [vmem:[%s197 + $0x2e0] sm:$0xff]
        %v293 = vld [vmem:[%s197 + $0x2e8] sm:$0xff]
        %v294 = vld [vmem:[%s197 + $0x2f0] sm:$0xff]
        %v295 = vld [vmem:[%s197 + $0x2f8] sm:$0xff]
        %v296 = vld [vmem:[%s197 + $0x300] sm:$0xff]
        %v297 = vld [vmem:[%s197 + $0x308] sm:$0xff]
        %v298 = vld [vmem:[%s197 + $0x310] sm:$0xff]
        %v299 = vld [vmem:[%s197 + $0x318] sm:$0xff]
        %v300 = vld [vmem:[%s197 + $0x320] sm:$0xff]
        %v301 = vld [vmem:[%s197 + $0x328] sm:$0xff]
        %v302 = vld [vmem:[%s197 + $0x330] sm:$0xff]
        %v303 = vld [vmem:[%s197 + $0x338] sm:$0xff]
        %v304 = vld [vmem:[%s197 + $0x340] sm:$0xff]
        %v305 = vld [vmem:[%s197 + $0x348] sm:$0xff]
        %v306 = vld [vmem:[%s197 + $0x350] sm:$0xff]
        %v307 = vld [vmem:[%s197 + $0x358] sm:$0xff]
        %v308 = vld [vmem:[%s197 + $0x360] sm:$0xff]
        %v309 = vld [vmem:[%s197 + $0x368] sm:$0xff]
        %v310 = vld [vmem:[%s197 + $0x370] sm:$0xff]
        %v311 = vld [vmem:[%s197 + $0x378] sm:$0xff]
        %v312 = vld [vmem:[%s197 + $0x380] sm:$0xff]
        %v313 = vld [vmem:[%s197 + $0x388] sm:$0xff]
        %v314 = vld [vmem:[%s197 + $0x390] sm:$0xff]
        %v315 = vld [vmem:[%s197 + $0x398] sm:$0xff]
        %v316 = vld [vmem:[%s197 + $0x3a0] sm:$0xff]
        %v317 = vld [vmem:[%s197 + $0x3a8] sm:$0xff]
        %v318 = vld [vmem:[%s197 + $0x3b0] sm:$0xff]
        %v319 = vld [vmem:[%s197 + $0x3b8] sm:$0xff]
        %v320 = vld [vmem:[%s197 + $0x3c0] sm:$0xff]
        %v321 = vld [vmem:[%s197 + $0x3c8] sm:$0xff]
        %v322 = vld [vmem:[%s197 + $0x3d0] sm:$0xff]
        %v323 = vld [vmem:[%s197 + $0x3d8] sm:$0xff]
        %v324 = vld [vmem:[%s197 + $0x3e0] sm:$0xff]
        %v325 = vld [vmem:[%s197 + $0x3e8] sm:$0xff]
        %v326 = vld [vmem:[%s197 + $0x3f0] sm:$0xff]
        %v327 = vld [vmem:[%s197 + $0x3f8] sm:$0xff]
        %v328 = vld [vmem:[%s1] sm:$0xff]
        %v329 = vld [vmem:[%s1 + $0x8] sm:$0xff]
        %v330 = vld [vmem:[%s1 + $0x10] sm:$0xff]
        %v331 = vld [vmem:[%s1 + $0x18] sm:$0xff]
        %v332 = vld [vmem:[%s1 + $0x20] sm:$0xff]
        %v333 = vld [vmem:[%s1 + $0x28] sm:$0xff]
        %v334 = vld [vmem:[%s1 + $0x30] sm:$0xff]
        %v335 = vld [vmem:[%s1 + $0x38] sm:$0xff]
        %vm336 = vcmask 523264
        %v338 = vsel %vm336, %v200, 0
        %v341 = vsel %vm336, %v201, 0
        %v344 = vsel %vm336, %v202, 0
        %v347 = vsel %vm336, %v203, 0
        %v350 = vsel %vm336, %v204, 0
        %v353 = vsel %vm336, %v205, 0
        %v356 = vsel %vm336, %v206, 0
        %v359 = vsel %vm336, %v207, 0
        %v362 = vsel %vm336, %v208, 0
        %v365 = vsel %vm336, %v209, 0
        %v368 = vsel %vm336, %v210, 0
        %v371 = vsel %vm336, %v211, 0
        %v374 = vsel %vm336, %v212, 0
        %v377 = vsel %vm336, %v213, 0
        %v380 = vsel %vm336, %v214, 0
        %v383 = vsel %vm336, %v215, 0
        %v386 = vsel %vm336, %v216, 0
        %v389 = vsel %vm336, %v217, 0
        %v392 = vsel %vm336, %v218, 0
        %v395 = vsel %vm336, %v219, 0
        %v398 = vsel %vm336, %v220, 0
        %v401 = vsel %vm336, %v221, 0
        %v404 = vsel %vm336, %v222, 0
        %v407 = vsel %vm336, %v223, 0
        %v410 = vsel %vm336, %v224, 0
        %v413 = vsel %vm336, %v225, 0
        %v416 = vsel %vm336, %v226, 0
        %v419 = vsel %vm336, %v227, 0
        %v422 = vsel %vm336, %v228, 0
        %v425 = vsel %vm336, %v229, 0
        %v428 = vsel %vm336, %v230, 0
        %v431 = vsel %vm336, %v231, 0
        %v434 = vsel %vm336, %v232, 0
        %v437 = vsel %vm336, %v233, 0
        %v440 = vsel %vm336, %v234, 0
        %v443 = vsel %vm336, %v235, 0
        %v446 = vsel %vm336, %v236, 0
        %v449 = vsel %vm336, %v237, 0
        %v452 = vsel %vm336, %v238, 0
        %v455 = vsel %vm336, %v239, 0
        %v458 = vsel %vm336, %v240, 0
        %v461 = vsel %vm336, %v241, 0
        %v464 = vsel %vm336, %v242, 0
        %v467 = vsel %vm336, %v243, 0
        %v470 = vsel %vm336, %v244, 0
        %v473 = vsel %vm336, %v245, 0
        %v476 = vsel %vm336, %v246, 0
        %v479 = vsel %vm336, %v247, 0
        %v482 = vsel %vm336, %v248, 0
        %v485 = vsel %vm336, %v249, 0
        %v488 = vsel %vm336, %v250, 0
        %v491 = vsel %vm336, %v251, 0
        %v494 = vsel %vm336, %v252, 0
        %v497 = vsel %vm336, %v253, 0
        %v500 = vsel %vm336, %v254, 0
        %v503 = vsel %vm336, %v255, 0
        %v506 = vsel %vm336, %v256, 0
        %v509 = vsel %vm336, %v257, 0
        %v512 = vsel %vm336, %v258, 0
        %v515 = vsel %vm336, %v259, 0
        %v518 = vsel %vm336, %v260, 0
        %v521 = vsel %vm336, %v261, 0
        %v524 = vsel %vm336, %v262, 0
        %v527 = vsel %vm336, %v263, 0
        %v530 = vsel %vm336, %v264, 0
        %v533 = vsel %vm336, %v265, 0
        %v536 = vsel %vm336, %v266, 0
        %v539 = vsel %vm336, %v267, 0
        %v542 = vsel %vm336, %v268, 0
        %v545 = vsel %vm336, %v269, 0
        %v548 = vsel %vm336, %v270, 0
        %v551 = vsel %vm336, %v271, 0
        %v554 = vsel %vm336, %v272, 0
        %v557 = vsel %vm336, %v273, 0
        %v560 = vsel %vm336, %v274, 0
        %v563 = vsel %vm336, %v275, 0
        %v566 = vsel %vm336, %v276, 0
        %v569 = vsel %vm336, %v277, 0
        %v572 = vsel %vm336, %v278, 0
        %v575 = vsel %vm336, %v279, 0
        %v578 = vsel %vm336, %v280, 0
        %v581 = vsel %vm336, %v281, 0
        %v584 = vsel %vm336, %v282, 0
        %v587 = vsel %vm336, %v283, 0
        %v590 = vsel %vm336, %v284, 0
        %v593 = vsel %vm336, %v285, 0
        %v596 = vsel %vm336, %v286, 0
        %v599 = vsel %vm336, %v287, 0
        %v602 = vsel %vm336, %v288, 0
        %v605 = vsel %vm336, %v289, 0
        %v608 = vsel %vm336, %v290, 0
        %v611 = vsel %vm336, %v291, 0
        %v614 = vsel %vm336, %v292, 0
        %v617 = vsel %vm336, %v293, 0
        %v620 = vsel %vm336, %v294, 0
        %v623 = vsel %vm336, %v295, 0
        %v626 = vsel %vm336, %v296, 0
        %v629 = vsel %vm336, %v297, 0
        %v632 = vsel %vm336, %v298, 0
        %v635 = vsel %vm336, %v299, 0
        %v638 = vsel %vm336, %v300, 0
        %v641 = vsel %vm336, %v301, 0
        %v644 = vsel %vm336, %v302, 0
        %v647 = vsel %vm336, %v303, 0
        %v650 = vsel %vm336, %v304, 0
        %v653 = vsel %vm336, %v305, 0
        %v656 = vsel %vm336, %v306, 0
        %v659 = vsel %vm336, %v307, 0
        %v662 = vsel %vm336, %v308, 0
        %v665 = vsel %vm336, %v309, 0
        %v668 = vsel %vm336, %v310, 0
        %v671 = vsel %vm336, %v311, 0
        %v674 = vsel %vm336, %v312, 0
        %v677 = vsel %vm336, %v313, 0
        %v680 = vsel %vm336, %v314, 0
        %v683 = vsel %vm336, %v315, 0
        %v686 = vsel %vm336, %v316, 0
        %v689 = vsel %vm336, %v317, 0
        %v692 = vsel %vm336, %v318, 0
        %v695 = vsel %vm336, %v319, 0
        %v698 = vsel %vm336, %v320, 0
        %v701 = vsel %vm336, %v321, 0
        %v704 = vsel %vm336, %v322, 0
        %v707 = vsel %vm336, %v323, 0
        %v710 = vsel %vm336, %v324, 0
        %v713 = vsel %vm336, %v325, 0
        %v716 = vsel %vm336, %v326, 0
        %v719 = vsel %vm336, %v327, 0
        %721 = vmatpush.msra.mxu0 0.0
        %722 = vmatpush.msra.mxu0 0.0
        %723 = vmatpush.msra.mxu0 0.0
        %724 = vmatpush.msra.mxu0 0.0
        %725 = vmatpush.msra.mxu0 0.0
        %726 = vmatpush.msra.mxu0 0.0
        %727 = vmatpush.msra.mxu0 0.0
        %728 = vmatpush.msra.mxu0 0.0
        %729 = vmatpush.msra.mxu0 %v335
        %730 = vmatpush.msra.mxu0 %v334
        %731 = vmatpush.msra.mxu0 %v333
        %732 = vmatpush.msra.mxu0 %v332
        %733 = vmatpush.msra.mxu0 %v331
        %734 = vmatpush.msra.mxu0 %v330
        %735 = vmatpush.msra.mxu0 %v329
        %736 = vmatpush.msra.mxu0 %v328
        %737 = vmatmul.f32.gmra.mxu0 %v338
        %v738 = vpop.f32.mrf.mxu0
        %v739 = vadd.f32 0.0, %v738
        %740 = vmatmul.f32.gmra.mxu0 %v341
        %v741 = vpop.f32.mrf.mxu0
        %v742 = vadd.f32 0.0, %v741
        %743 = vmatmul.f32.gmra.mxu0 %v344
        %v744 = vpop.f32.mrf.mxu0
        %v745 = vadd.f32 0.0, %v744
        %746 = vmatmul.f32.gmra.mxu0 %v347
        %v747 = vpop.f32.mrf.mxu0
        %v748 = vadd.f32 0.0, %v747
        %749 = vmatmul.f32.gmra.mxu0 %v350
        %v750 = vpop.f32.mrf.mxu0
        %v751 = vadd.f32 0.0, %v750
        %752 = vmatmul.f32.gmra.mxu0 %v353
        %v753 = vpop.f32.mrf.mxu0
        %v754 = vadd.f32 0.0, %v753
        %755 = vmatmul.f32.gmra.mxu0 %v356
        %v756 = vpop.f32.mrf.mxu0
        %v757 = vadd.f32 0.0, %v756
        %758 = vmatmul.f32.gmra.mxu0 %v359
        %v759 = vpop.f32.mrf.mxu0
        %v760 = vadd.f32 0.0, %v759
        %761 = vmatmul.f32.gmra.mxu0 %v362
        %v762 = vpop.f32.mrf.mxu0
        %v763 = vadd.f32 0.0, %v762
        %764 = vmatmul.f32.gmra.mxu0 %v365
        %v765 = vpop.f32.mrf.mxu0
        %v766 = vadd.f32 0.0, %v765
        %767 = vmatmul.f32.gmra.mxu0 %v368
        %v768 = vpop.f32.mrf.mxu0
        %v769 = vadd.f32 0.0, %v768
        %770 = vmatmul.f32.gmra.mxu0 %v371
        %v771 = vpop.f32.mrf.mxu0
        %v772 = vadd.f32 0.0, %v771
        %773 = vmatmul.f32.gmra.mxu0 %v374
        %v774 = vpop.f32.mrf.mxu0
        %v775 = vadd.f32 0.0, %v774
        %776 = vmatmul.f32.gmra.mxu0 %v377
        %v777 = vpop.f32.mrf.mxu0
        %v778 = vadd.f32 0.0, %v777
        %779 = vmatmul.f32.gmra.mxu0 %v380
        %v780 = vpop.f32.mrf.mxu0
        %v781 = vadd.f32 0.0, %v780
        %782 = vmatmul.f32.gmra.mxu0 %v383
        %v783 = vpop.f32.mrf.mxu0
        %v784 = vadd.f32 0.0, %v783
        %785 = vmatmul.f32.gmra.mxu0 %v386
        %v786 = vpop.f32.mrf.mxu0
        %v787 = vadd.f32 0.0, %v786
        %788 = vmatmul.f32.gmra.mxu0 %v389
        %v789 = vpop.f32.mrf.mxu0
        %v790 = vadd.f32 0.0, %v789
        %791 = vmatmul.f32.gmra.mxu0 %v392
        %v792 = vpop.f32.mrf.mxu0
        %v793 = vadd.f32 0.0, %v792
        %794 = vmatmul.f32.gmra.mxu0 %v395
        %v795 = vpop.f32.mrf.mxu0
        %v796 = vadd.f32 0.0, %v795
        %797 = vmatmul.f32.gmra.mxu0 %v398
        %v798 = vpop.f32.mrf.mxu0
        %v799 = vadd.f32 0.0, %v798
        %800 = vmatmul.f32.gmra.mxu0 %v401
        %v801 = vpop.f32.mrf.mxu0
        %v802 = vadd.f32 0.0, %v801
        %803 = vmatmul.f32.gmra.mxu0 %v404
        %v804 = vpop.f32.mrf.mxu0
        %v805 = vadd.f32 0.0, %v804
        %806 = vmatmul.f32.gmra.mxu0 %v407
        %v807 = vpop.f32.mrf.mxu0
        %v808 = vadd.f32 0.0, %v807
        %809 = vmatmul.f32.gmra.mxu0 %v410
        %v810 = vpop.f32.mrf.mxu0
        %v811 = vadd.f32 0.0, %v810
        %812 = vmatmul.f32.gmra.mxu0 %v413
        %v813 = vpop.f32.mrf.mxu0
        %v814 = vadd.f32 0.0, %v813
        %815 = vmatmul.f32.gmra.mxu0 %v416
        %v816 = vpop.f32.mrf.mxu0
        %v817 = vadd.f32 0.0, %v816
        %818 = vmatmul.f32.gmra.mxu0 %v419
        %v819 = vpop.f32.mrf.mxu0
        %v820 = vadd.f32 0.0, %v819
        %821 = vmatmul.f32.gmra.mxu0 %v422
        %v822 = vpop.f32.mrf.mxu0
        %v823 = vadd.f32 0.0, %v822
        %824 = vmatmul.f32.gmra.mxu0 %v425
        %v825 = vpop.f32.mrf.mxu0
        %v826 = vadd.f32 0.0, %v825
        %827 = vmatmul.f32.gmra.mxu0 %v428
        %v828 = vpop.f32.mrf.mxu0
        %v829 = vadd.f32 0.0, %v828
        %830 = vmatmul.f32.gmra.mxu0 %v431
        %v831 = vpop.f32.mrf.mxu0
        %v832 = vadd.f32 0.0, %v831
        %833 = vmatmul.f32.gmra.mxu0 %v434
        %v834 = vpop.f32.mrf.mxu0
        %v835 = vadd.f32 0.0, %v834
        %836 = vmatmul.f32.gmra.mxu0 %v437
        %v837 = vpop.f32.mrf.mxu0
        %v838 = vadd.f32 0.0, %v837
        %839 = vmatmul.f32.gmra.mxu0 %v440
        %v840 = vpop.f32.mrf.mxu0
        %v841 = vadd.f32 0.0, %v840
        %842 = vmatmul.f32.gmra.mxu0 %v443
        %v843 = vpop.f32.mrf.mxu0
        %v844 = vadd.f32 0.0, %v843
        %845 = vmatmul.f32.gmra.mxu0 %v446
        %v846 = vpop.f32.mrf.mxu0
        %v847 = vadd.f32 0.0, %v846
        %848 = vmatmul.f32.gmra.mxu0 %v449
        %v849 = vpop.f32.mrf.mxu0
        %v850 = vadd.f32 0.0, %v849
        %851 = vmatmul.f32.gmra.mxu0 %v452
        %v852 = vpop.f32.mrf.mxu0
        %v853 = vadd.f32 0.0, %v852
        %854 = vmatmul.f32.gmra.mxu0 %v455
        %v855 = vpop.f32.mrf.mxu0
        %v856 = vadd.f32 0.0, %v855
        %857 = vmatmul.f32.gmra.mxu0 %v458
        %v858 = vpop.f32.mrf.mxu0
        %v859 = vadd.f32 0.0, %v858
        %860 = vmatmul.f32.gmra.mxu0 %v461
        %v861 = vpop.f32.mrf.mxu0
        %v862 = vadd.f32 0.0, %v861
        %863 = vmatmul.f32.gmra.mxu0 %v464
        %v864 = vpop.f32.mrf.mxu0
        %v865 = vadd.f32 0.0, %v864
        %866 = vmatmul.f32.gmra.mxu0 %v467
        %v867 = vpop.f32.mrf.mxu0
        %v868 = vadd.f32 0.0, %v867
        %869 = vmatmul.f32.gmra.mxu0 %v470
        %v870 = vpop.f32.mrf.mxu0
        %v871 = vadd.f32 0.0, %v870
        %872 = vmatmul.f32.gmra.mxu0 %v473
        %v873 = vpop.f32.mrf.mxu0
        %v874 = vadd.f32 0.0, %v873
        %875 = vmatmul.f32.gmra.mxu0 %v476
        %v876 = vpop.f32.mrf.mxu0
        %v877 = vadd.f32 0.0, %v876
        %878 = vmatmul.f32.gmra.mxu0 %v479
        %v879 = vpop.f32.mrf.mxu0
        %v880 = vadd.f32 0.0, %v879
        %881 = vmatmul.f32.gmra.mxu0 %v482
        %v882 = vpop.f32.mrf.mxu0
        %v883 = vadd.f32 0.0, %v882
        %884 = vmatmul.f32.gmra.mxu0 %v485
        %v885 = vpop.f32.mrf.mxu0
        %v886 = vadd.f32 0.0, %v885
        %887 = vmatmul.f32.gmra.mxu0 %v488
        %v888 = vpop.f32.mrf.mxu0
        %v889 = vadd.f32 0.0, %v888
        %890 = vmatmul.f32.gmra.mxu0 %v491
        %v891 = vpop.f32.mrf.mxu0
        %v892 = vadd.f32 0.0, %v891
        %893 = vmatmul.f32.gmra.mxu0 %v494
        %v894 = vpop.f32.mrf.mxu0
        %v895 = vadd.f32 0.0, %v894
        %896 = vmatmul.f32.gmra.mxu0 %v497
        %v897 = vpop.f32.mrf.mxu0
        %v898 = vadd.f32 0.0, %v897
        %899 = vmatmul.f32.gmra.mxu0 %v500
        %v900 = vpop.f32.mrf.mxu0
        %v901 = vadd.f32 0.0, %v900
        %902 = vmatmul.f32.gmra.mxu0 %v503
        %v903 = vpop.f32.mrf.mxu0
        %v904 = vadd.f32 0.0, %v903
        %905 = vmatmul.f32.gmra.mxu0 %v506
        %v906 = vpop.f32.mrf.mxu0
        %v907 = vadd.f32 0.0, %v906
        %908 = vmatmul.f32.gmra.mxu0 %v509
        %v909 = vpop.f32.mrf.mxu0
        %v910 = vadd.f32 0.0, %v909
        %911 = vmatmul.f32.gmra.mxu0 %v512
        %v912 = vpop.f32.mrf.mxu0
        %v913 = vadd.f32 0.0, %v912
        %914 = vmatmul.f32.gmra.mxu0 %v515
        %v915 = vpop.f32.mrf.mxu0
        %v916 = vadd.f32 0.0, %v915
        %917 = vmatmul.f32.gmra.mxu0 %v518
        %v918 = vpop.f32.mrf.mxu0
        %v919 = vadd.f32 0.0, %v918
        %920 = vmatmul.f32.gmra.mxu0 %v521
        %v921 = vpop.f32.mrf.mxu0
        %v922 = vadd.f32 0.0, %v921
        %923 = vmatmul.f32.gmra.mxu0 %v524
        %v924 = vpop.f32.mrf.mxu0
        %v925 = vadd.f32 0.0, %v924
        %926 = vmatmul.f32.gmra.mxu0 %v527
        %v927 = vpop.f32.mrf.mxu0
        %v928 = vadd.f32 0.0, %v927
        %929 = vmatmul.f32.gmra.mxu0 %v530
        %v930 = vpop.f32.mrf.mxu0
        %v931 = vadd.f32 0.0, %v930
        %932 = vmatmul.f32.gmra.mxu0 %v533
        %v933 = vpop.f32.mrf.mxu0
        %v934 = vadd.f32 0.0, %v933
        %935 = vmatmul.f32.gmra.mxu0 %v536
        %v936 = vpop.f32.mrf.mxu0
        %v937 = vadd.f32 0.0, %v936
        %938 = vmatmul.f32.gmra.mxu0 %v539
        %v939 = vpop.f32.mrf.mxu0
        %v940 = vadd.f32 0.0, %v939
        %941 = vmatmul.f32.gmra.mxu0 %v542
        %v942 = vpop.f32.mrf.mxu0
        %v943 = vadd.f32 0.0, %v942
        %944 = vmatmul.f32.gmra.mxu0 %v545
        %v945 = vpop.f32.mrf.mxu0
        %v946 = vadd.f32 0.0, %v945
        %947 = vmatmul.f32.gmra.mxu0 %v548
        %v948 = vpop.f32.mrf.mxu0
        %v949 = vadd.f32 0.0, %v948
        %950 = vmatmul.f32.gmra.mxu0 %v551
        %v951 = vpop.f32.mrf.mxu0
        %v952 = vadd.f32 0.0, %v951
        %953 = vmatmul.f32.gmra.mxu0 %v554
        %v954 = vpop.f32.mrf.mxu0
        %v955 = vadd.f32 0.0, %v954
        %956 = vmatmul.f32.gmra.mxu0 %v557
        %v957 = vpop.f32.mrf.mxu0
        %v958 = vadd.f32 0.0, %v957
        %959 = vmatmul.f32.gmra.mxu0 %v560
        %v960 = vpop.f32.mrf.mxu0
        %v961 = vadd.f32 0.0, %v960
        %962 = vmatmul.f32.gmra.mxu0 %v563
        %v963 = vpop.f32.mrf.mxu0
        %v964 = vadd.f32 0.0, %v963
        %965 = vmatmul.f32.gmra.mxu0 %v566
        %v966 = vpop.f32.mrf.mxu0
        %v967 = vadd.f32 0.0, %v966
        %968 = vmatmul.f32.gmra.mxu0 %v569
        %v969 = vpop.f32.mrf.mxu0
        %v970 = vadd.f32 0.0, %v969
        %971 = vmatmul.f32.gmra.mxu0 %v572
        %v972 = vpop.f32.mrf.mxu0
        %v973 = vadd.f32 0.0, %v972
        %974 = vmatmul.f32.gmra.mxu0 %v575
        %v975 = vpop.f32.mrf.mxu0
        %v976 = vadd.f32 0.0, %v975
        %977 = vmatmul.f32.gmra.mxu0 %v578
        %v978 = vpop.f32.mrf.mxu0
        %v979 = vadd.f32 0.0, %v978
        %980 = vmatmul.f32.gmra.mxu0 %v581
        %v981 = vpop.f32.mrf.mxu0
        %v982 = vadd.f32 0.0, %v981
        %983 = vmatmul.f32.gmra.mxu0 %v584
        %v984 = vpop.f32.mrf.mxu0
        %v985 = vadd.f32 0.0, %v984
        %986 = vmatmul.f32.gmra.mxu0 %v587
        %v987 = vpop.f32.mrf.mxu0
        %v988 = vadd.f32 0.0, %v987
        %989 = vmatmul.f32.gmra.mxu0 %v590
        %v990 = vpop.f32.mrf.mxu0
        %v991 = vadd.f32 0.0, %v990
        %992 = vmatmul.f32.gmra.mxu0 %v593
        %v993 = vpop.f32.mrf.mxu0
        %v994 = vadd.f32 0.0, %v993
        %995 = vmatmul.f32.gmra.mxu0 %v596
        %v996 = vpop.f32.mrf.mxu0
        %v997 = vadd.f32 0.0, %v996
        %998 = vmatmul.f32.gmra.mxu0 %v599
        %v999 = vpop.f32.mrf.mxu0
        %v1000 = vadd.f32 0.0, %v999
        %1001 = vmatmul.f32.gmra.mxu0 %v602
        %v1002 = vpop.f32.mrf.mxu0
        %v1003 = vadd.f32 0.0, %v1002
        %1004 = vmatmul.f32.gmra.mxu0 %v605
        %v1005 = vpop.f32.mrf.mxu0
        %v1006 = vadd.f32 0.0, %v1005
        %1007 = vmatmul.f32.gmra.mxu0 %v608
        %v1008 = vpop.f32.mrf.mxu0
        %v1009 = vadd.f32 0.0, %v1008
        %1010 = vmatmul.f32.gmra.mxu0 %v611
        %v1011 = vpop.f32.mrf.mxu0
        %v1012 = vadd.f32 0.0, %v1011
        %1013 = vmatmul.f32.gmra.mxu0 %v614
        %v1014 = vpop.f32.mrf.mxu0
        %v1015 = vadd.f32 0.0, %v1014
        %1016 = vmatmul.f32.gmra.mxu0 %v617
        %v1017 = vpop.f32.mrf.mxu0
        %v1018 = vadd.f32 0.0, %v1017
        %1019 = vmatmul.f32.gmra.mxu0 %v620
        %v1020 = vpop.f32.mrf.mxu0
        %v1021 = vadd.f32 0.0, %v1020
        %1022 = vmatmul.f32.gmra.mxu0 %v623
        %v1023 = vpop.f32.mrf.mxu0
        %v1024 = vadd.f32 0.0, %v1023
        %1025 = vmatmul.f32.gmra.mxu0 %v626
        %v1026 = vpop.f32.mrf.mxu0
        %v1027 = vadd.f32 0.0, %v1026
        %1028 = vmatmul.f32.gmra.mxu0 %v629
        %v1029 = vpop.f32.mrf.mxu0
        %v1030 = vadd.f32 0.0, %v1029
        %1031 = vmatmul.f32.gmra.mxu0 %v632
        %v1032 = vpop.f32.mrf.mxu0
        %v1033 = vadd.f32 0.0, %v1032
        %1034 = vmatmul.f32.gmra.mxu0 %v635
        %v1035 = vpop.f32.mrf.mxu0
        %v1036 = vadd.f32 0.0, %v1035
        %1037 = vmatmul.f32.gmra.mxu0 %v638
        %v1038 = vpop.f32.mrf.mxu0
        %v1039 = vadd.f32 0.0, %v1038
        %1040 = vmatmul.f32.gmra.mxu0 %v641
        %v1041 = vpop.f32.mrf.mxu0
        %v1042 = vadd.f32 0.0, %v1041
        %1043 = vmatmul.f32.gmra.mxu0 %v644
        %v1044 = vpop.f32.mrf.mxu0
        %v1045 = vadd.f32 0.0, %v1044
        %1046 = vmatmul.f32.gmra.mxu0 %v647
        %v1047 = vpop.f32.mrf.mxu0
        %v1048 = vadd.f32 0.0, %v1047
        %1049 = vmatmul.f32.gmra.mxu0 %v650
        %v1050 = vpop.f32.mrf.mxu0
        %v1051 = vadd.f32 0.0, %v1050
        %1052 = vmatmul.f32.gmra.mxu0 %v653
        %v1053 = vpop.f32.mrf.mxu0
        %v1054 = vadd.f32 0.0, %v1053
        %1055 = vmatmul.f32.gmra.mxu0 %v656
        %v1056 = vpop.f32.mrf.mxu0
        %v1057 = vadd.f32 0.0, %v1056
        %1058 = vmatmul.f32.gmra.mxu0 %v659
        %v1059 = vpop.f32.mrf.mxu0
        %v1060 = vadd.f32 0.0, %v1059
        %1061 = vmatmul.f32.gmra.mxu0 %v662
        %v1062 = vpop.f32.mrf.mxu0
        %v1063 = vadd.f32 0.0, %v1062
        %1064 = vmatmul.f32.gmra.mxu0 %v665
        %v1065 = vpop.f32.mrf.mxu0
        %v1066 = vadd.f32 0.0, %v1065
        %1067 = vmatmul.f32.gmra.mxu0 %v668
        %v1068 = vpop.f32.mrf.mxu0
        %v1069 = vadd.f32 0.0, %v1068
        %1070 = vmatmul.f32.gmra.mxu0 %v671
        %v1071 = vpop.f32.mrf.mxu0
        %v1072 = vadd.f32 0.0, %v1071
        %1073 = vmatmul.f32.gmra.mxu0 %v674
        %v1074 = vpop.f32.mrf.mxu0
        %v1075 = vadd.f32 0.0, %v1074
        %1076 = vmatmul.f32.gmra.mxu0 %v677
        %v1077 = vpop.f32.mrf.mxu0
        %v1078 = vadd.f32 0.0, %v1077
        %1079 = vmatmul.f32.gmra.mxu0 %v680
        %v1080 = vpop.f32.mrf.mxu0
        %v1081 = vadd.f32 0.0, %v1080
        %1082 = vmatmul.f32.gmra.mxu0 %v683
        %v1083 = vpop.f32.mrf.mxu0
        %v1084 = vadd.f32 0.0, %v1083
        %1085 = vmatmul.f32.gmra.mxu0 %v686
        %v1086 = vpop.f32.mrf.mxu0
        %v1087 = vadd.f32 0.0, %v1086
        %1088 = vmatmul.f32.gmra.mxu0 %v689
        %v1089 = vpop.f32.mrf.mxu0
        %v1090 = vadd.f32 0.0, %v1089
        %1091 = vmatmul.f32.gmra.mxu0 %v692
        %v1092 = vpop.f32.mrf.mxu0
        %v1093 = vadd.f32 0.0, %v1092
        %1094 = vmatmul.f32.gmra.mxu0 %v695
        %v1095 = vpop.f32.mrf.mxu0
        %v1096 = vadd.f32 0.0, %v1095
        %1097 = vmatmul.f32.gmra.mxu0 %v698
        %v1098 = vpop.f32.mrf.mxu0
        %v1099 = vadd.f32 0.0, %v1098
        %1100 = vmatmul.f32.gmra.mxu0 %v701
        %v1101 = vpop.f32.mrf.mxu0
        %v1102 = vadd.f32 0.0, %v1101
        %1103 = vmatmul.f32.gmra.mxu0 %v704
        %v1104 = vpop.f32.mrf.mxu0
        %v1105 = vadd.f32 0.0, %v1104
        %1106 = vmatmul.f32.gmra.mxu0 %v707
        %v1107 = vpop.f32.mrf.mxu0
        %v1108 = vadd.f32 0.0, %v1107
        %1109 = vmatmul.f32.gmra.mxu0 %v710
        %v1110 = vpop.f32.mrf.mxu0
        %v1111 = vadd.f32 0.0, %v1110
        %1112 = vmatmul.f32.gmra.mxu0 %v713
        %v1113 = vpop.f32.mrf.mxu0
        %v1114 = vadd.f32 0.0, %v1113
        %1115 = vmatmul.f32.gmra.mxu0 %v716
        %v1116 = vpop.f32.mrf.mxu0
        %v1117 = vadd.f32 0.0, %v1116
        %1118 = vmatmul.f32.gmra.mxu0 %v719
        %v1119 = vpop.f32.mrf.mxu0
        %v1120 = vadd.f32 0.0, %v1119
        %1121 = vdwg.mxu0
        %v1122 = vmul.f32 %v739, %v739
        %v1123 = vmul.f32 %v742, %v742
        %v1124 = vmul.f32 %v745, %v745
        %v1125 = vmul.f32 %v748, %v748
        %v1126 = vmul.f32 %v751, %v751
        %v1127 = vmul.f32 %v754, %v754
        %v1128 = vmul.f32 %v757, %v757
        %v1129 = vmul.f32 %v760, %v760
        %v1130 = vmul.f32 %v763, %v763
        %v1131 = vmul.f32 %v766, %v766
        %v1132 = vmul.f32 %v769, %v769
        %v1133 = vmul.f32 %v772, %v772
        %v1134 = vmul.f32 %v775, %v775
        %v1135 = vmul.f32 %v778, %v778
        %v1136 = vmul.f32 %v781, %v781
        %v1137 = vmul.f32 %v784, %v784
        %v1138 = vmul.f32 %v787, %v787
        %v1139 = vmul.f32 %v790, %v790
        %v1140 = vmul.f32 %v793, %v793
        %v1141 = vmul.f32 %v796, %v796
        %v1142 = vmul.f32 %v799, %v799
        %v1143 = vmul.f32 %v802, %v802
        %v1144 = vmul.f32 %v805, %v805
        %v1145 = vmul.f32 %v808, %v808
        %v1146 = vmul.f32 %v811, %v811
        %v1147 = vmul.f32 %v814, %v814
        %v1148 = vmul.f32 %v817, %v817
        %v1149 = vmul.f32 %v820, %v820
        %v1150 = vmul.f32 %v823, %v823
        %v1151 = vmul.f32 %v826, %v826
        %v1152 = vmul.f32 %v829, %v829
        %v1153 = vmul.f32 %v832, %v832
        %v1154 = vmul.f32 %v835, %v835
        %v1155 = vmul.f32 %v838, %v838
        %v1156 = vmul.f32 %v841, %v841
        %v1157 = vmul.f32 %v844, %v844
        %v1158 = vmul.f32 %v847, %v847
        %v1159 = vmul.f32 %v850, %v850
        %v1160 = vmul.f32 %v853, %v853
        %v1161 = vmul.f32 %v856, %v856
        %v1162 = vmul.f32 %v859, %v859
        %v1163 = vmul.f32 %v862, %v862
        %v1164 = vmul.f32 %v865, %v865
        %v1165 = vmul.f32 %v868, %v868
        %v1166 = vmul.f32 %v871, %v871
        %v1167 = vmul.f32 %v874, %v874
        %v1168 = vmul.f32 %v877, %v877
        %v1169 = vmul.f32 %v880, %v880
        %v1170 = vmul.f32 %v883, %v883
        %v1171 = vmul.f32 %v886, %v886
        %v1172 = vmul.f32 %v889, %v889
        %v1173 = vmul.f32 %v892, %v892
        %v1174 = vmul.f32 %v895, %v895
        %v1175 = vmul.f32 %v898, %v898
        %v1176 = vmul.f32 %v901, %v901
        %v1177 = vmul.f32 %v904, %v904
        %v1178 = vmul.f32 %v907, %v907
        %v1179 = vmul.f32 %v910, %v910
        %v1180 = vmul.f32 %v913, %v913
        %v1181 = vmul.f32 %v916, %v916
        %v1182 = vmul.f32 %v919, %v919
        %v1183 = vmul.f32 %v922, %v922
        %v1184 = vmul.f32 %v925, %v925
        %v1185 = vmul.f32 %v928, %v928
        %v1186 = vmul.f32 %v931, %v931
        %v1187 = vmul.f32 %v934, %v934
        %v1188 = vmul.f32 %v937, %v937
        %v1189 = vmul.f32 %v940, %v940
        %v1190 = vmul.f32 %v943, %v943
        %v1191 = vmul.f32 %v946, %v946
        %v1192 = vmul.f32 %v949, %v949
        %v1193 = vmul.f32 %v952, %v952
        %v1194 = vmul.f32 %v955, %v955
        %v1195 = vmul.f32 %v958, %v958
        %v1196 = vmul.f32 %v961, %v961
        %v1197 = vmul.f32 %v964, %v964
        %v1198 = vmul.f32 %v967, %v967
        %v1199 = vmul.f32 %v970, %v970
        %v1200 = vmul.f32 %v973, %v973
        %v1201 = vmul.f32 %v976, %v976
        %v1202 = vmul.f32 %v979, %v979
        %v1203 = vmul.f32 %v982, %v982
        %v1204 = vmul.f32 %v985, %v985
        %v1205 = vmul.f32 %v988, %v988
        %v1206 = vmul.f32 %v991, %v991
        %v1207 = vmul.f32 %v994, %v994
        %v1208 = vmul.f32 %v997, %v997
        %v1209 = vmul.f32 %v1000, %v1000
        %v1210 = vmul.f32 %v1003, %v1003
        %v1211 = vmul.f32 %v1006, %v1006
        %v1212 = vmul.f32 %v1009, %v1009
        %v1213 = vmul.f32 %v1012, %v1012
        %v1214 = vmul.f32 %v1015, %v1015
        %v1215 = vmul.f32 %v1018, %v1018
        %v1216 = vmul.f32 %v1021, %v1021
        %v1217 = vmul.f32 %v1024, %v1024
        %v1218 = vmul.f32 %v1027, %v1027
        %v1219 = vmul.f32 %v1030, %v1030
        %v1220 = vmul.f32 %v1033, %v1033
        %v1221 = vmul.f32 %v1036, %v1036
        %v1222 = vmul.f32 %v1039, %v1039
        %v1223 = vmul.f32 %v1042, %v1042
        %v1224 = vmul.f32 %v1045, %v1045
        %v1225 = vmul.f32 %v1048, %v1048
        %v1226 = vmul.f32 %v1051, %v1051
        %v1227 = vmul.f32 %v1054, %v1054
        %v1228 = vmul.f32 %v1057, %v1057
        %v1229 = vmul.f32 %v1060, %v1060
        %v1230 = vmul.f32 %v1063, %v1063
        %v1231 = vmul.f32 %v1066, %v1066
        %v1232 = vmul.f32 %v1069, %v1069
        %v1233 = vmul.f32 %v1072, %v1072
        %v1234 = vmul.f32 %v1075, %v1075
        %v1235 = vmul.f32 %v1078, %v1078
        %v1236 = vmul.f32 %v1081, %v1081
        %v1237 = vmul.f32 %v1084, %v1084
        %v1238 = vmul.f32 %v1087, %v1087
        %v1239 = vmul.f32 %v1090, %v1090
        %v1240 = vmul.f32 %v1093, %v1093
        %v1241 = vmul.f32 %v1096, %v1096
        %v1242 = vmul.f32 %v1099, %v1099
        %v1243 = vmul.f32 %v1102, %v1102
        %v1244 = vmul.f32 %v1105, %v1105
        %v1245 = vmul.f32 %v1108, %v1108
        %v1246 = vmul.f32 %v1111, %v1111
        %v1247 = vmul.f32 %v1114, %v1114
        %v1248 = vmul.f32 %v1117, %v1117
        %v1249 = vmul.f32 %v1120, %v1120
        %1250 = vrot.lane.b32.xlu0 %v1122, 64
        %v1251 = vpop.permute.xlu0 %1250
        %1252 = vrot.lane.b32.xlu0 %v1123, 64
        %v1253 = vpop.permute.xlu0 %1252
        %1254 = vrot.lane.b32.xlu0 %v1124, 64
        %v1255 = vpop.permute.xlu0 %1254
        %1256 = vrot.lane.b32.xlu0 %v1125, 64
        %v1257 = vpop.permute.xlu0 %1256
        %1258 = vrot.lane.b32.xlu0 %v1126, 64
        %v1259 = vpop.permute.xlu0 %1258
        %1260 = vrot.lane.b32.xlu0 %v1127, 64
        %v1261 = vpop.permute.xlu0 %1260
        %1262 = vrot.lane.b32.xlu0 %v1128, 64
        %v1263 = vpop.permute.xlu0 %1262
        %1264 = vrot.lane.b32.xlu0 %v1129, 64
        %v1265 = vpop.permute.xlu0 %1264
        %1266 = vrot.lane.b32.xlu0 %v1130, 64
        %v1267 = vpop.permute.xlu0 %1266
        %1268 = vrot.lane.b32.xlu0 %v1131, 64
        %v1269 = vpop.permute.xlu0 %1268
        %1270 = vrot.lane.b32.xlu0 %v1132, 64
        %v1271 = vpop.permute.xlu0 %1270
        %1272 = vrot.lane.b32.xlu0 %v1133, 64
        %v1273 = vpop.permute.xlu0 %1272
        %1274 = vrot.lane.b32.xlu0 %v1134, 64
        %v1275 = vpop.permute.xlu0 %1274
        %1276 = vrot.lane.b32.xlu0 %v1135, 64
        %v1277 = vpop.permute.xlu0 %1276
        %1278 = vrot.lane.b32.xlu0 %v1136, 64
        %v1279 = vpop.permute.xlu0 %1278
        %1280 = vrot.lane.b32.xlu0 %v1137, 64
        %v1281 = vpop.permute.xlu0 %1280
        %1282 = vrot.lane.b32.xlu0 %v1138, 64
        %v1283 = vpop.permute.xlu0 %1282
        %1284 = vrot.lane.b32.xlu0 %v1139, 64
        %v1285 = vpop.permute.xlu0 %1284
        %1286 = vrot.lane.b32.xlu0 %v1140, 64
        %v1287 = vpop.permute.xlu0 %1286
        %1288 = vrot.lane.b32.xlu0 %v1141, 64
        %v1289 = vpop.permute.xlu0 %1288
        %1290 = vrot.lane.b32.xlu0 %v1142, 64
        %v1291 = vpop.permute.xlu0 %1290
        %1292 = vrot.lane.b32.xlu0 %v1143, 64
        %v1293 = vpop.permute.xlu0 %1292
        %1294 = vrot.lane.b32.xlu0 %v1144, 64
        %v1295 = vpop.permute.xlu0 %1294
        %1296 = vrot.lane.b32.xlu0 %v1145, 64
        %v1297 = vpop.permute.xlu0 %1296
        %1298 = vrot.lane.b32.xlu0 %v1146, 64
        %v1299 = vpop.permute.xlu0 %1298
        %1300 = vrot.lane.b32.xlu0 %v1147, 64
        %v1301 = vpop.permute.xlu0 %1300
        %1302 = vrot.lane.b32.xlu0 %v1148, 64
        %v1303 = vpop.permute.xlu0 %1302
        %1304 = vrot.lane.b32.xlu0 %v1149, 64
        %v1305 = vpop.permute.xlu0 %1304
        %1306 = vrot.lane.b32.xlu0 %v1150, 64
        %v1307 = vpop.permute.xlu0 %1306
        %1308 = vrot.lane.b32.xlu0 %v1151, 64
        %v1309 = vpop.permute.xlu0 %1308
        %1310 = vrot.lane.b32.xlu0 %v1152, 64
        %v1311 = vpop.permute.xlu0 %1310
        %1312 = vrot.lane.b32.xlu0 %v1153, 64
        %v1313 = vpop.permute.xlu0 %1312
        %1314 = vrot.lane.b32.xlu0 %v1154, 64
        %v1315 = vpop.permute.xlu0 %1314
        %1316 = vrot.lane.b32.xlu0 %v1155, 64
        %v1317 = vpop.permute.xlu0 %1316
        %1318 = vrot.lane.b32.xlu0 %v1156, 64
        %v1319 = vpop.permute.xlu0 %1318
        %1320 = vrot.lane.b32.xlu0 %v1157, 64
        %v1321 = vpop.permute.xlu0 %1320
        %1322 = vrot.lane.b32.xlu0 %v1158, 64
        %v1323 = vpop.permute.xlu0 %1322
        %1324 = vrot.lane.b32.xlu0 %v1159, 64
        %v1325 = vpop.permute.xlu0 %1324
        %1326 = vrot.lane.b32.xlu0 %v1160, 64
        %v1327 = vpop.permute.xlu0 %1326
        %1328 = vrot.lane.b32.xlu0 %v1161, 64
        %v1329 = vpop.permute.xlu0 %1328
        %1330 = vrot.lane.b32.xlu0 %v1162, 64
        %v1331 = vpop.permute.xlu0 %1330
        %1332 = vrot.lane.b32.xlu0 %v1163, 64
        %v1333 = vpop.permute.xlu0 %1332
        %1334 = vrot.lane.b32.xlu0 %v1164, 64
        %v1335 = vpop.permute.xlu0 %1334
        %1336 = vrot.lane.b32.xlu0 %v1165, 64
        %v1337 = vpop.permute.xlu0 %1336
        %1338 = vrot.lane.b32.xlu0 %v1166, 64
        %v1339 = vpop.permute.xlu0 %1338
        %1340 = vrot.lane.b32.xlu0 %v1167, 64
        %v1341 = vpop.permute.xlu0 %1340
        %1342 = vrot.lane.b32.xlu0 %v1168, 64
        %v1343 = vpop.permute.xlu0 %1342
        %1344 = vrot.lane.b32.xlu0 %v1169, 64
        %v1345 = vpop.permute.xlu0 %1344
        %1346 = vrot.lane.b32.xlu0 %v1170, 64
        %v1347 = vpop.permute.xlu0 %1346
        %1348 = vrot.lane.b32.xlu0 %v1171, 64
        %v1349 = vpop.permute.xlu0 %1348
        %1350 = vrot.lane.b32.xlu0 %v1172, 64
        %v1351 = vpop.permute.xlu0 %1350
        %1352 = vrot.lane.b32.xlu0 %v1173, 64
        %v1353 = vpop.permute.xlu0 %1352
        %1354 = vrot.lane.b32.xlu0 %v1174, 64
        %v1355 = vpop.permute.xlu0 %1354
        %1356 = vrot.lane.b32.xlu0 %v1175, 64
        %v1357 = vpop.permute.xlu0 %1356
        %1358 = vrot.lane.b32.xlu0 %v1176, 64
        %v1359 = vpop.permute.xlu0 %1358
        %1360 = vrot.lane.b32.xlu0 %v1177, 64
        %v1361 = vpop.permute.xlu0 %1360
        %1362 = vrot.lane.b32.xlu0 %v1178, 64
        %v1363 = vpop.permute.xlu0 %1362
        %1364 = vrot.lane.b32.xlu0 %v1179, 64
        %v1365 = vpop.permute.xlu0 %1364
        %1366 = vrot.lane.b32.xlu0 %v1180, 64
        %v1367 = vpop.permute.xlu0 %1366
        %1368 = vrot.lane.b32.xlu0 %v1181, 64
        %v1369 = vpop.permute.xlu0 %1368
        %1370 = vrot.lane.b32.xlu0 %v1182, 64
        %v1371 = vpop.permute.xlu0 %1370
        %1372 = vrot.lane.b32.xlu0 %v1183, 64
        %v1373 = vpop.permute.xlu0 %1372
        %1374 = vrot.lane.b32.xlu0 %v1184, 64
        %v1375 = vpop.permute.xlu0 %1374
        %1376 = vrot.lane.b32.xlu0 %v1185, 64
        %v1377 = vpop.permute.xlu0 %1376
        %1378 = vrot.lane.b32.xlu0 %v1186, 64
        %v1379 = vpop.permute.xlu0 %1378
        %1380 = vrot.lane.b32.xlu0 %v1187, 64
        %v1381 = vpop.permute.xlu0 %1380
        %1382 = vrot.lane.b32.xlu0 %v1188, 64
        %v1383 = vpop.permute.xlu0 %1382
        %1384 = vrot.lane.b32.xlu0 %v1189, 64
        %v1385 = vpop.permute.xlu0 %1384
        %1386 = vrot.lane.b32.xlu0 %v1190, 64
        %v1387 = vpop.permute.xlu0 %1386
        %1388 = vrot.lane.b32.xlu0 %v1191, 64
        %v1389 = vpop.permute.xlu0 %1388
        %1390 = vrot.lane.b32.xlu0 %v1192, 64
        %v1391 = vpop.permute.xlu0 %1390
        %1392 = vrot.lane.b32.xlu0 %v1193, 64
        %v1393 = vpop.permute.xlu0 %1392
        %1394 = vrot.lane.b32.xlu0 %v1194, 64
        %v1395 = vpop.permute.xlu0 %1394
        %1396 = vrot.lane.b32.xlu0 %v1195, 64
        %v1397 = vpop.permute.xlu0 %1396
        %1398 = vrot.lane.b32.xlu0 %v1196, 64
        %v1399 = vpop.permute.xlu0 %1398
        %1400 = vrot.lane.b32.xlu0 %v1197, 64
        %v1401 = vpop.permute.xlu0 %1400
        %1402 = vrot.lane.b32.xlu0 %v1198, 64
        %v1403 = vpop.permute.xlu0 %1402
        %1404 = vrot.lane.b32.xlu0 %v1199, 64
        %v1405 = vpop.permute.xlu0 %1404
        %1406 = vrot.lane.b32.xlu0 %v1200, 64
        %v1407 = vpop.permute.xlu0 %1406
        %1408 = vrot.lane.b32.xlu0 %v1201, 64
        %v1409 = vpop.permute.xlu0 %1408
        %1410 = vrot.lane.b32.xlu0 %v1202, 64
        %v1411 = vpop.permute.xlu0 %1410
        %1412 = vrot.lane.b32.xlu0 %v1203, 64
        %v1413 = vpop.permute.xlu0 %1412
        %1414 = vrot.lane.b32.xlu0 %v1204, 64
        %v1415 = vpop.permute.xlu0 %1414
        %1416 = vrot.lane.b32.xlu0 %v1205, 64
        %v1417 = vpop.permute.xlu0 %1416
        %1418 = vrot.lane.b32.xlu0 %v1206, 64
        %v1419 = vpop.permute.xlu0 %1418
        %1420 = vrot.lane.b32.xlu0 %v1207, 64
        %v1421 = vpop.permute.xlu0 %1420
        %1422 = vrot.lane.b32.xlu0 %v1208, 64
        %v1423 = vpop.permute.xlu0 %1422
        %1424 = vrot.lane.b32.xlu0 %v1209, 64
        %v1425 = vpop.permute.xlu0 %1424
        %1426 = vrot.lane.b32.xlu0 %v1210, 64
        %v1427 = vpop.permute.xlu0 %1426
        %1428 = vrot.lane.b32.xlu0 %v1211, 64
        %v1429 = vpop.permute.xlu0 %1428
        %1430 = vrot.lane.b32.xlu0 %v1212, 64
        %v1431 = vpop.permute.xlu0 %1430
        %1432 = vrot.lane.b32.xlu0 %v1213, 64
        %v1433 = vpop.permute.xlu0 %1432
        %1434 = vrot.lane.b32.xlu0 %v1214, 64
        %v1435 = vpop.permute.xlu0 %1434
        %1436 = vrot.lane.b32.xlu0 %v1215, 64
        %v1437 = vpop.permute.xlu0 %1436
        %1438 = vrot.lane.b32.xlu0 %v1216, 64
        %v1439 = vpop.permute.xlu0 %1438
        %1440 = vrot.lane.b32.xlu0 %v1217, 64
        %v1441 = vpop.permute.xlu0 %1440
        %1442 = vrot.lane.b32.xlu0 %v1218, 64
        %v1443 = vpop.permute.xlu0 %1442
        %1444 = vrot.lane.b32.xlu0 %v1219, 64
        %v1445 = vpop.permute.xlu0 %1444
        %1446 = vrot.lane.b32.xlu0 %v1220, 64
        %v1447 = vpop.permute.xlu0 %1446
        %1448 = vrot.lane.b32.xlu0 %v1221, 64
        %v1449 = vpop.permute.xlu0 %1448
        %1450 = vrot.lane.b32.xlu0 %v1222, 64
        %v1451 = vpop.permute.xlu0 %1450
        %1452 = vrot.lane.b32.xlu0 %v1223, 64
        %v1453 = vpop.permute.xlu0 %1452
        %1454 = vrot.lane.b32.xlu0 %v1224, 64
        %v1455 = vpop.permute.xlu0 %1454
        %1456 = vrot.lane.b32.xlu0 %v1225, 64
        %v1457 = vpop.permute.xlu0 %1456
        %1458 = vrot.lane.b32.xlu0 %v1226, 64
        %v1459 = vpop.permute.xlu0 %1458
        %1460 = vrot.lane.b32.xlu0 %v1227, 64
        %v1461 = vpop.permute.xlu0 %1460
        %1462 = vrot.lane.b32.xlu0 %v1228, 64
        %v1463 = vpop.permute.xlu0 %1462
        %1464 = vrot.lane.b32.xlu0 %v1229, 64
        %v1465 = vpop.permute.xlu0 %1464
        %1466 = vrot.lane.b32.xlu0 %v1230, 64
        %v1467 = vpop.permute.xlu0 %1466
        %1468 = vrot.lane.b32.xlu0 %v1231, 64
        %v1469 = vpop.permute.xlu0 %1468
        %1470 = vrot.lane.b32.xlu0 %v1232, 64
        %v1471 = vpop.permute.xlu0 %1470
        %1472 = vrot.lane.b32.xlu0 %v1233, 64
        %v1473 = vpop.permute.xlu0 %1472
        %1474 = vrot.lane.b32.xlu0 %v1234, 64
        %v1475 = vpop.permute.xlu0 %1474
        %1476 = vrot.lane.b32.xlu0 %v1235, 64
        %v1477 = vpop.permute.xlu0 %1476
        %1478 = vrot.lane.b32.xlu0 %v1236, 64
        %v1479 = vpop.permute.xlu0 %1478
        %1480 = vrot.lane.b32.xlu0 %v1237, 64
        %v1481 = vpop.permute.xlu0 %1480
        %1482 = vrot.lane.b32.xlu0 %v1238, 64
        %v1483 = vpop.permute.xlu0 %1482
        %1484 = vrot.lane.b32.xlu0 %v1239, 64
        %v1485 = vpop.permute.xlu0 %1484
        %1486 = vrot.lane.b32.xlu0 %v1240, 64
        %v1487 = vpop.permute.xlu0 %1486
        %1488 = vrot.lane.b32.xlu0 %v1241, 64
        %v1489 = vpop.permute.xlu0 %1488
        %1490 = vrot.lane.b32.xlu0 %v1242, 64
        %v1491 = vpop.permute.xlu0 %1490
        %1492 = vrot.lane.b32.xlu0 %v1243, 64
        %v1493 = vpop.permute.xlu0 %1492
        %1494 = vrot.lane.b32.xlu0 %v1244, 64
        %v1495 = vpop.permute.xlu0 %1494
        %1496 = vrot.lane.b32.xlu0 %v1245, 64
        %v1497 = vpop.permute.xlu0 %1496
        %1498 = vrot.lane.b32.xlu0 %v1246, 64
        %v1499 = vpop.permute.xlu0 %1498
        %1500 = vrot.lane.b32.xlu0 %v1247, 64
        %v1501 = vpop.permute.xlu0 %1500
        %1502 = vrot.lane.b32.xlu0 %v1248, 64
        %v1503 = vpop.permute.xlu0 %1502
        %1504 = vrot.lane.b32.xlu0 %v1249, 64
        %v1505 = vpop.permute.xlu0 %1504
        %v1506 = vadd.f32 %v1122, %v1251
        %v1507 = vadd.f32 %v1123, %v1253
        %v1508 = vadd.f32 %v1124, %v1255
        %v1509 = vadd.f32 %v1125, %v1257
        %v1510 = vadd.f32 %v1126, %v1259
        %v1511 = vadd.f32 %v1127, %v1261
        %v1512 = vadd.f32 %v1128, %v1263
        %v1513 = vadd.f32 %v1129, %v1265
        %v1514 = vadd.f32 %v1130, %v1267
        %v1515 = vadd.f32 %v1131, %v1269
        %v1516 = vadd.f32 %v1132, %v1271
        %v1517 = vadd.f32 %v1133, %v1273
        %v1518 = vadd.f32 %v1134, %v1275
        %v1519 = vadd.f32 %v1135, %v1277
        %v1520 = vadd.f32 %v1136, %v1279
        %v1521 = vadd.f32 %v1137, %v1281
        %v1522 = vadd.f32 %v1138, %v1283
        %v1523 = vadd.f32 %v1139, %v1285
        %v1524 = vadd.f32 %v1140, %v1287
        %v1525 = vadd.f32 %v1141, %v1289
        %v1526 = vadd.f32 %v1142, %v1291
        %v1527 = vadd.f32 %v1143, %v1293
        %v1528 = vadd.f32 %v1144, %v1295
        %v1529 = vadd.f32 %v1145, %v1297
        %v1530 = vadd.f32 %v1146, %v1299
        %v1531 = vadd.f32 %v1147, %v1301
        %v1532 = vadd.f32 %v1148, %v1303
        %v1533 = vadd.f32 %v1149, %v1305
        %v1534 = vadd.f32 %v1150, %v1307
        %v1535 = vadd.f32 %v1151, %v1309
        %v1536 = vadd.f32 %v1152, %v1311
        %v1537 = vadd.f32 %v1153, %v1313
        %v1538 = vadd.f32 %v1154, %v1315
        %v1539 = vadd.f32 %v1155, %v1317
        %v1540 = vadd.f32 %v1156, %v1319
        %v1541 = vadd.f32 %v1157, %v1321
        %v1542 = vadd.f32 %v1158, %v1323
        %v1543 = vadd.f32 %v1159, %v1325
        %v1544 = vadd.f32 %v1160, %v1327
        %v1545 = vadd.f32 %v1161, %v1329
        %v1546 = vadd.f32 %v1162, %v1331
        %v1547 = vadd.f32 %v1163, %v1333
        %v1548 = vadd.f32 %v1164, %v1335
        %v1549 = vadd.f32 %v1165, %v1337
        %v1550 = vadd.f32 %v1166, %v1339
        %v1551 = vadd.f32 %v1167, %v1341
        %v1552 = vadd.f32 %v1168, %v1343
        %v1553 = vadd.f32 %v1169, %v1345
        %v1554 = vadd.f32 %v1170, %v1347
        %v1555 = vadd.f32 %v1171, %v1349
        %v1556 = vadd.f32 %v1172, %v1351
        %v1557 = vadd.f32 %v1173, %v1353
        %v1558 = vadd.f32 %v1174, %v1355
        %v1559 = vadd.f32 %v1175, %v1357
        %v1560 = vadd.f32 %v1176, %v1359
        %v1561 = vadd.f32 %v1177, %v1361
        %v1562 = vadd.f32 %v1178, %v1363
        %v1563 = vadd.f32 %v1179, %v1365
        %v1564 = vadd.f32 %v1180, %v1367
        %v1565 = vadd.f32 %v1181, %v1369
        %v1566 = vadd.f32 %v1182, %v1371
        %v1567 = vadd.f32 %v1183, %v1373
        %v1568 = vadd.f32 %v1184, %v1375
        %v1569 = vadd.f32 %v1185, %v1377
        %v1570 = vadd.f32 %v1186, %v1379
        %v1571 = vadd.f32 %v1187, %v1381
        %v1572 = vadd.f32 %v1188, %v1383
        %v1573 = vadd.f32 %v1189, %v1385
        %v1574 = vadd.f32 %v1190, %v1387
        %v1575 = vadd.f32 %v1191, %v1389
        %v1576 = vadd.f32 %v1192, %v1391
        %v1577 = vadd.f32 %v1193, %v1393
        %v1578 = vadd.f32 %v1194, %v1395
        %v1579 = vadd.f32 %v1195, %v1397
        %v1580 = vadd.f32 %v1196, %v1399
        %v1581 = vadd.f32 %v1197, %v1401
        %v1582 = vadd.f32 %v1198, %v1403
        %v1583 = vadd.f32 %v1199, %v1405
        %v1584 = vadd.f32 %v1200, %v1407
        %v1585 = vadd.f32 %v1201, %v1409
        %v1586 = vadd.f32 %v1202, %v1411
        %v1587 = vadd.f32 %v1203, %v1413
        %v1588 = vadd.f32 %v1204, %v1415
        %v1589 = vadd.f32 %v1205, %v1417
        %v1590 = vadd.f32 %v1206, %v1419
        %v1591 = vadd.f32 %v1207, %v1421
        %v1592 = vadd.f32 %v1208, %v1423
        %v1593 = vadd.f32 %v1209, %v1425
        %v1594 = vadd.f32 %v1210, %v1427
        %v1595 = vadd.f32 %v1211, %v1429
        %v1596 = vadd.f32 %v1212, %v1431
        %v1597 = vadd.f32 %v1213, %v1433
        %v1598 = vadd.f32 %v1214, %v1435
        %v1599 = vadd.f32 %v1215, %v1437
        %v1600 = vadd.f32 %v1216, %v1439
        %v1601 = vadd.f32 %v1217, %v1441
        %v1602 = vadd.f32 %v1218, %v1443
        %v1603 = vadd.f32 %v1219, %v1445
        %v1604 = vadd.f32 %v1220, %v1447
        %v1605 = vadd.f32 %v1221, %v1449
        %v1606 = vadd.f32 %v1222, %v1451
        %v1607 = vadd.f32 %v1223, %v1453
        %v1608 = vadd.f32 %v1224, %v1455
        %v1609 = vadd.f32 %v1225, %v1457
        %v1610 = vadd.f32 %v1226, %v1459
        %v1611 = vadd.f32 %v1227, %v1461
        %v1612 = vadd.f32 %v1228, %v1463
        %v1613 = vadd.f32 %v1229, %v1465
        %v1614 = vadd.f32 %v1230, %v1467
        %v1615 = vadd.f32 %v1231, %v1469
        %v1616 = vadd.f32 %v1232, %v1471
        %v1617 = vadd.f32 %v1233, %v1473
        %v1618 = vadd.f32 %v1234, %v1475
        %v1619 = vadd.f32 %v1235, %v1477
        %v1620 = vadd.f32 %v1236, %v1479
        %v1621 = vadd.f32 %v1237, %v1481
        %v1622 = vadd.f32 %v1238, %v1483
        %v1623 = vadd.f32 %v1239, %v1485
        %v1624 = vadd.f32 %v1240, %v1487
        %v1625 = vadd.f32 %v1241, %v1489
        %v1626 = vadd.f32 %v1242, %v1491
        %v1627 = vadd.f32 %v1243, %v1493
        %v1628 = vadd.f32 %v1244, %v1495
        %v1629 = vadd.f32 %v1245, %v1497
        %v1630 = vadd.f32 %v1246, %v1499
        %v1631 = vadd.f32 %v1247, %v1501
        %v1632 = vadd.f32 %v1248, %v1503
        %v1633 = vadd.f32 %v1249, %v1505
        %v1634 = vrsqrt.pop %v1506
        %v1635 = vmul.f32 %v1634, %v1506
        %v1636 = vmul.f32 %v1635, %v1634
        %v1637 = vmul.f32 0.5, %v1636
        %v1638 = vsub.f32 1.5, %v1637
        %v1639 = vmul.f32 %v1634, %v1638
        %v1640 = vmul.f32 %v1506, %v1639
        %vm1641 = vcmp.eq.f32.partialorder %v1506, inf
        %v1642 = vsel %vm1641, %v1506, %v1640
        %vm1643 = vcmp.eq.f32.partialorder %v1506, 0.0
        %v1644 = vand.u32 %v1506, 2147483648
        %v1645 = vsel %vm1643, %v1644, %v1642
        %v1646 = vrsqrt.pop %v1507
        %v1647 = vmul.f32 %v1646, %v1507
        %v1648 = vmul.f32 %v1647, %v1646
        %v1649 = vmul.f32 0.5, %v1648
        %v1650 = vsub.f32 1.5, %v1649
        %v1651 = vmul.f32 %v1646, %v1650
        %v1652 = vmul.f32 %v1507, %v1651
        %vm1653 = vcmp.eq.f32.partialorder %v1507, inf
        %v1654 = vsel %vm1653, %v1507, %v1652
        %vm1655 = vcmp.eq.f32.partialorder %v1507, 0.0
        %v1656 = vand.u32 %v1507, 2147483648
        %v1657 = vsel %vm1655, %v1656, %v1654
        %v1658 = vrsqrt.pop %v1508
        %v1659 = vmul.f32 %v1658, %v1508
        %v1660 = vmul.f32 %v1659, %v1658
        %v1661 = vmul.f32 0.5, %v1660
        %v1662 = vsub.f32 1.5, %v1661
        %v1663 = vmul.f32 %v1658, %v1662
        %v1664 = vmul.f32 %v1508, %v1663
        %vm1665 = vcmp.eq.f32.partialorder %v1508, inf
        %v1666 = vsel %vm1665, %v1508, %v1664
        %vm1667 = vcmp.eq.f32.partialorder %v1508, 0.0
        %v1668 = vand.u32 %v1508, 2147483648
        %v1669 = vsel %vm1667, %v1668, %v1666
        %v1670 = vrsqrt.pop %v1509
        %v1671 = vmul.f32 %v1670, %v1509
        %v1672 = vmul.f32 %v1671, %v1670
        %v1673 = vmul.f32 0.5, %v1672
        %v1674 = vsub.f32 1.5, %v1673
        %v1675 = vmul.f32 %v1670, %v1674
        %v1676 = vmul.f32 %v1509, %v1675
        %vm1677 = vcmp.eq.f32.partialorder %v1509, inf
        %v1678 = vsel %vm1677, %v1509, %v1676
        %vm1679 = vcmp.eq.f32.partialorder %v1509, 0.0
        %v1680 = vand.u32 %v1509, 2147483648
        %v1681 = vsel %vm1679, %v1680, %v1678
        %v1682 = vrsqrt.pop %v1510
        %v1683 = vmul.f32 %v1682, %v1510
        %v1684 = vmul.f32 %v1683, %v1682
        %v1685 = vmul.f32 0.5, %v1684
        %v1686 = vsub.f32 1.5, %v1685
        %v1687 = vmul.f32 %v1682, %v1686
        %v1688 = vmul.f32 %v1510, %v1687
        %vm1689 = vcmp.eq.f32.partialorder %v1510, inf
        %v1690 = vsel %vm1689, %v1510, %v1688
        %vm1691 = vcmp.eq.f32.partialorder %v1510, 0.0
        %v1692 = vand.u32 %v1510, 2147483648
        %v1693 = vsel %vm1691, %v1692, %v1690
        %v1694 = vrsqrt.pop %v1511
        %v1695 = vmul.f32 %v1694, %v1511
        %v1696 = vmul.f32 %v1695, %v1694
        %v1697 = vmul.f32 0.5, %v1696
        %v1698 = vsub.f32 1.5, %v1697
        %v1699 = vmul.f32 %v1694, %v1698
        %v1700 = vmul.f32 %v1511, %v1699
        %vm1701 = vcmp.eq.f32.partialorder %v1511, inf
        %v1702 = vsel %vm1701, %v1511, %v1700
        %vm1703 = vcmp.eq.f32.partialorder %v1511, 0.0
        %v1704 = vand.u32 %v1511, 2147483648
        %v1705 = vsel %vm1703, %v1704, %v1702
        %v1706 = vrsqrt.pop %v1512
        %v1707 = vmul.f32 %v1706, %v1512
        %v1708 = vmul.f32 %v1707, %v1706
        %v1709 = vmul.f32 0.5, %v1708
        %v1710 = vsub.f32 1.5, %v1709
        %v1711 = vmul.f32 %v1706, %v1710
        %v1712 = vmul.f32 %v1512, %v1711
        %vm1713 = vcmp.eq.f32.partialorder %v1512, inf
        %v1714 = vsel %vm1713, %v1512, %v1712
        %vm1715 = vcmp.eq.f32.partialorder %v1512, 0.0
        %v1716 = vand.u32 %v1512, 2147483648
        %v1717 = vsel %vm1715, %v1716, %v1714
        %v1718 = vrsqrt.pop %v1513
        %v1719 = vmul.f32 %v1718, %v1513
        %v1720 = vmul.f32 %v1719, %v1718
        %v1721 = vmul.f32 0.5, %v1720
        %v1722 = vsub.f32 1.5, %v1721
        %v1723 = vmul.f32 %v1718, %v1722
        %v1724 = vmul.f32 %v1513, %v1723
        %vm1725 = vcmp.eq.f32.partialorder %v1513, inf
        %v1726 = vsel %vm1725, %v1513, %v1724
        %vm1727 = vcmp.eq.f32.partialorder %v1513, 0.0
        %v1728 = vand.u32 %v1513, 2147483648
        %v1729 = vsel %vm1727, %v1728, %v1726
        %v1730 = vrsqrt.pop %v1514
        %v1731 = vmul.f32 %v1730, %v1514
        %v1732 = vmul.f32 %v1731, %v1730
        %v1733 = vmul.f32 0.5, %v1732
        %v1734 = vsub.f32 1.5, %v1733
        %v1735 = vmul.f32 %v1730, %v1734
        %v1736 = vmul.f32 %v1514, %v1735
        %vm1737 = vcmp.eq.f32.partialorder %v1514, inf
        %v1738 = vsel %vm1737, %v1514, %v1736
        %vm1739 = vcmp.eq.f32.partialorder %v1514, 0.0
        %v1740 = vand.u32 %v1514, 2147483648
        %v1741 = vsel %vm1739, %v1740, %v1738
        %v1742 = vrsqrt.pop %v1515
        %v1743 = vmul.f32 %v1742, %v1515
        %v1744 = vmul.f32 %v1743, %v1742
        %v1745 = vmul.f32 0.5, %v1744
        %v1746 = vsub.f32 1.5, %v1745
        %v1747 = vmul.f32 %v1742, %v1746
        %v1748 = vmul.f32 %v1515, %v1747
        %vm1749 = vcmp.eq.f32.partialorder %v1515, inf
        %v1750 = vsel %vm1749, %v1515, %v1748
        %vm1751 = vcmp.eq.f32.partialorder %v1515, 0.0
        %v1752 = vand.u32 %v1515, 2147483648
        %v1753 = vsel %vm1751, %v1752, %v1750
        %v1754 = vrsqrt.pop %v1516
        %v1755 = vmul.f32 %v1754, %v1516
        %v1756 = vmul.f32 %v1755, %v1754
        %v1757 = vmul.f32 0.5, %v1756
        %v1758 = vsub.f32 1.5, %v1757
        %v1759 = vmul.f32 %v1754, %v1758
        %v1760 = vmul.f32 %v1516, %v1759
        %vm1761 = vcmp.eq.f32.partialorder %v1516, inf
        %v1762 = vsel %vm1761, %v1516, %v1760
        %vm1763 = vcmp.eq.f32.partialorder %v1516, 0.0
        %v1764 = vand.u32 %v1516, 2147483648
        %v1765 = vsel %vm1763, %v1764, %v1762
        %v1766 = vrsqrt.pop %v1517
        %v1767 = vmul.f32 %v1766, %v1517
        %v1768 = vmul.f32 %v1767, %v1766
        %v1769 = vmul.f32 0.5, %v1768
        %v1770 = vsub.f32 1.5, %v1769
        %v1771 = vmul.f32 %v1766, %v1770
        %v1772 = vmul.f32 %v1517, %v1771
        %vm1773 = vcmp.eq.f32.partialorder %v1517, inf
        %v1774 = vsel %vm1773, %v1517, %v1772
        %vm1775 = vcmp.eq.f32.partialorder %v1517, 0.0
        %v1776 = vand.u32 %v1517, 2147483648
        %v1777 = vsel %vm1775, %v1776, %v1774
        %v1778 = vrsqrt.pop %v1518
        %v1779 = vmul.f32 %v1778, %v1518
        %v1780 = vmul.f32 %v1779, %v1778
        %v1781 = vmul.f32 0.5, %v1780
        %v1782 = vsub.f32 1.5, %v1781
        %v1783 = vmul.f32 %v1778, %v1782
        %v1784 = vmul.f32 %v1518, %v1783
        %vm1785 = vcmp.eq.f32.partialorder %v1518, inf
        %v1786 = vsel %vm1785, %v1518, %v1784
        %vm1787 = vcmp.eq.f32.partialorder %v1518, 0.0
        %v1788 = vand.u32 %v1518, 2147483648
        %v1789 = vsel %vm1787, %v1788, %v1786
        %v1790 = vrsqrt.pop %v1519
        %v1791 = vmul.f32 %v1790, %v1519
        %v1792 = vmul.f32 %v1791, %v1790
        %v1793 = vmul.f32 0.5, %v1792
        %v1794 = vsub.f32 1.5, %v1793
        %v1795 = vmul.f32 %v1790, %v1794
        %v1796 = vmul.f32 %v1519, %v1795
        %vm1797 = vcmp.eq.f32.partialorder %v1519, inf
        %v1798 = vsel %vm1797, %v1519, %v1796
        %vm1799 = vcmp.eq.f32.partialorder %v1519, 0.0
        %v1800 = vand.u32 %v1519, 2147483648
        %v1801 = vsel %vm1799, %v1800, %v1798
        %v1802 = vrsqrt.pop %v1520
        %v1803 = vmul.f32 %v1802, %v1520
        %v1804 = vmul.f32 %v1803, %v1802
        %v1805 = vmul.f32 0.5, %v1804
        %v1806 = vsub.f32 1.5, %v1805
        %v1807 = vmul.f32 %v1802, %v1806
        %v1808 = vmul.f32 %v1520, %v1807
        %vm1809 = vcmp.eq.f32.partialorder %v1520, inf
        %v1810 = vsel %vm1809, %v1520, %v1808
        %vm1811 = vcmp.eq.f32.partialorder %v1520, 0.0
        %v1812 = vand.u32 %v1520, 2147483648
        %v1813 = vsel %vm1811, %v1812, %v1810
        %v1814 = vrsqrt.pop %v1521
        %v1815 = vmul.f32 %v1814, %v1521
        %v1816 = vmul.f32 %v1815, %v1814
        %v1817 = vmul.f32 0.5, %v1816
        %v1818 = vsub.f32 1.5, %v1817
        %v1819 = vmul.f32 %v1814, %v1818
        %v1820 = vmul.f32 %v1521, %v1819
        %vm1821 = vcmp.eq.f32.partialorder %v1521, inf
        %v1822 = vsel %vm1821, %v1521, %v1820
        %vm1823 = vcmp.eq.f32.partialorder %v1521, 0.0
        %v1824 = vand.u32 %v1521, 2147483648
        %v1825 = vsel %vm1823, %v1824, %v1822
        %v1826 = vrsqrt.pop %v1522
        %v1827 = vmul.f32 %v1826, %v1522
        %v1828 = vmul.f32 %v1827, %v1826
        %v1829 = vmul.f32 0.5, %v1828
        %v1830 = vsub.f32 1.5, %v1829
        %v1831 = vmul.f32 %v1826, %v1830
        %v1832 = vmul.f32 %v1522, %v1831
        %vm1833 = vcmp.eq.f32.partialorder %v1522, inf
        %v1834 = vsel %vm1833, %v1522, %v1832
        %vm1835 = vcmp.eq.f32.partialorder %v1522, 0.0
        %v1836 = vand.u32 %v1522, 2147483648
        %v1837 = vsel %vm1835, %v1836, %v1834
        %v1838 = vrsqrt.pop %v1523
        %v1839 = vmul.f32 %v1838, %v1523
        %v1840 = vmul.f32 %v1839, %v1838
        %v1841 = vmul.f32 0.5, %v1840
        %v1842 = vsub.f32 1.5, %v1841
        %v1843 = vmul.f32 %v1838, %v1842
        %v1844 = vmul.f32 %v1523, %v1843
        %vm1845 = vcmp.eq.f32.partialorder %v1523, inf
        %v1846 = vsel %vm1845, %v1523, %v1844
        %vm1847 = vcmp.eq.f32.partialorder %v1523, 0.0
        %v1848 = vand.u32 %v1523, 2147483648
        %v1849 = vsel %vm1847, %v1848, %v1846
        %v1850 = vrsqrt.pop %v1524
        %v1851 = vmul.f32 %v1850, %v1524
        %v1852 = vmul.f32 %v1851, %v1850
        %v1853 = vmul.f32 0.5, %v1852
        %v1854 = vsub.f32 1.5, %v1853
        %v1855 = vmul.f32 %v1850, %v1854
        %v1856 = vmul.f32 %v1524, %v1855
        %vm1857 = vcmp.eq.f32.partialorder %v1524, inf
        %v1858 = vsel %vm1857, %v1524, %v1856
        %vm1859 = vcmp.eq.f32.partialorder %v1524, 0.0
        %v1860 = vand.u32 %v1524, 2147483648
        %v1861 = vsel %vm1859, %v1860, %v1858
        %v1862 = vrsqrt.pop %v1525
        %v1863 = vmul.f32 %v1862, %v1525
        %v1864 = vmul.f32 %v1863, %v1862
        %v1865 = vmul.f32 0.5, %v1864
        %v1866 = vsub.f32 1.5, %v1865
        %v1867 = vmul.f32 %v1862, %v1866
        %v1868 = vmul.f32 %v1525, %v1867
        %vm1869 = vcmp.eq.f32.partialorder %v1525, inf
        %v1870 = vsel %vm1869, %v1525, %v1868
        %vm1871 = vcmp.eq.f32.partialorder %v1525, 0.0
        %v1872 = vand.u32 %v1525, 2147483648
        %v1873 = vsel %vm1871, %v1872, %v1870
        %v1874 = vrsqrt.pop %v1526
        %v1875 = vmul.f32 %v1874, %v1526
        %v1876 = vmul.f32 %v1875, %v1874
        %v1877 = vmul.f32 0.5, %v1876
        %v1878 = vsub.f32 1.5, %v1877
        %v1879 = vmul.f32 %v1874, %v1878
        %v1880 = vmul.f32 %v1526, %v1879
        %vm1881 = vcmp.eq.f32.partialorder %v1526, inf
        %v1882 = vsel %vm1881, %v1526, %v1880
        %vm1883 = vcmp.eq.f32.partialorder %v1526, 0.0
        %v1884 = vand.u32 %v1526, 2147483648
        %v1885 = vsel %vm1883, %v1884, %v1882
        %v1886 = vrsqrt.pop %v1527
        %v1887 = vmul.f32 %v1886, %v1527
        %v1888 = vmul.f32 %v1887, %v1886
        %v1889 = vmul.f32 0.5, %v1888
        %v1890 = vsub.f32 1.5, %v1889
        %v1891 = vmul.f32 %v1886, %v1890
        %v1892 = vmul.f32 %v1527, %v1891
        %vm1893 = vcmp.eq.f32.partialorder %v1527, inf
        %v1894 = vsel %vm1893, %v1527, %v1892
        %vm1895 = vcmp.eq.f32.partialorder %v1527, 0.0
        %v1896 = vand.u32 %v1527, 2147483648
        %v1897 = vsel %vm1895, %v1896, %v1894
        %v1898 = vrsqrt.pop %v1528
        %v1899 = vmul.f32 %v1898, %v1528
        %v1900 = vmul.f32 %v1899, %v1898
        %v1901 = vmul.f32 0.5, %v1900
        %v1902 = vsub.f32 1.5, %v1901
        %v1903 = vmul.f32 %v1898, %v1902
        %v1904 = vmul.f32 %v1528, %v1903
        %vm1905 = vcmp.eq.f32.partialorder %v1528, inf
        %v1906 = vsel %vm1905, %v1528, %v1904
        %vm1907 = vcmp.eq.f32.partialorder %v1528, 0.0
        %v1908 = vand.u32 %v1528, 2147483648
        %v1909 = vsel %vm1907, %v1908, %v1906
        %v1910 = vrsqrt.pop %v1529
        %v1911 = vmul.f32 %v1910, %v1529
        %v1912 = vmul.f32 %v1911, %v1910
        %v1913 = vmul.f32 0.5, %v1912
        %v1914 = vsub.f32 1.5, %v1913
        %v1915 = vmul.f32 %v1910, %v1914
        %v1916 = vmul.f32 %v1529, %v1915
        %vm1917 = vcmp.eq.f32.partialorder %v1529, inf
        %v1918 = vsel %vm1917, %v1529, %v1916
        %vm1919 = vcmp.eq.f32.partialorder %v1529, 0.0
        %v1920 = vand.u32 %v1529, 2147483648
        %v1921 = vsel %vm1919, %v1920, %v1918
        %v1922 = vrsqrt.pop %v1530
        %v1923 = vmul.f32 %v1922, %v1530
        %v1924 = vmul.f32 %v1923, %v1922
        %v1925 = vmul.f32 0.5, %v1924
        %v1926 = vsub.f32 1.5, %v1925
        %v1927 = vmul.f32 %v1922, %v1926
        %v1928 = vmul.f32 %v1530, %v1927
        %vm1929 = vcmp.eq.f32.partialorder %v1530, inf
        %v1930 = vsel %vm1929, %v1530, %v1928
        %vm1931 = vcmp.eq.f32.partialorder %v1530, 0.0
        %v1932 = vand.u32 %v1530, 2147483648
        %v1933 = vsel %vm1931, %v1932, %v1930
        %v1934 = vrsqrt.pop %v1531
        %v1935 = vmul.f32 %v1934, %v1531
        %v1936 = vmul.f32 %v1935, %v1934
        %v1937 = vmul.f32 0.5, %v1936
        %v1938 = vsub.f32 1.5, %v1937
        %v1939 = vmul.f32 %v1934, %v1938
        %v1940 = vmul.f32 %v1531, %v1939
        %vm1941 = vcmp.eq.f32.partialorder %v1531, inf
        %v1942 = vsel %vm1941, %v1531, %v1940
        %vm1943 = vcmp.eq.f32.partialorder %v1531, 0.0
        %v1944 = vand.u32 %v1531, 2147483648
        %v1945 = vsel %vm1943, %v1944, %v1942
        %v1946 = vrsqrt.pop %v1532
        %v1947 = vmul.f32 %v1946, %v1532
        %v1948 = vmul.f32 %v1947, %v1946
        %v1949 = vmul.f32 0.5, %v1948
        %v1950 = vsub.f32 1.5, %v1949
        %v1951 = vmul.f32 %v1946, %v1950
        %v1952 = vmul.f32 %v1532, %v1951
        %vm1953 = vcmp.eq.f32.partialorder %v1532, inf
        %v1954 = vsel %vm1953, %v1532, %v1952
        %vm1955 = vcmp.eq.f32.partialorder %v1532, 0.0
        %v1956 = vand.u32 %v1532, 2147483648
        %v1957 = vsel %vm1955, %v1956, %v1954
        %v1958 = vrsqrt.pop %v1533
        %v1959 = vmul.f32 %v1958, %v1533
        %v1960 = vmul.f32 %v1959, %v1958
        %v1961 = vmul.f32 0.5, %v1960
        %v1962 = vsub.f32 1.5, %v1961
        %v1963 = vmul.f32 %v1958, %v1962
        %v1964 = vmul.f32 %v1533, %v1963
        %vm1965 = vcmp.eq.f32.partialorder %v1533, inf
        %v1966 = vsel %vm1965, %v1533, %v1964
        %vm1967 = vcmp.eq.f32.partialorder %v1533, 0.0
        %v1968 = vand.u32 %v1533, 2147483648
        %v1969 = vsel %vm1967, %v1968, %v1966
        %v1970 = vrsqrt.pop %v1534
        %v1971 = vmul.f32 %v1970, %v1534
        %v1972 = vmul.f32 %v1971, %v1970
        %v1973 = vmul.f32 0.5, %v1972
        %v1974 = vsub.f32 1.5, %v1973
        %v1975 = vmul.f32 %v1970, %v1974
        %v1976 = vmul.f32 %v1534, %v1975
        %vm1977 = vcmp.eq.f32.partialorder %v1534, inf
        %v1978 = vsel %vm1977, %v1534, %v1976
        %vm1979 = vcmp.eq.f32.partialorder %v1534, 0.0
        %v1980 = vand.u32 %v1534, 2147483648
        %v1981 = vsel %vm1979, %v1980, %v1978
        %v1982 = vrsqrt.pop %v1535
        %v1983 = vmul.f32 %v1982, %v1535
        %v1984 = vmul.f32 %v1983, %v1982
        %v1985 = vmul.f32 0.5, %v1984
        %v1986 = vsub.f32 1.5, %v1985
        %v1987 = vmul.f32 %v1982, %v1986
        %v1988 = vmul.f32 %v1535, %v1987
        %vm1989 = vcmp.eq.f32.partialorder %v1535, inf
        %v1990 = vsel %vm1989, %v1535, %v1988
        %vm1991 = vcmp.eq.f32.partialorder %v1535, 0.0
        %v1992 = vand.u32 %v1535, 2147483648
        %v1993 = vsel %vm1991, %v1992, %v1990
        %v1994 = vrsqrt.pop %v1536
        %v1995 = vmul.f32 %v1994, %v1536
        %v1996 = vmul.f32 %v1995, %v1994
        %v1997 = vmul.f32 0.5, %v1996
        %v1998 = vsub.f32 1.5, %v1997
        %v1999 = vmul.f32 %v1994, %v1998
        %v2000 = vmul.f32 %v1536, %v1999
        %vm2001 = vcmp.eq.f32.partialorder %v1536, inf
        %v2002 = vsel %vm2001, %v1536, %v2000
        %vm2003 = vcmp.eq.f32.partialorder %v1536, 0.0
        %v2004 = vand.u32 %v1536, 2147483648
        %v2005 = vsel %vm2003, %v2004, %v2002
        %v2006 = vrsqrt.pop %v1537
        %v2007 = vmul.f32 %v2006, %v1537
        %v2008 = vmul.f32 %v2007, %v2006
        %v2009 = vmul.f32 0.5, %v2008
        %v2010 = vsub.f32 1.5, %v2009
        %v2011 = vmul.f32 %v2006, %v2010
        %v2012 = vmul.f32 %v1537, %v2011
        %vm2013 = vcmp.eq.f32.partialorder %v1537, inf
        %v2014 = vsel %vm2013, %v1537, %v2012
        %vm2015 = vcmp.eq.f32.partialorder %v1537, 0.0
        %v2016 = vand.u32 %v1537, 2147483648
        %v2017 = vsel %vm2015, %v2016, %v2014
        %v2018 = vrsqrt.pop %v1538
        %v2019 = vmul.f32 %v2018, %v1538
        %v2020 = vmul.f32 %v2019, %v2018
        %v2021 = vmul.f32 0.5, %v2020
        %v2022 = vsub.f32 1.5, %v2021
        %v2023 = vmul.f32 %v2018, %v2022
        %v2024 = vmul.f32 %v1538, %v2023
        %vm2025 = vcmp.eq.f32.partialorder %v1538, inf
        %v2026 = vsel %vm2025, %v1538, %v2024
        %vm2027 = vcmp.eq.f32.partialorder %v1538, 0.0
        %v2028 = vand.u32 %v1538, 2147483648
        %v2029 = vsel %vm2027, %v2028, %v2026
        %v2030 = vrsqrt.pop %v1539
        %v2031 = vmul.f32 %v2030, %v1539
        %v2032 = vmul.f32 %v2031, %v2030
        %v2033 = vmul.f32 0.5, %v2032
        %v2034 = vsub.f32 1.5, %v2033
        %v2035 = vmul.f32 %v2030, %v2034
        %v2036 = vmul.f32 %v1539, %v2035
        %vm2037 = vcmp.eq.f32.partialorder %v1539, inf
        %v2038 = vsel %vm2037, %v1539, %v2036
        %vm2039 = vcmp.eq.f32.partialorder %v1539, 0.0
        %v2040 = vand.u32 %v1539, 2147483648
        %v2041 = vsel %vm2039, %v2040, %v2038
        %v2042 = vrsqrt.pop %v1540
        %v2043 = vmul.f32 %v2042, %v1540
        %v2044 = vmul.f32 %v2043, %v2042
        %v2045 = vmul.f32 0.5, %v2044
        %v2046 = vsub.f32 1.5, %v2045
        %v2047 = vmul.f32 %v2042, %v2046
        %v2048 = vmul.f32 %v1540, %v2047
        %vm2049 = vcmp.eq.f32.partialorder %v1540, inf
        %v2050 = vsel %vm2049, %v1540, %v2048
        %vm2051 = vcmp.eq.f32.partialorder %v1540, 0.0
        %v2052 = vand.u32 %v1540, 2147483648
        %v2053 = vsel %vm2051, %v2052, %v2050
        %v2054 = vrsqrt.pop %v1541
        %v2055 = vmul.f32 %v2054, %v1541
        %v2056 = vmul.f32 %v2055, %v2054
        %v2057 = vmul.f32 0.5, %v2056
        %v2058 = vsub.f32 1.5, %v2057
        %v2059 = vmul.f32 %v2054, %v2058
        %v2060 = vmul.f32 %v1541, %v2059
        %vm2061 = vcmp.eq.f32.partialorder %v1541, inf
        %v2062 = vsel %vm2061, %v1541, %v2060
        %vm2063 = vcmp.eq.f32.partialorder %v1541, 0.0
        %v2064 = vand.u32 %v1541, 2147483648
        %v2065 = vsel %vm2063, %v2064, %v2062
        %v2066 = vrsqrt.pop %v1542
        %v2067 = vmul.f32 %v2066, %v1542
        %v2068 = vmul.f32 %v2067, %v2066
        %v2069 = vmul.f32 0.5, %v2068
        %v2070 = vsub.f32 1.5, %v2069
        %v2071 = vmul.f32 %v2066, %v2070
        %v2072 = vmul.f32 %v1542, %v2071
        %vm2073 = vcmp.eq.f32.partialorder %v1542, inf
        %v2074 = vsel %vm2073, %v1542, %v2072
        %vm2075 = vcmp.eq.f32.partialorder %v1542, 0.0
        %v2076 = vand.u32 %v1542, 2147483648
        %v2077 = vsel %vm2075, %v2076, %v2074
        %v2078 = vrsqrt.pop %v1543
        %v2079 = vmul.f32 %v2078, %v1543
        %v2080 = vmul.f32 %v2079, %v2078
        %v2081 = vmul.f32 0.5, %v2080
        %v2082 = vsub.f32 1.5, %v2081
        %v2083 = vmul.f32 %v2078, %v2082
        %v2084 = vmul.f32 %v1543, %v2083
        %vm2085 = vcmp.eq.f32.partialorder %v1543, inf
        %v2086 = vsel %vm2085, %v1543, %v2084
        %vm2087 = vcmp.eq.f32.partialorder %v1543, 0.0
        %v2088 = vand.u32 %v1543, 2147483648
        %v2089 = vsel %vm2087, %v2088, %v2086
        %v2090 = vrsqrt.pop %v1544
        %v2091 = vmul.f32 %v2090, %v1544
        %v2092 = vmul.f32 %v2091, %v2090
        %v2093 = vmul.f32 0.5, %v2092
        %v2094 = vsub.f32 1.5, %v2093
        %v2095 = vmul.f32 %v2090, %v2094
        %v2096 = vmul.f32 %v1544, %v2095
        %vm2097 = vcmp.eq.f32.partialorder %v1544, inf
        %v2098 = vsel %vm2097, %v1544, %v2096
        %vm2099 = vcmp.eq.f32.partialorder %v1544, 0.0
        %v2100 = vand.u32 %v1544, 2147483648
        %v2101 = vsel %vm2099, %v2100, %v2098
        %v2102 = vrsqrt.pop %v1545
        %v2103 = vmul.f32 %v2102, %v1545
        %v2104 = vmul.f32 %v2103, %v2102
        %v2105 = vmul.f32 0.5, %v2104
        %v2106 = vsub.f32 1.5, %v2105
        %v2107 = vmul.f32 %v2102, %v2106
        %v2108 = vmul.f32 %v1545, %v2107
        %vm2109 = vcmp.eq.f32.partialorder %v1545, inf
        %v2110 = vsel %vm2109, %v1545, %v2108
        %vm2111 = vcmp.eq.f32.partialorder %v1545, 0.0
        %v2112 = vand.u32 %v1545, 2147483648
        %v2113 = vsel %vm2111, %v2112, %v2110
        %v2114 = vrsqrt.pop %v1546
        %v2115 = vmul.f32 %v2114, %v1546
        %v2116 = vmul.f32 %v2115, %v2114
        %v2117 = vmul.f32 0.5, %v2116
        %v2118 = vsub.f32 1.5, %v2117
        %v2119 = vmul.f32 %v2114, %v2118
        %v2120 = vmul.f32 %v1546, %v2119
        %vm2121 = vcmp.eq.f32.partialorder %v1546, inf
        %v2122 = vsel %vm2121, %v1546, %v2120
        %vm2123 = vcmp.eq.f32.partialorder %v1546, 0.0
        %v2124 = vand.u32 %v1546, 2147483648
        %v2125 = vsel %vm2123, %v2124, %v2122
        %v2126 = vrsqrt.pop %v1547
        %v2127 = vmul.f32 %v2126, %v1547
        %v2128 = vmul.f32 %v2127, %v2126
        %v2129 = vmul.f32 0.5, %v2128
        %v2130 = vsub.f32 1.5, %v2129
        %v2131 = vmul.f32 %v2126, %v2130
        %v2132 = vmul.f32 %v1547, %v2131
        %vm2133 = vcmp.eq.f32.partialorder %v1547, inf
        %v2134 = vsel %vm2133, %v1547, %v2132
        %vm2135 = vcmp.eq.f32.partialorder %v1547, 0.0
        %v2136 = vand.u32 %v1547, 2147483648
        %v2137 = vsel %vm2135, %v2136, %v2134
        %v2138 = vrsqrt.pop %v1548
        %v2139 = vmul.f32 %v2138, %v1548
        %v2140 = vmul.f32 %v2139, %v2138
        %v2141 = vmul.f32 0.5, %v2140
        %v2142 = vsub.f32 1.5, %v2141
        %v2143 = vmul.f32 %v2138, %v2142
        %v2144 = vmul.f32 %v1548, %v2143
        %vm2145 = vcmp.eq.f32.partialorder %v1548, inf
        %v2146 = vsel %vm2145, %v1548, %v2144
        %vm2147 = vcmp.eq.f32.partialorder %v1548, 0.0
        %v2148 = vand.u32 %v1548, 2147483648
        %v2149 = vsel %vm2147, %v2148, %v2146
        %v2150 = vrsqrt.pop %v1549
        %v2151 = vmul.f32 %v2150, %v1549
        %v2152 = vmul.f32 %v2151, %v2150
        %v2153 = vmul.f32 0.5, %v2152
        %v2154 = vsub.f32 1.5, %v2153
        %v2155 = vmul.f32 %v2150, %v2154
        %v2156 = vmul.f32 %v1549, %v2155
        %vm2157 = vcmp.eq.f32.partialorder %v1549, inf
        %v2158 = vsel %vm2157, %v1549, %v2156
        %vm2159 = vcmp.eq.f32.partialorder %v1549, 0.0
        %v2160 = vand.u32 %v1549, 2147483648
        %v2161 = vsel %vm2159, %v2160, %v2158
        %v2162 = vrsqrt.pop %v1550
        %v2163 = vmul.f32 %v2162, %v1550
        %v2164 = vmul.f32 %v2163, %v2162
        %v2165 = vmul.f32 0.5, %v2164
        %v2166 = vsub.f32 1.5, %v2165
        %v2167 = vmul.f32 %v2162, %v2166
        %v2168 = vmul.f32 %v1550, %v2167
        %vm2169 = vcmp.eq.f32.partialorder %v1550, inf
        %v2170 = vsel %vm2169, %v1550, %v2168
        %vm2171 = vcmp.eq.f32.partialorder %v1550, 0.0
        %v2172 = vand.u32 %v1550, 2147483648
        %v2173 = vsel %vm2171, %v2172, %v2170
        %v2174 = vrsqrt.pop %v1551
        %v2175 = vmul.f32 %v2174, %v1551
        %v2176 = vmul.f32 %v2175, %v2174
        %v2177 = vmul.f32 0.5, %v2176
        %v2178 = vsub.f32 1.5, %v2177
        %v2179 = vmul.f32 %v2174, %v2178
        %v2180 = vmul.f32 %v1551, %v2179
        %vm2181 = vcmp.eq.f32.partialorder %v1551, inf
        %v2182 = vsel %vm2181, %v1551, %v2180
        %vm2183 = vcmp.eq.f32.partialorder %v1551, 0.0
        %v2184 = vand.u32 %v1551, 2147483648
        %v2185 = vsel %vm2183, %v2184, %v2182
        %v2186 = vrsqrt.pop %v1552
        %v2187 = vmul.f32 %v2186, %v1552
        %v2188 = vmul.f32 %v2187, %v2186
        %v2189 = vmul.f32 0.5, %v2188
        %v2190 = vsub.f32 1.5, %v2189
        %v2191 = vmul.f32 %v2186, %v2190
        %v2192 = vmul.f32 %v1552, %v2191
        %vm2193 = vcmp.eq.f32.partialorder %v1552, inf
        %v2194 = vsel %vm2193, %v1552, %v2192
        %vm2195 = vcmp.eq.f32.partialorder %v1552, 0.0
        %v2196 = vand.u32 %v1552, 2147483648
        %v2197 = vsel %vm2195, %v2196, %v2194
        %v2198 = vrsqrt.pop %v1553
        %v2199 = vmul.f32 %v2198, %v1553
        %v2200 = vmul.f32 %v2199, %v2198
        %v2201 = vmul.f32 0.5, %v2200
        %v2202 = vsub.f32 1.5, %v2201
        %v2203 = vmul.f32 %v2198, %v2202
        %v2204 = vmul.f32 %v1553, %v2203
        %vm2205 = vcmp.eq.f32.partialorder %v1553, inf
        %v2206 = vsel %vm2205, %v1553, %v2204
        %vm2207 = vcmp.eq.f32.partialorder %v1553, 0.0
        %v2208 = vand.u32 %v1553, 2147483648
        %v2209 = vsel %vm2207, %v2208, %v2206
        %v2210 = vrsqrt.pop %v1554
        %v2211 = vmul.f32 %v2210, %v1554
        %v2212 = vmul.f32 %v2211, %v2210
        %v2213 = vmul.f32 0.5, %v2212
        %v2214 = vsub.f32 1.5, %v2213
        %v2215 = vmul.f32 %v2210, %v2214
        %v2216 = vmul.f32 %v1554, %v2215
        %vm2217 = vcmp.eq.f32.partialorder %v1554, inf
        %v2218 = vsel %vm2217, %v1554, %v2216
        %vm2219 = vcmp.eq.f32.partialorder %v1554, 0.0
        %v2220 = vand.u32 %v1554, 2147483648
        %v2221 = vsel %vm2219, %v2220, %v2218
        %v2222 = vrsqrt.pop %v1555
        %v2223 = vmul.f32 %v2222, %v1555
        %v2224 = vmul.f32 %v2223, %v2222
        %v2225 = vmul.f32 0.5, %v2224
        %v2226 = vsub.f32 1.5, %v2225
        %v2227 = vmul.f32 %v2222, %v2226
        %v2228 = vmul.f32 %v1555, %v2227
        %vm2229 = vcmp.eq.f32.partialorder %v1555, inf
        %v2230 = vsel %vm2229, %v1555, %v2228
        %vm2231 = vcmp.eq.f32.partialorder %v1555, 0.0
        %v2232 = vand.u32 %v1555, 2147483648
        %v2233 = vsel %vm2231, %v2232, %v2230
        %v2234 = vrsqrt.pop %v1556
        %v2235 = vmul.f32 %v2234, %v1556
        %v2236 = vmul.f32 %v2235, %v2234
        %v2237 = vmul.f32 0.5, %v2236
        %v2238 = vsub.f32 1.5, %v2237
        %v2239 = vmul.f32 %v2234, %v2238
        %v2240 = vmul.f32 %v1556, %v2239
        %vm2241 = vcmp.eq.f32.partialorder %v1556, inf
        %v2242 = vsel %vm2241, %v1556, %v2240
        %vm2243 = vcmp.eq.f32.partialorder %v1556, 0.0
        %v2244 = vand.u32 %v1556, 2147483648
        %v2245 = vsel %vm2243, %v2244, %v2242
        %v2246 = vrsqrt.pop %v1557
        %v2247 = vmul.f32 %v2246, %v1557
        %v2248 = vmul.f32 %v2247, %v2246
        %v2249 = vmul.f32 0.5, %v2248
        %v2250 = vsub.f32 1.5, %v2249
        %v2251 = vmul.f32 %v2246, %v2250
        %v2252 = vmul.f32 %v1557, %v2251
        %vm2253 = vcmp.eq.f32.partialorder %v1557, inf
        %v2254 = vsel %vm2253, %v1557, %v2252
        %vm2255 = vcmp.eq.f32.partialorder %v1557, 0.0
        %v2256 = vand.u32 %v1557, 2147483648
        %v2257 = vsel %vm2255, %v2256, %v2254
        %v2258 = vrsqrt.pop %v1558
        %v2259 = vmul.f32 %v2258, %v1558
        %v2260 = vmul.f32 %v2259, %v2258
        %v2261 = vmul.f32 0.5, %v2260
        %v2262 = vsub.f32 1.5, %v2261
        %v2263 = vmul.f32 %v2258, %v2262
        %v2264 = vmul.f32 %v1558, %v2263
        %vm2265 = vcmp.eq.f32.partialorder %v1558, inf
        %v2266 = vsel %vm2265, %v1558, %v2264
        %vm2267 = vcmp.eq.f32.partialorder %v1558, 0.0
        %v2268 = vand.u32 %v1558, 2147483648
        %v2269 = vsel %vm2267, %v2268, %v2266
        %v2270 = vrsqrt.pop %v1559
        %v2271 = vmul.f32 %v2270, %v1559
        %v2272 = vmul.f32 %v2271, %v2270
        %v2273 = vmul.f32 0.5, %v2272
        %v2274 = vsub.f32 1.5, %v2273
        %v2275 = vmul.f32 %v2270, %v2274
        %v2276 = vmul.f32 %v1559, %v2275
        %vm2277 = vcmp.eq.f32.partialorder %v1559, inf
        %v2278 = vsel %vm2277, %v1559, %v2276
        %vm2279 = vcmp.eq.f32.partialorder %v1559, 0.0
        %v2280 = vand.u32 %v1559, 2147483648
        %v2281 = vsel %vm2279, %v2280, %v2278
        %v2282 = vrsqrt.pop %v1560
        %v2283 = vmul.f32 %v2282, %v1560
        %v2284 = vmul.f32 %v2283, %v2282
        %v2285 = vmul.f32 0.5, %v2284
        %v2286 = vsub.f32 1.5, %v2285
        %v2287 = vmul.f32 %v2282, %v2286
        %v2288 = vmul.f32 %v1560, %v2287
        %vm2289 = vcmp.eq.f32.partialorder %v1560, inf
        %v2290 = vsel %vm2289, %v1560, %v2288
        %vm2291 = vcmp.eq.f32.partialorder %v1560, 0.0
        %v2292 = vand.u32 %v1560, 2147483648
        %v2293 = vsel %vm2291, %v2292, %v2290
        %v2294 = vrsqrt.pop %v1561
        %v2295 = vmul.f32 %v2294, %v1561
        %v2296 = vmul.f32 %v2295, %v2294
        %v2297 = vmul.f32 0.5, %v2296
        %v2298 = vsub.f32 1.5, %v2297
        %v2299 = vmul.f32 %v2294, %v2298
        %v2300 = vmul.f32 %v1561, %v2299
        %vm2301 = vcmp.eq.f32.partialorder %v1561, inf
        %v2302 = vsel %vm2301, %v1561, %v2300
        %vm2303 = vcmp.eq.f32.partialorder %v1561, 0.0
        %v2304 = vand.u32 %v1561, 2147483648
        %v2305 = vsel %vm2303, %v2304, %v2302
        %v2306 = vrsqrt.pop %v1562
        %v2307 = vmul.f32 %v2306, %v1562
        %v2308 = vmul.f32 %v2307, %v2306
        %v2309 = vmul.f32 0.5, %v2308
        %v2310 = vsub.f32 1.5, %v2309
        %v2311 = vmul.f32 %v2306, %v2310
        %v2312 = vmul.f32 %v1562, %v2311
        %vm2313 = vcmp.eq.f32.partialorder %v1562, inf
        %v2314 = vsel %vm2313, %v1562, %v2312
        %vm2315 = vcmp.eq.f32.partialorder %v1562, 0.0
        %v2316 = vand.u32 %v1562, 2147483648
        %v2317 = vsel %vm2315, %v2316, %v2314
        %v2318 = vrsqrt.pop %v1563
        %v2319 = vmul.f32 %v2318, %v1563
        %v2320 = vmul.f32 %v2319, %v2318
        %v2321 = vmul.f32 0.5, %v2320
        %v2322 = vsub.f32 1.5, %v2321
        %v2323 = vmul.f32 %v2318, %v2322
        %v2324 = vmul.f32 %v1563, %v2323
        %vm2325 = vcmp.eq.f32.partialorder %v1563, inf
        %v2326 = vsel %vm2325, %v1563, %v2324
        %vm2327 = vcmp.eq.f32.partialorder %v1563, 0.0
        %v2328 = vand.u32 %v1563, 2147483648
        %v2329 = vsel %vm2327, %v2328, %v2326
        %v2330 = vrsqrt.pop %v1564
        %v2331 = vmul.f32 %v2330, %v1564
        %v2332 = vmul.f32 %v2331, %v2330
        %v2333 = vmul.f32 0.5, %v2332
        %v2334 = vsub.f32 1.5, %v2333
        %v2335 = vmul.f32 %v2330, %v2334
        %v2336 = vmul.f32 %v1564, %v2335
        %vm2337 = vcmp.eq.f32.partialorder %v1564, inf
        %v2338 = vsel %vm2337, %v1564, %v2336
        %vm2339 = vcmp.eq.f32.partialorder %v1564, 0.0
        %v2340 = vand.u32 %v1564, 2147483648
        %v2341 = vsel %vm2339, %v2340, %v2338
        %v2342 = vrsqrt.pop %v1565
        %v2343 = vmul.f32 %v2342, %v1565
        %v2344 = vmul.f32 %v2343, %v2342
        %v2345 = vmul.f32 0.5, %v2344
        %v2346 = vsub.f32 1.5, %v2345
        %v2347 = vmul.f32 %v2342, %v2346
        %v2348 = vmul.f32 %v1565, %v2347
        %vm2349 = vcmp.eq.f32.partialorder %v1565, inf
        %v2350 = vsel %vm2349, %v1565, %v2348
        %vm2351 = vcmp.eq.f32.partialorder %v1565, 0.0
        %v2352 = vand.u32 %v1565, 2147483648
        %v2353 = vsel %vm2351, %v2352, %v2350
        %v2354 = vrsqrt.pop %v1566
        %v2355 = vmul.f32 %v2354, %v1566
        %v2356 = vmul.f32 %v2355, %v2354
        %v2357 = vmul.f32 0.5, %v2356
        %v2358 = vsub.f32 1.5, %v2357
        %v2359 = vmul.f32 %v2354, %v2358
        %v2360 = vmul.f32 %v1566, %v2359
        %vm2361 = vcmp.eq.f32.partialorder %v1566, inf
        %v2362 = vsel %vm2361, %v1566, %v2360
        %vm2363 = vcmp.eq.f32.partialorder %v1566, 0.0
        %v2364 = vand.u32 %v1566, 2147483648
        %v2365 = vsel %vm2363, %v2364, %v2362
        %v2366 = vrsqrt.pop %v1567
        %v2367 = vmul.f32 %v2366, %v1567
        %v2368 = vmul.f32 %v2367, %v2366
        %v2369 = vmul.f32 0.5, %v2368
        %v2370 = vsub.f32 1.5, %v2369
        %v2371 = vmul.f32 %v2366, %v2370
        %v2372 = vmul.f32 %v1567, %v2371
        %vm2373 = vcmp.eq.f32.partialorder %v1567, inf
        %v2374 = vsel %vm2373, %v1567, %v2372
        %vm2375 = vcmp.eq.f32.partialorder %v1567, 0.0
        %v2376 = vand.u32 %v1567, 2147483648
        %v2377 = vsel %vm2375, %v2376, %v2374
        %v2378 = vrsqrt.pop %v1568
        %v2379 = vmul.f32 %v2378, %v1568
        %v2380 = vmul.f32 %v2379, %v2378
        %v2381 = vmul.f32 0.5, %v2380
        %v2382 = vsub.f32 1.5, %v2381
        %v2383 = vmul.f32 %v2378, %v2382
        %v2384 = vmul.f32 %v1568, %v2383
        %vm2385 = vcmp.eq.f32.partialorder %v1568, inf
        %v2386 = vsel %vm2385, %v1568, %v2384
        %vm2387 = vcmp.eq.f32.partialorder %v1568, 0.0
        %v2388 = vand.u32 %v1568, 2147483648
        %v2389 = vsel %vm2387, %v2388, %v2386
        %v2390 = vrsqrt.pop %v1569
        %v2391 = vmul.f32 %v2390, %v1569
        %v2392 = vmul.f32 %v2391, %v2390
        %v2393 = vmul.f32 0.5, %v2392
        %v2394 = vsub.f32 1.5, %v2393
        %v2395 = vmul.f32 %v2390, %v2394
        %v2396 = vmul.f32 %v1569, %v2395
        %vm2397 = vcmp.eq.f32.partialorder %v1569, inf
        %v2398 = vsel %vm2397, %v1569, %v2396
        %vm2399 = vcmp.eq.f32.partialorder %v1569, 0.0
        %v2400 = vand.u32 %v1569, 2147483648
        %v2401 = vsel %vm2399, %v2400, %v2398
        %v2402 = vrsqrt.pop %v1570
        %v2403 = vmul.f32 %v2402, %v1570
        %v2404 = vmul.f32 %v2403, %v2402
        %v2405 = vmul.f32 0.5, %v2404
        %v2406 = vsub.f32 1.5, %v2405
        %v2407 = vmul.f32 %v2402, %v2406
        %v2408 = vmul.f32 %v1570, %v2407
        %vm2409 = vcmp.eq.f32.partialorder %v1570, inf
        %v2410 = vsel %vm2409, %v1570, %v2408
        %vm2411 = vcmp.eq.f32.partialorder %v1570, 0.0
        %v2412 = vand.u32 %v1570, 2147483648
        %v2413 = vsel %vm2411, %v2412, %v2410
        %v2414 = vrsqrt.pop %v1571
        %v2415 = vmul.f32 %v2414, %v1571
        %v2416 = vmul.f32 %v2415, %v2414
        %v2417 = vmul.f32 0.5, %v2416
        %v2418 = vsub.f32 1.5, %v2417
        %v2419 = vmul.f32 %v2414, %v2418
        %v2420 = vmul.f32 %v1571, %v2419
        %vm2421 = vcmp.eq.f32.partialorder %v1571, inf
        %v2422 = vsel %vm2421, %v1571, %v2420
        %vm2423 = vcmp.eq.f32.partialorder %v1571, 0.0
        %v2424 = vand.u32 %v1571, 2147483648
        %v2425 = vsel %vm2423, %v2424, %v2422
        %v2426 = vrsqrt.pop %v1572
        %v2427 = vmul.f32 %v2426, %v1572
        %v2428 = vmul.f32 %v2427, %v2426
        %v2429 = vmul.f32 0.5, %v2428
        %v2430 = vsub.f32 1.5, %v2429
        %v2431 = vmul.f32 %v2426, %v2430
        %v2432 = vmul.f32 %v1572, %v2431
        %vm2433 = vcmp.eq.f32.partialorder %v1572, inf
        %v2434 = vsel %vm2433, %v1572, %v2432
        %vm2435 = vcmp.eq.f32.partialorder %v1572, 0.0
        %v2436 = vand.u32 %v1572, 2147483648
        %v2437 = vsel %vm2435, %v2436, %v2434
        %v2438 = vrsqrt.pop %v1573
        %v2439 = vmul.f32 %v2438, %v1573
        %v2440 = vmul.f32 %v2439, %v2438
        %v2441 = vmul.f32 0.5, %v2440
        %v2442 = vsub.f32 1.5, %v2441
        %v2443 = vmul.f32 %v2438, %v2442
        %v2444 = vmul.f32 %v1573, %v2443
        %vm2445 = vcmp.eq.f32.partialorder %v1573, inf
        %v2446 = vsel %vm2445, %v1573, %v2444
        %vm2447 = vcmp.eq.f32.partialorder %v1573, 0.0
        %v2448 = vand.u32 %v1573, 2147483648
        %v2449 = vsel %vm2447, %v2448, %v2446
        %v2450 = vrsqrt.pop %v1574
        %v2451 = vmul.f32 %v2450, %v1574
        %v2452 = vmul.f32 %v2451, %v2450
        %v2453 = vmul.f32 0.5, %v2452
        %v2454 = vsub.f32 1.5, %v2453
        %v2455 = vmul.f32 %v2450, %v2454
        %v2456 = vmul.f32 %v1574, %v2455
        %vm2457 = vcmp.eq.f32.partialorder %v1574, inf
        %v2458 = vsel %vm2457, %v1574, %v2456
        %vm2459 = vcmp.eq.f32.partialorder %v1574, 0.0
        %v2460 = vand.u32 %v1574, 2147483648
        %v2461 = vsel %vm2459, %v2460, %v2458
        %v2462 = vrsqrt.pop %v1575
        %v2463 = vmul.f32 %v2462, %v1575
        %v2464 = vmul.f32 %v2463, %v2462
        %v2465 = vmul.f32 0.5, %v2464
        %v2466 = vsub.f32 1.5, %v2465
        %v2467 = vmul.f32 %v2462, %v2466
        %v2468 = vmul.f32 %v1575, %v2467
        %vm2469 = vcmp.eq.f32.partialorder %v1575, inf
        %v2470 = vsel %vm2469, %v1575, %v2468
        %vm2471 = vcmp.eq.f32.partialorder %v1575, 0.0
        %v2472 = vand.u32 %v1575, 2147483648
        %v2473 = vsel %vm2471, %v2472, %v2470
        %v2474 = vrsqrt.pop %v1576
        %v2475 = vmul.f32 %v2474, %v1576
        %v2476 = vmul.f32 %v2475, %v2474
        %v2477 = vmul.f32 0.5, %v2476
        %v2478 = vsub.f32 1.5, %v2477
        %v2479 = vmul.f32 %v2474, %v2478
        %v2480 = vmul.f32 %v1576, %v2479
        %vm2481 = vcmp.eq.f32.partialorder %v1576, inf
        %v2482 = vsel %vm2481, %v1576, %v2480
        %vm2483 = vcmp.eq.f32.partialorder %v1576, 0.0
        %v2484 = vand.u32 %v1576, 2147483648
        %v2485 = vsel %vm2483, %v2484, %v2482
        %v2486 = vrsqrt.pop %v1577
        %v2487 = vmul.f32 %v2486, %v1577
        %v2488 = vmul.f32 %v2487, %v2486
        %v2489 = vmul.f32 0.5, %v2488
        %v2490 = vsub.f32 1.5, %v2489
        %v2491 = vmul.f32 %v2486, %v2490
        %v2492 = vmul.f32 %v1577, %v2491
        %vm2493 = vcmp.eq.f32.partialorder %v1577, inf
        %v2494 = vsel %vm2493, %v1577, %v2492
        %vm2495 = vcmp.eq.f32.partialorder %v1577, 0.0
        %v2496 = vand.u32 %v1577, 2147483648
        %v2497 = vsel %vm2495, %v2496, %v2494
        %v2498 = vrsqrt.pop %v1578
        %v2499 = vmul.f32 %v2498, %v1578
        %v2500 = vmul.f32 %v2499, %v2498
        %v2501 = vmul.f32 0.5, %v2500
        %v2502 = vsub.f32 1.5, %v2501
        %v2503 = vmul.f32 %v2498, %v2502
        %v2504 = vmul.f32 %v1578, %v2503
        %vm2505 = vcmp.eq.f32.partialorder %v1578, inf
        %v2506 = vsel %vm2505, %v1578, %v2504
        %vm2507 = vcmp.eq.f32.partialorder %v1578, 0.0
        %v2508 = vand.u32 %v1578, 2147483648
        %v2509 = vsel %vm2507, %v2508, %v2506
        %v2510 = vrsqrt.pop %v1579
        %v2511 = vmul.f32 %v2510, %v1579
        %v2512 = vmul.f32 %v2511, %v2510
        %v2513 = vmul.f32 0.5, %v2512
        %v2514 = vsub.f32 1.5, %v2513
        %v2515 = vmul.f32 %v2510, %v2514
        %v2516 = vmul.f32 %v1579, %v2515
        %vm2517 = vcmp.eq.f32.partialorder %v1579, inf
        %v2518 = vsel %vm2517, %v1579, %v2516
        %vm2519 = vcmp.eq.f32.partialorder %v1579, 0.0
        %v2520 = vand.u32 %v1579, 2147483648
        %v2521 = vsel %vm2519, %v2520, %v2518
        %v2522 = vrsqrt.pop %v1580
        %v2523 = vmul.f32 %v2522, %v1580
        %v2524 = vmul.f32 %v2523, %v2522
        %v2525 = vmul.f32 0.5, %v2524
        %v2526 = vsub.f32 1.5, %v2525
        %v2527 = vmul.f32 %v2522, %v2526
        %v2528 = vmul.f32 %v1580, %v2527
        %vm2529 = vcmp.eq.f32.partialorder %v1580, inf
        %v2530 = vsel %vm2529, %v1580, %v2528
        %vm2531 = vcmp.eq.f32.partialorder %v1580, 0.0
        %v2532 = vand.u32 %v1580, 2147483648
        %v2533 = vsel %vm2531, %v2532, %v2530
        %v2534 = vrsqrt.pop %v1581
        %v2535 = vmul.f32 %v2534, %v1581
        %v2536 = vmul.f32 %v2535, %v2534
        %v2537 = vmul.f32 0.5, %v2536
        %v2538 = vsub.f32 1.5, %v2537
        %v2539 = vmul.f32 %v2534, %v2538
        %v2540 = vmul.f32 %v1581, %v2539
        %vm2541 = vcmp.eq.f32.partialorder %v1581, inf
        %v2542 = vsel %vm2541, %v1581, %v2540
        %vm2543 = vcmp.eq.f32.partialorder %v1581, 0.0
        %v2544 = vand.u32 %v1581, 2147483648
        %v2545 = vsel %vm2543, %v2544, %v2542
        %v2546 = vrsqrt.pop %v1582
        %v2547 = vmul.f32 %v2546, %v1582
        %v2548 = vmul.f32 %v2547, %v2546
        %v2549 = vmul.f32 0.5, %v2548
        %v2550 = vsub.f32 1.5, %v2549
        %v2551 = vmul.f32 %v2546, %v2550
        %v2552 = vmul.f32 %v1582, %v2551
        %vm2553 = vcmp.eq.f32.partialorder %v1582, inf
        %v2554 = vsel %vm2553, %v1582, %v2552
        %vm2555 = vcmp.eq.f32.partialorder %v1582, 0.0
        %v2556 = vand.u32 %v1582, 2147483648
        %v2557 = vsel %vm2555, %v2556, %v2554
        %v2558 = vrsqrt.pop %v1583
        %v2559 = vmul.f32 %v2558, %v1583
        %v2560 = vmul.f32 %v2559, %v2558
        %v2561 = vmul.f32 0.5, %v2560
        %v2562 = vsub.f32 1.5, %v2561
        %v2563 = vmul.f32 %v2558, %v2562
        %v2564 = vmul.f32 %v1583, %v2563
        %vm2565 = vcmp.eq.f32.partialorder %v1583, inf
        %v2566 = vsel %vm2565, %v1583, %v2564
        %vm2567 = vcmp.eq.f32.partialorder %v1583, 0.0
        %v2568 = vand.u32 %v1583, 2147483648
        %v2569 = vsel %vm2567, %v2568, %v2566
        %v2570 = vrsqrt.pop %v1584
        %v2571 = vmul.f32 %v2570, %v1584
        %v2572 = vmul.f32 %v2571, %v2570
        %v2573 = vmul.f32 0.5, %v2572
        %v2574 = vsub.f32 1.5, %v2573
        %v2575 = vmul.f32 %v2570, %v2574
        %v2576 = vmul.f32 %v1584, %v2575
        %vm2577 = vcmp.eq.f32.partialorder %v1584, inf
        %v2578 = vsel %vm2577, %v1584, %v2576
        %vm2579 = vcmp.eq.f32.partialorder %v1584, 0.0
        %v2580 = vand.u32 %v1584, 2147483648
        %v2581 = vsel %vm2579, %v2580, %v2578
        %v2582 = vrsqrt.pop %v1585
        %v2583 = vmul.f32 %v2582, %v1585
        %v2584 = vmul.f32 %v2583, %v2582
        %v2585 = vmul.f32 0.5, %v2584
        %v2586 = vsub.f32 1.5, %v2585
        %v2587 = vmul.f32 %v2582, %v2586
        %v2588 = vmul.f32 %v1585, %v2587
        %vm2589 = vcmp.eq.f32.partialorder %v1585, inf
        %v2590 = vsel %vm2589, %v1585, %v2588
        %vm2591 = vcmp.eq.f32.partialorder %v1585, 0.0
        %v2592 = vand.u32 %v1585, 2147483648
        %v2593 = vsel %vm2591, %v2592, %v2590
        %v2594 = vrsqrt.pop %v1586
        %v2595 = vmul.f32 %v2594, %v1586
        %v2596 = vmul.f32 %v2595, %v2594
        %v2597 = vmul.f32 0.5, %v2596
        %v2598 = vsub.f32 1.5, %v2597
        %v2599 = vmul.f32 %v2594, %v2598
        %v2600 = vmul.f32 %v1586, %v2599
        %vm2601 = vcmp.eq.f32.partialorder %v1586, inf
        %v2602 = vsel %vm2601, %v1586, %v2600
        %vm2603 = vcmp.eq.f32.partialorder %v1586, 0.0
        %v2604 = vand.u32 %v1586, 2147483648
        %v2605 = vsel %vm2603, %v2604, %v2602
        %v2606 = vrsqrt.pop %v1587
        %v2607 = vmul.f32 %v2606, %v1587
        %v2608 = vmul.f32 %v2607, %v2606
        %v2609 = vmul.f32 0.5, %v2608
        %v2610 = vsub.f32 1.5, %v2609
        %v2611 = vmul.f32 %v2606, %v2610
        %v2612 = vmul.f32 %v1587, %v2611
        %vm2613 = vcmp.eq.f32.partialorder %v1587, inf
        %v2614 = vsel %vm2613, %v1587, %v2612
        %vm2615 = vcmp.eq.f32.partialorder %v1587, 0.0
        %v2616 = vand.u32 %v1587, 2147483648
        %v2617 = vsel %vm2615, %v2616, %v2614
        %v2618 = vrsqrt.pop %v1588
        %v2619 = vmul.f32 %v2618, %v1588
        %v2620 = vmul.f32 %v2619, %v2618
        %v2621 = vmul.f32 0.5, %v2620
        %v2622 = vsub.f32 1.5, %v2621
        %v2623 = vmul.f32 %v2618, %v2622
        %v2624 = vmul.f32 %v1588, %v2623
        %vm2625 = vcmp.eq.f32.partialorder %v1588, inf
        %v2626 = vsel %vm2625, %v1588, %v2624
        %vm2627 = vcmp.eq.f32.partialorder %v1588, 0.0
        %v2628 = vand.u32 %v1588, 2147483648
        %v2629 = vsel %vm2627, %v2628, %v2626
        %v2630 = vrsqrt.pop %v1589
        %v2631 = vmul.f32 %v2630, %v1589
        %v2632 = vmul.f32 %v2631, %v2630
        %v2633 = vmul.f32 0.5, %v2632
        %v2634 = vsub.f32 1.5, %v2633
        %v2635 = vmul.f32 %v2630, %v2634
        %v2636 = vmul.f32 %v1589, %v2635
        %vm2637 = vcmp.eq.f32.partialorder %v1589, inf
        %v2638 = vsel %vm2637, %v1589, %v2636
        %vm2639 = vcmp.eq.f32.partialorder %v1589, 0.0
        %v2640 = vand.u32 %v1589, 2147483648
        %v2641 = vsel %vm2639, %v2640, %v2638
        %v2642 = vrsqrt.pop %v1590
        %v2643 = vmul.f32 %v2642, %v1590
        %v2644 = vmul.f32 %v2643, %v2642
        %v2645 = vmul.f32 0.5, %v2644
        %v2646 = vsub.f32 1.5, %v2645
        %v2647 = vmul.f32 %v2642, %v2646
        %v2648 = vmul.f32 %v1590, %v2647
        %vm2649 = vcmp.eq.f32.partialorder %v1590, inf
        %v2650 = vsel %vm2649, %v1590, %v2648
        %vm2651 = vcmp.eq.f32.partialorder %v1590, 0.0
        %v2652 = vand.u32 %v1590, 2147483648
        %v2653 = vsel %vm2651, %v2652, %v2650
        %v2654 = vrsqrt.pop %v1591
        %v2655 = vmul.f32 %v2654, %v1591
        %v2656 = vmul.f32 %v2655, %v2654
        %v2657 = vmul.f32 0.5, %v2656
        %v2658 = vsub.f32 1.5, %v2657
        %v2659 = vmul.f32 %v2654, %v2658
        %v2660 = vmul.f32 %v1591, %v2659
        %vm2661 = vcmp.eq.f32.partialorder %v1591, inf
        %v2662 = vsel %vm2661, %v1591, %v2660
        %vm2663 = vcmp.eq.f32.partialorder %v1591, 0.0
        %v2664 = vand.u32 %v1591, 2147483648
        %v2665 = vsel %vm2663, %v2664, %v2662
        %v2666 = vrsqrt.pop %v1592
        %v2667 = vmul.f32 %v2666, %v1592
        %v2668 = vmul.f32 %v2667, %v2666
        %v2669 = vmul.f32 0.5, %v2668
        %v2670 = vsub.f32 1.5, %v2669
        %v2671 = vmul.f32 %v2666, %v2670
        %v2672 = vmul.f32 %v1592, %v2671
        %vm2673 = vcmp.eq.f32.partialorder %v1592, inf
        %v2674 = vsel %vm2673, %v1592, %v2672
        %vm2675 = vcmp.eq.f32.partialorder %v1592, 0.0
        %v2676 = vand.u32 %v1592, 2147483648
        %v2677 = vsel %vm2675, %v2676, %v2674
        %v2678 = vrsqrt.pop %v1593
        %v2679 = vmul.f32 %v2678, %v1593
        %v2680 = vmul.f32 %v2679, %v2678
        %v2681 = vmul.f32 0.5, %v2680
        %v2682 = vsub.f32 1.5, %v2681
        %v2683 = vmul.f32 %v2678, %v2682
        %v2684 = vmul.f32 %v1593, %v2683
        %vm2685 = vcmp.eq.f32.partialorder %v1593, inf
        %v2686 = vsel %vm2685, %v1593, %v2684
        %vm2687 = vcmp.eq.f32.partialorder %v1593, 0.0
        %v2688 = vand.u32 %v1593, 2147483648
        %v2689 = vsel %vm2687, %v2688, %v2686
        %v2690 = vrsqrt.pop %v1594
        %v2691 = vmul.f32 %v2690, %v1594
        %v2692 = vmul.f32 %v2691, %v2690
        %v2693 = vmul.f32 0.5, %v2692
        %v2694 = vsub.f32 1.5, %v2693
        %v2695 = vmul.f32 %v2690, %v2694
        %v2696 = vmul.f32 %v1594, %v2695
        %vm2697 = vcmp.eq.f32.partialorder %v1594, inf
        %v2698 = vsel %vm2697, %v1594, %v2696
        %vm2699 = vcmp.eq.f32.partialorder %v1594, 0.0
        %v2700 = vand.u32 %v1594, 2147483648
        %v2701 = vsel %vm2699, %v2700, %v2698
        %v2702 = vrsqrt.pop %v1595
        %v2703 = vmul.f32 %v2702, %v1595
        %v2704 = vmul.f32 %v2703, %v2702
        %v2705 = vmul.f32 0.5, %v2704
        %v2706 = vsub.f32 1.5, %v2705
        %v2707 = vmul.f32 %v2702, %v2706
        %v2708 = vmul.f32 %v1595, %v2707
        %vm2709 = vcmp.eq.f32.partialorder %v1595, inf
        %v2710 = vsel %vm2709, %v1595, %v2708
        %vm2711 = vcmp.eq.f32.partialorder %v1595, 0.0
        %v2712 = vand.u32 %v1595, 2147483648
        %v2713 = vsel %vm2711, %v2712, %v2710
        %v2714 = vrsqrt.pop %v1596
        %v2715 = vmul.f32 %v2714, %v1596
        %v2716 = vmul.f32 %v2715, %v2714
        %v2717 = vmul.f32 0.5, %v2716
        %v2718 = vsub.f32 1.5, %v2717
        %v2719 = vmul.f32 %v2714, %v2718
        %v2720 = vmul.f32 %v1596, %v2719
        %vm2721 = vcmp.eq.f32.partialorder %v1596, inf
        %v2722 = vsel %vm2721, %v1596, %v2720
        %vm2723 = vcmp.eq.f32.partialorder %v1596, 0.0
        %v2724 = vand.u32 %v1596, 2147483648
        %v2725 = vsel %vm2723, %v2724, %v2722
        %v2726 = vrsqrt.pop %v1597
        %v2727 = vmul.f32 %v2726, %v1597
        %v2728 = vmul.f32 %v2727, %v2726
        %v2729 = vmul.f32 0.5, %v2728
        %v2730 = vsub.f32 1.5, %v2729
        %v2731 = vmul.f32 %v2726, %v2730
        %v2732 = vmul.f32 %v1597, %v2731
        %vm2733 = vcmp.eq.f32.partialorder %v1597, inf
        %v2734 = vsel %vm2733, %v1597, %v2732
        %vm2735 = vcmp.eq.f32.partialorder %v1597, 0.0
        %v2736 = vand.u32 %v1597, 2147483648
        %v2737 = vsel %vm2735, %v2736, %v2734
        %v2738 = vrsqrt.pop %v1598
        %v2739 = vmul.f32 %v2738, %v1598
        %v2740 = vmul.f32 %v2739, %v2738
        %v2741 = vmul.f32 0.5, %v2740
        %v2742 = vsub.f32 1.5, %v2741
        %v2743 = vmul.f32 %v2738, %v2742
        %v2744 = vmul.f32 %v1598, %v2743
        %vm2745 = vcmp.eq.f32.partialorder %v1598, inf
        %v2746 = vsel %vm2745, %v1598, %v2744
        %vm2747 = vcmp.eq.f32.partialorder %v1598, 0.0
        %v2748 = vand.u32 %v1598, 2147483648
        %v2749 = vsel %vm2747, %v2748, %v2746
        %v2750 = vrsqrt.pop %v1599
        %v2751 = vmul.f32 %v2750, %v1599
        %v2752 = vmul.f32 %v2751, %v2750
        %v2753 = vmul.f32 0.5, %v2752
        %v2754 = vsub.f32 1.5, %v2753
        %v2755 = vmul.f32 %v2750, %v2754
        %v2756 = vmul.f32 %v1599, %v2755
        %vm2757 = vcmp.eq.f32.partialorder %v1599, inf
        %v2758 = vsel %vm2757, %v1599, %v2756
        %vm2759 = vcmp.eq.f32.partialorder %v1599, 0.0
        %v2760 = vand.u32 %v1599, 2147483648
        %v2761 = vsel %vm2759, %v2760, %v2758
        %v2762 = vrsqrt.pop %v1600
        %v2763 = vmul.f32 %v2762, %v1600
        %v2764 = vmul.f32 %v2763, %v2762
        %v2765 = vmul.f32 0.5, %v2764
        %v2766 = vsub.f32 1.5, %v2765
        %v2767 = vmul.f32 %v2762, %v2766
        %v2768 = vmul.f32 %v1600, %v2767
        %vm2769 = vcmp.eq.f32.partialorder %v1600, inf
        %v2770 = vsel %vm2769, %v1600, %v2768
        %vm2771 = vcmp.eq.f32.partialorder %v1600, 0.0
        %v2772 = vand.u32 %v1600, 2147483648
        %v2773 = vsel %vm2771, %v2772, %v2770
        %v2774 = vrsqrt.pop %v1601
        %v2775 = vmul.f32 %v2774, %v1601
        %v2776 = vmul.f32 %v2775, %v2774
        %v2777 = vmul.f32 0.5, %v2776
        %v2778 = vsub.f32 1.5, %v2777
        %v2779 = vmul.f32 %v2774, %v2778
        %v2780 = vmul.f32 %v1601, %v2779
        %vm2781 = vcmp.eq.f32.partialorder %v1601, inf
        %v2782 = vsel %vm2781, %v1601, %v2780
        %vm2783 = vcmp.eq.f32.partialorder %v1601, 0.0
        %v2784 = vand.u32 %v1601, 2147483648
        %v2785 = vsel %vm2783, %v2784, %v2782
        %v2786 = vrsqrt.pop %v1602
        %v2787 = vmul.f32 %v2786, %v1602
        %v2788 = vmul.f32 %v2787, %v2786
        %v2789 = vmul.f32 0.5, %v2788
        %v2790 = vsub.f32 1.5, %v2789
        %v2791 = vmul.f32 %v2786, %v2790
        %v2792 = vmul.f32 %v1602, %v2791
        %vm2793 = vcmp.eq.f32.partialorder %v1602, inf
        %v2794 = vsel %vm2793, %v1602, %v2792
        %vm2795 = vcmp.eq.f32.partialorder %v1602, 0.0
        %v2796 = vand.u32 %v1602, 2147483648
        %v2797 = vsel %vm2795, %v2796, %v2794
        %v2798 = vrsqrt.pop %v1603
        %v2799 = vmul.f32 %v2798, %v1603
        %v2800 = vmul.f32 %v2799, %v2798
        %v2801 = vmul.f32 0.5, %v2800
        %v2802 = vsub.f32 1.5, %v2801
        %v2803 = vmul.f32 %v2798, %v2802
        %v2804 = vmul.f32 %v1603, %v2803
        %vm2805 = vcmp.eq.f32.partialorder %v1603, inf
        %v2806 = vsel %vm2805, %v1603, %v2804
        %vm2807 = vcmp.eq.f32.partialorder %v1603, 0.0
        %v2808 = vand.u32 %v1603, 2147483648
        %v2809 = vsel %vm2807, %v2808, %v2806
        %v2810 = vrsqrt.pop %v1604
        %v2811 = vmul.f32 %v2810, %v1604
        %v2812 = vmul.f32 %v2811, %v2810
        %v2813 = vmul.f32 0.5, %v2812
        %v2814 = vsub.f32 1.5, %v2813
        %v2815 = vmul.f32 %v2810, %v2814
        %v2816 = vmul.f32 %v1604, %v2815
        %vm2817 = vcmp.eq.f32.partialorder %v1604, inf
        %v2818 = vsel %vm2817, %v1604, %v2816
        %vm2819 = vcmp.eq.f32.partialorder %v1604, 0.0
        %v2820 = vand.u32 %v1604, 2147483648
        %v2821 = vsel %vm2819, %v2820, %v2818
        %v2822 = vrsqrt.pop %v1605
        %v2823 = vmul.f32 %v2822, %v1605
        %v2824 = vmul.f32 %v2823, %v2822
        %v2825 = vmul.f32 0.5, %v2824
        %v2826 = vsub.f32 1.5, %v2825
        %v2827 = vmul.f32 %v2822, %v2826
        %v2828 = vmul.f32 %v1605, %v2827
        %vm2829 = vcmp.eq.f32.partialorder %v1605, inf
        %v2830 = vsel %vm2829, %v1605, %v2828
        %vm2831 = vcmp.eq.f32.partialorder %v1605, 0.0
        %v2832 = vand.u32 %v1605, 2147483648
        %v2833 = vsel %vm2831, %v2832, %v2830
        %v2834 = vrsqrt.pop %v1606
        %v2835 = vmul.f32 %v2834, %v1606
        %v2836 = vmul.f32 %v2835, %v2834
        %v2837 = vmul.f32 0.5, %v2836
        %v2838 = vsub.f32 1.5, %v2837
        %v2839 = vmul.f32 %v2834, %v2838
        %v2840 = vmul.f32 %v1606, %v2839
        %vm2841 = vcmp.eq.f32.partialorder %v1606, inf
        %v2842 = vsel %vm2841, %v1606, %v2840
        %vm2843 = vcmp.eq.f32.partialorder %v1606, 0.0
        %v2844 = vand.u32 %v1606, 2147483648
        %v2845 = vsel %vm2843, %v2844, %v2842
        %v2846 = vrsqrt.pop %v1607
        %v2847 = vmul.f32 %v2846, %v1607
        %v2848 = vmul.f32 %v2847, %v2846
        %v2849 = vmul.f32 0.5, %v2848
        %v2850 = vsub.f32 1.5, %v2849
        %v2851 = vmul.f32 %v2846, %v2850
        %v2852 = vmul.f32 %v1607, %v2851
        %vm2853 = vcmp.eq.f32.partialorder %v1607, inf
        %v2854 = vsel %vm2853, %v1607, %v2852
        %vm2855 = vcmp.eq.f32.partialorder %v1607, 0.0
        %v2856 = vand.u32 %v1607, 2147483648
        %v2857 = vsel %vm2855, %v2856, %v2854
        %v2858 = vrsqrt.pop %v1608
        %v2859 = vmul.f32 %v2858, %v1608
        %v2860 = vmul.f32 %v2859, %v2858
        %v2861 = vmul.f32 0.5, %v2860
        %v2862 = vsub.f32 1.5, %v2861
        %v2863 = vmul.f32 %v2858, %v2862
        %v2864 = vmul.f32 %v1608, %v2863
        %vm2865 = vcmp.eq.f32.partialorder %v1608, inf
        %v2866 = vsel %vm2865, %v1608, %v2864
        %vm2867 = vcmp.eq.f32.partialorder %v1608, 0.0
        %v2868 = vand.u32 %v1608, 2147483648
        %v2869 = vsel %vm2867, %v2868, %v2866
        %v2870 = vrsqrt.pop %v1609
        %v2871 = vmul.f32 %v2870, %v1609
        %v2872 = vmul.f32 %v2871, %v2870
        %v2873 = vmul.f32 0.5, %v2872
        %v2874 = vsub.f32 1.5, %v2873
        %v2875 = vmul.f32 %v2870, %v2874
        %v2876 = vmul.f32 %v1609, %v2875
        %vm2877 = vcmp.eq.f32.partialorder %v1609, inf
        %v2878 = vsel %vm2877, %v1609, %v2876
        %vm2879 = vcmp.eq.f32.partialorder %v1609, 0.0
        %v2880 = vand.u32 %v1609, 2147483648
        %v2881 = vsel %vm2879, %v2880, %v2878
        %v2882 = vrsqrt.pop %v1610
        %v2883 = vmul.f32 %v2882, %v1610
        %v2884 = vmul.f32 %v2883, %v2882
        %v2885 = vmul.f32 0.5, %v2884
        %v2886 = vsub.f32 1.5, %v2885
        %v2887 = vmul.f32 %v2882, %v2886
        %v2888 = vmul.f32 %v1610, %v2887
        %vm2889 = vcmp.eq.f32.partialorder %v1610, inf
        %v2890 = vsel %vm2889, %v1610, %v2888
        %vm2891 = vcmp.eq.f32.partialorder %v1610, 0.0
        %v2892 = vand.u32 %v1610, 2147483648
        %v2893 = vsel %vm2891, %v2892, %v2890
        %v2894 = vrsqrt.pop %v1611
        %v2895 = vmul.f32 %v2894, %v1611
        %v2896 = vmul.f32 %v2895, %v2894
        %v2897 = vmul.f32 0.5, %v2896
        %v2898 = vsub.f32 1.5, %v2897
        %v2899 = vmul.f32 %v2894, %v2898
        %v2900 = vmul.f32 %v1611, %v2899
        %vm2901 = vcmp.eq.f32.partialorder %v1611, inf
        %v2902 = vsel %vm2901, %v1611, %v2900
        %vm2903 = vcmp.eq.f32.partialorder %v1611, 0.0
        %v2904 = vand.u32 %v1611, 2147483648
        %v2905 = vsel %vm2903, %v2904, %v2902
        %v2906 = vrsqrt.pop %v1612
        %v2907 = vmul.f32 %v2906, %v1612
        %v2908 = vmul.f32 %v2907, %v2906
        %v2909 = vmul.f32 0.5, %v2908
        %v2910 = vsub.f32 1.5, %v2909
        %v2911 = vmul.f32 %v2906, %v2910
        %v2912 = vmul.f32 %v1612, %v2911
        %vm2913 = vcmp.eq.f32.partialorder %v1612, inf
        %v2914 = vsel %vm2913, %v1612, %v2912
        %vm2915 = vcmp.eq.f32.partialorder %v1612, 0.0
        %v2916 = vand.u32 %v1612, 2147483648
        %v2917 = vsel %vm2915, %v2916, %v2914
        %v2918 = vrsqrt.pop %v1613
        %v2919 = vmul.f32 %v2918, %v1613
        %v2920 = vmul.f32 %v2919, %v2918
        %v2921 = vmul.f32 0.5, %v2920
        %v2922 = vsub.f32 1.5, %v2921
        %v2923 = vmul.f32 %v2918, %v2922
        %v2924 = vmul.f32 %v1613, %v2923
        %vm2925 = vcmp.eq.f32.partialorder %v1613, inf
        %v2926 = vsel %vm2925, %v1613, %v2924
        %vm2927 = vcmp.eq.f32.partialorder %v1613, 0.0
        %v2928 = vand.u32 %v1613, 2147483648
        %v2929 = vsel %vm2927, %v2928, %v2926
        %v2930 = vrsqrt.pop %v1614
        %v2931 = vmul.f32 %v2930, %v1614
        %v2932 = vmul.f32 %v2931, %v2930
        %v2933 = vmul.f32 0.5, %v2932
        %v2934 = vsub.f32 1.5, %v2933
        %v2935 = vmul.f32 %v2930, %v2934
        %v2936 = vmul.f32 %v1614, %v2935
        %vm2937 = vcmp.eq.f32.partialorder %v1614, inf
        %v2938 = vsel %vm2937, %v1614, %v2936
        %vm2939 = vcmp.eq.f32.partialorder %v1614, 0.0
        %v2940 = vand.u32 %v1614, 2147483648
        %v2941 = vsel %vm2939, %v2940, %v2938
        %v2942 = vrsqrt.pop %v1615
        %v2943 = vmul.f32 %v2942, %v1615
        %v2944 = vmul.f32 %v2943, %v2942
        %v2945 = vmul.f32 0.5, %v2944
        %v2946 = vsub.f32 1.5, %v2945
        %v2947 = vmul.f32 %v2942, %v2946
        %v2948 = vmul.f32 %v1615, %v2947
        %vm2949 = vcmp.eq.f32.partialorder %v1615, inf
        %v2950 = vsel %vm2949, %v1615, %v2948
        %vm2951 = vcmp.eq.f32.partialorder %v1615, 0.0
        %v2952 = vand.u32 %v1615, 2147483648
        %v2953 = vsel %vm2951, %v2952, %v2950
        %v2954 = vrsqrt.pop %v1616
        %v2955 = vmul.f32 %v2954, %v1616
        %v2956 = vmul.f32 %v2955, %v2954
        %v2957 = vmul.f32 0.5, %v2956
        %v2958 = vsub.f32 1.5, %v2957
        %v2959 = vmul.f32 %v2954, %v2958
        %v2960 = vmul.f32 %v1616, %v2959
        %vm2961 = vcmp.eq.f32.partialorder %v1616, inf
        %v2962 = vsel %vm2961, %v1616, %v2960
        %vm2963 = vcmp.eq.f32.partialorder %v1616, 0.0
        %v2964 = vand.u32 %v1616, 2147483648
        %v2965 = vsel %vm2963, %v2964, %v2962
        %v2966 = vrsqrt.pop %v1617
        %v2967 = vmul.f32 %v2966, %v1617
        %v2968 = vmul.f32 %v2967, %v2966
        %v2969 = vmul.f32 0.5, %v2968
        %v2970 = vsub.f32 1.5, %v2969
        %v2971 = vmul.f32 %v2966, %v2970
        %v2972 = vmul.f32 %v1617, %v2971
        %vm2973 = vcmp.eq.f32.partialorder %v1617, inf
        %v2974 = vsel %vm2973, %v1617, %v2972
        %vm2975 = vcmp.eq.f32.partialorder %v1617, 0.0
        %v2976 = vand.u32 %v1617, 2147483648
        %v2977 = vsel %vm2975, %v2976, %v2974
        %v2978 = vrsqrt.pop %v1618
        %v2979 = vmul.f32 %v2978, %v1618
        %v2980 = vmul.f32 %v2979, %v2978
        %v2981 = vmul.f32 0.5, %v2980
        %v2982 = vsub.f32 1.5, %v2981
        %v2983 = vmul.f32 %v2978, %v2982
        %v2984 = vmul.f32 %v1618, %v2983
        %vm2985 = vcmp.eq.f32.partialorder %v1618, inf
        %v2986 = vsel %vm2985, %v1618, %v2984
        %vm2987 = vcmp.eq.f32.partialorder %v1618, 0.0
        %v2988 = vand.u32 %v1618, 2147483648
        %v2989 = vsel %vm2987, %v2988, %v2986
        %v2990 = vrsqrt.pop %v1619
        %v2991 = vmul.f32 %v2990, %v1619
        %v2992 = vmul.f32 %v2991, %v2990
        %v2993 = vmul.f32 0.5, %v2992
        %v2994 = vsub.f32 1.5, %v2993
        %v2995 = vmul.f32 %v2990, %v2994
        %v2996 = vmul.f32 %v1619, %v2995
        %vm2997 = vcmp.eq.f32.partialorder %v1619, inf
        %v2998 = vsel %vm2997, %v1619, %v2996
        %vm2999 = vcmp.eq.f32.partialorder %v1619, 0.0
        %v3000 = vand.u32 %v1619, 2147483648
        %v3001 = vsel %vm2999, %v3000, %v2998
        %v3002 = vrsqrt.pop %v1620
        %v3003 = vmul.f32 %v3002, %v1620
        %v3004 = vmul.f32 %v3003, %v3002
        %v3005 = vmul.f32 0.5, %v3004
        %v3006 = vsub.f32 1.5, %v3005
        %v3007 = vmul.f32 %v3002, %v3006
        %v3008 = vmul.f32 %v1620, %v3007
        %vm3009 = vcmp.eq.f32.partialorder %v1620, inf
        %v3010 = vsel %vm3009, %v1620, %v3008
        %vm3011 = vcmp.eq.f32.partialorder %v1620, 0.0
        %v3012 = vand.u32 %v1620, 2147483648
        %v3013 = vsel %vm3011, %v3012, %v3010
        %v3014 = vrsqrt.pop %v1621
        %v3015 = vmul.f32 %v3014, %v1621
        %v3016 = vmul.f32 %v3015, %v3014
        %v3017 = vmul.f32 0.5, %v3016
        %v3018 = vsub.f32 1.5, %v3017
        %v3019 = vmul.f32 %v3014, %v3018
        %v3020 = vmul.f32 %v1621, %v3019
        %vm3021 = vcmp.eq.f32.partialorder %v1621, inf
        %v3022 = vsel %vm3021, %v1621, %v3020
        %vm3023 = vcmp.eq.f32.partialorder %v1621, 0.0
        %v3024 = vand.u32 %v1621, 2147483648
        %v3025 = vsel %vm3023, %v3024, %v3022
        %v3026 = vrsqrt.pop %v1622
        %v3027 = vmul.f32 %v3026, %v1622
        %v3028 = vmul.f32 %v3027, %v3026
        %v3029 = vmul.f32 0.5, %v3028
        %v3030 = vsub.f32 1.5, %v3029
        %v3031 = vmul.f32 %v3026, %v3030
        %v3032 = vmul.f32 %v1622, %v3031
        %vm3033 = vcmp.eq.f32.partialorder %v1622, inf
        %v3034 = vsel %vm3033, %v1622, %v3032
        %vm3035 = vcmp.eq.f32.partialorder %v1622, 0.0
        %v3036 = vand.u32 %v1622, 2147483648
        %v3037 = vsel %vm3035, %v3036, %v3034
        %v3038 = vrsqrt.pop %v1623
        %v3039 = vmul.f32 %v3038, %v1623
        %v3040 = vmul.f32 %v3039, %v3038
        %v3041 = vmul.f32 0.5, %v3040
        %v3042 = vsub.f32 1.5, %v3041
        %v3043 = vmul.f32 %v3038, %v3042
        %v3044 = vmul.f32 %v1623, %v3043
        %vm3045 = vcmp.eq.f32.partialorder %v1623, inf
        %v3046 = vsel %vm3045, %v1623, %v3044
        %vm3047 = vcmp.eq.f32.partialorder %v1623, 0.0
        %v3048 = vand.u32 %v1623, 2147483648
        %v3049 = vsel %vm3047, %v3048, %v3046
        %v3050 = vrsqrt.pop %v1624
        %v3051 = vmul.f32 %v3050, %v1624
        %v3052 = vmul.f32 %v3051, %v3050
        %v3053 = vmul.f32 0.5, %v3052
        %v3054 = vsub.f32 1.5, %v3053
        %v3055 = vmul.f32 %v3050, %v3054
        %v3056 = vmul.f32 %v1624, %v3055
        %vm3057 = vcmp.eq.f32.partialorder %v1624, inf
        %v3058 = vsel %vm3057, %v1624, %v3056
        %vm3059 = vcmp.eq.f32.partialorder %v1624, 0.0
        %v3060 = vand.u32 %v1624, 2147483648
        %v3061 = vsel %vm3059, %v3060, %v3058
        %v3062 = vrsqrt.pop %v1625
        %v3063 = vmul.f32 %v3062, %v1625
        %v3064 = vmul.f32 %v3063, %v3062
        %v3065 = vmul.f32 0.5, %v3064
        %v3066 = vsub.f32 1.5, %v3065
        %v3067 = vmul.f32 %v3062, %v3066
        %v3068 = vmul.f32 %v1625, %v3067
        %vm3069 = vcmp.eq.f32.partialorder %v1625, inf
        %v3070 = vsel %vm3069, %v1625, %v3068
        %vm3071 = vcmp.eq.f32.partialorder %v1625, 0.0
        %v3072 = vand.u32 %v1625, 2147483648
        %v3073 = vsel %vm3071, %v3072, %v3070
        %v3074 = vrsqrt.pop %v1626
        %v3075 = vmul.f32 %v3074, %v1626
        %v3076 = vmul.f32 %v3075, %v3074
        %v3077 = vmul.f32 0.5, %v3076
        %v3078 = vsub.f32 1.5, %v3077
        %v3079 = vmul.f32 %v3074, %v3078
        %v3080 = vmul.f32 %v1626, %v3079
        %vm3081 = vcmp.eq.f32.partialorder %v1626, inf
        %v3082 = vsel %vm3081, %v1626, %v3080
        %vm3083 = vcmp.eq.f32.partialorder %v1626, 0.0
        %v3084 = vand.u32 %v1626, 2147483648
        %v3085 = vsel %vm3083, %v3084, %v3082
        %v3086 = vrsqrt.pop %v1627
        %v3087 = vmul.f32 %v3086, %v1627
        %v3088 = vmul.f32 %v3087, %v3086
        %v3089 = vmul.f32 0.5, %v3088
        %v3090 = vsub.f32 1.5, %v3089
        %v3091 = vmul.f32 %v3086, %v3090
        %v3092 = vmul.f32 %v1627, %v3091
        %vm3093 = vcmp.eq.f32.partialorder %v1627, inf
        %v3094 = vsel %vm3093, %v1627, %v3092
        %vm3095 = vcmp.eq.f32.partialorder %v1627, 0.0
        %v3096 = vand.u32 %v1627, 2147483648
        %v3097 = vsel %vm3095, %v3096, %v3094
        %v3098 = vrsqrt.pop %v1628
        %v3099 = vmul.f32 %v3098, %v1628
        %v3100 = vmul.f32 %v3099, %v3098
        %v3101 = vmul.f32 0.5, %v3100
        %v3102 = vsub.f32 1.5, %v3101
        %v3103 = vmul.f32 %v3098, %v3102
        %v3104 = vmul.f32 %v1628, %v3103
        %vm3105 = vcmp.eq.f32.partialorder %v1628, inf
        %v3106 = vsel %vm3105, %v1628, %v3104
        %vm3107 = vcmp.eq.f32.partialorder %v1628, 0.0
        %v3108 = vand.u32 %v1628, 2147483648
        %v3109 = vsel %vm3107, %v3108, %v3106
        %v3110 = vrsqrt.pop %v1629
        %v3111 = vmul.f32 %v3110, %v1629
        %v3112 = vmul.f32 %v3111, %v3110
        %v3113 = vmul.f32 0.5, %v3112
        %v3114 = vsub.f32 1.5, %v3113
        %v3115 = vmul.f32 %v3110, %v3114
        %v3116 = vmul.f32 %v1629, %v3115
        %vm3117 = vcmp.eq.f32.partialorder %v1629, inf
        %v3118 = vsel %vm3117, %v1629, %v3116
        %vm3119 = vcmp.eq.f32.partialorder %v1629, 0.0
        %v3120 = vand.u32 %v1629, 2147483648
        %v3121 = vsel %vm3119, %v3120, %v3118
        %v3122 = vrsqrt.pop %v1630
        %v3123 = vmul.f32 %v3122, %v1630
        %v3124 = vmul.f32 %v3123, %v3122
        %v3125 = vmul.f32 0.5, %v3124
        %v3126 = vsub.f32 1.5, %v3125
        %v3127 = vmul.f32 %v3122, %v3126
        %v3128 = vmul.f32 %v1630, %v3127
        %vm3129 = vcmp.eq.f32.partialorder %v1630, inf
        %v3130 = vsel %vm3129, %v1630, %v3128
        %vm3131 = vcmp.eq.f32.partialorder %v1630, 0.0
        %v3132 = vand.u32 %v1630, 2147483648
        %v3133 = vsel %vm3131, %v3132, %v3130
        %v3134 = vrsqrt.pop %v1631
        %v3135 = vmul.f32 %v3134, %v1631
        %v3136 = vmul.f32 %v3135, %v3134
        %v3137 = vmul.f32 0.5, %v3136
        %v3138 = vsub.f32 1.5, %v3137
        %v3139 = vmul.f32 %v3134, %v3138
        %v3140 = vmul.f32 %v1631, %v3139
        %vm3141 = vcmp.eq.f32.partialorder %v1631, inf
        %v3142 = vsel %vm3141, %v1631, %v3140
        %vm3143 = vcmp.eq.f32.partialorder %v1631, 0.0
        %v3144 = vand.u32 %v1631, 2147483648
        %v3145 = vsel %vm3143, %v3144, %v3142
        %v3146 = vrsqrt.pop %v1632
        %v3147 = vmul.f32 %v3146, %v1632
        %v3148 = vmul.f32 %v3147, %v3146
        %v3149 = vmul.f32 0.5, %v3148
        %v3150 = vsub.f32 1.5, %v3149
        %v3151 = vmul.f32 %v3146, %v3150
        %v3152 = vmul.f32 %v1632, %v3151
        %vm3153 = vcmp.eq.f32.partialorder %v1632, inf
        %v3154 = vsel %vm3153, %v1632, %v3152
        %vm3155 = vcmp.eq.f32.partialorder %v1632, 0.0
        %v3156 = vand.u32 %v1632, 2147483648
        %v3157 = vsel %vm3155, %v3156, %v3154
        %v3158 = vrsqrt.pop %v1633
        %v3159 = vmul.f32 %v3158, %v1633
        %v3160 = vmul.f32 %v3159, %v3158
        %v3161 = vmul.f32 0.5, %v3160
        %v3162 = vsub.f32 1.5, %v3161
        %v3163 = vmul.f32 %v3158, %v3162
        %v3164 = vmul.f32 %v1633, %v3163
        %vm3165 = vcmp.eq.f32.partialorder %v1633, inf
        %v3166 = vsel %vm3165, %v1633, %v3164
        %vm3167 = vcmp.eq.f32.partialorder %v1633, 0.0
        %v3168 = vand.u32 %v1633, 2147483648
        %v3169 = vsel %vm3167, %v3168, %v3166
        %v3170 = vld [vmem:[%s2] sm:$0xff]
        %3171 = vmatpush.xpose.msra.mxu0 %v1825
        %3172 = vmatpush.xpose.msra.mxu0 %v1813
        %3173 = vmatpush.xpose.msra.mxu0 %v1801
        %3174 = vmatpush.xpose.msra.mxu0 %v1789
        %3175 = vmatpush.xpose.msra.mxu0 %v1777
        %3176 = vmatpush.xpose.msra.mxu0 %v1765
        %3177 = vmatpush.xpose.msra.mxu0 %v1753
        %3178 = vmatpush.xpose.msra.mxu0 %v1741
        %3179 = vmatpush.xpose.msra.mxu0 %v1729
        %3180 = vmatpush.xpose.msra.mxu0 %v1717
        %3181 = vmatpush.xpose.msra.mxu0 %v1705
        %3182 = vmatpush.xpose.msra.mxu0 %v1693
        %3183 = vmatpush.xpose.msra.mxu0 %v1681
        %3184 = vmatpush.xpose.msra.mxu0 %v1669
        %3185 = vmatpush.xpose.msra.mxu0 %v1657
        %3186 = vmatpush.xpose.msra.mxu0 %v1645
        %3187 = vmatmul.f32.gmra.mxu0 %v3170
        %v3188 = vpop.f32.mrf.mxu0
        %v3189 = vadd.f32 0.0, %v3188
        %3190 = vdwg.mxu0
        %3191 = vmatpush.xpose.msra.mxu0 %v2017
        %3192 = vmatpush.xpose.msra.mxu0 %v2005
        %3193 = vmatpush.xpose.msra.mxu0 %v1993
        %3194 = vmatpush.xpose.msra.mxu0 %v1981
        %3195 = vmatpush.xpose.msra.mxu0 %v1969
        %3196 = vmatpush.xpose.msra.mxu0 %v1957
        %3197 = vmatpush.xpose.msra.mxu0 %v1945
        %3198 = vmatpush.xpose.msra.mxu0 %v1933
        %3199 = vmatpush.xpose.msra.mxu0 %v1921
        %3200 = vmatpush.xpose.msra.mxu0 %v1909
        %3201 = vmatpush.xpose.msra.mxu0 %v1897
        %3202 = vmatpush.xpose.msra.mxu0 %v1885
        %3203 = vmatpush.xpose.msra.mxu0 %v1873
        %3204 = vmatpush.xpose.msra.mxu0 %v1861
        %3205 = vmatpush.xpose.msra.mxu0 %v1849
        %3206 = vmatpush.xpose.msra.mxu0 %v1837
        %3207 = vmatmul.f32.gmra.mxu0 %v3170
        %v3208 = vpop.f32.mrf.mxu0
        %v3209 = vadd.f32 0.0, %v3208
        %3210 = vdwg.mxu0
        %3211 = vmatpush.xpose.msra.mxu0 %v2209
        %3212 = vmatpush.xpose.msra.mxu0 %v2197
        %3213 = vmatpush.xpose.msra.mxu0 %v2185
        %3214 = vmatpush.xpose.msra.mxu0 %v2173
        %3215 = vmatpush.xpose.msra.mxu0 %v2161
        %3216 = vmatpush.xpose.msra.mxu0 %v2149
        %3217 = vmatpush.xpose.msra.mxu0 %v2137
        %3218 = vmatpush.xpose.msra.mxu0 %v2125
        %3219 = vmatpush.xpose.msra.mxu0 %v2113
        %3220 = vmatpush.xpose.msra.mxu0 %v2101
        %3221 = vmatpush.xpose.msra.mxu0 %v2089
        %3222 = vmatpush.xpose.msra.mxu0 %v2077
        %3223 = vmatpush.xpose.msra.mxu0 %v2065
        %3224 = vmatpush.xpose.msra.mxu0 %v2053
        %3225 = vmatpush.xpose.msra.mxu0 %v2041
        %3226 = vmatpush.xpose.msra.mxu0 %v2029
        %3227 = vmatmul.f32.gmra.mxu0 %v3170
        %v3228 = vpop.f32.mrf.mxu0
        %v3229 = vadd.f32 0.0, %v3228
        %3230 = vdwg.mxu0
        %3231 = vmatpush.xpose.msra.mxu0 %v2401
        %3232 = vmatpush.xpose.msra.mxu0 %v2389
        %3233 = vmatpush.xpose.msra.mxu0 %v2377
        %3234 = vmatpush.xpose.msra.mxu0 %v2365
        %3235 = vmatpush.xpose.msra.mxu0 %v2353
        %3236 = vmatpush.xpose.msra.mxu0 %v2341
        %3237 = vmatpush.xpose.msra.mxu0 %v2329
        %3238 = vmatpush.xpose.msra.mxu0 %v2317
        %3239 = vmatpush.xpose.msra.mxu0 %v2305
        %3240 = vmatpush.xpose.msra.mxu0 %v2293
        %3241 = vmatpush.xpose.msra.mxu0 %v2281
        %3242 = vmatpush.xpose.msra.mxu0 %v2269
        %3243 = vmatpush.xpose.msra.mxu0 %v2257
        %3244 = vmatpush.xpose.msra.mxu0 %v2245
        %3245 = vmatpush.xpose.msra.mxu0 %v2233
        %3246 = vmatpush.xpose.msra.mxu0 %v2221
        %3247 = vmatmul.f32.gmra.mxu0 %v3170
        %v3248 = vpop.f32.mrf.mxu0
        %v3249 = vadd.f32 0.0, %v3248
        %3250 = vdwg.mxu0
        %3251 = vmatpush.xpose.msra.mxu0 %v2593
        %3252 = vmatpush.xpose.msra.mxu0 %v2581
        %3253 = vmatpush.xpose.msra.mxu0 %v2569
        %3254 = vmatpush.xpose.msra.mxu0 %v2557
        %3255 = vmatpush.xpose.msra.mxu0 %v2545
        %3256 = vmatpush.xpose.msra.mxu0 %v2533
        %3257 = vmatpush.xpose.msra.mxu0 %v2521
        %3258 = vmatpush.xpose.msra.mxu0 %v2509
        %3259 = vmatpush.xpose.msra.mxu0 %v2497
        %3260 = vmatpush.xpose.msra.mxu0 %v2485
        %3261 = vmatpush.xpose.msra.mxu0 %v2473
        %3262 = vmatpush.xpose.msra.mxu0 %v2461
        %3263 = vmatpush.xpose.msra.mxu0 %v2449
        %3264 = vmatpush.xpose.msra.mxu0 %v2437
        %3265 = vmatpush.xpose.msra.mxu0 %v2425
        %3266 = vmatpush.xpose.msra.mxu0 %v2413
        %3267 = vmatmul.f32.gmra.mxu0 %v3170
        %v3268 = vpop.f32.mrf.mxu0
        %v3269 = vadd.f32 0.0, %v3268
        %3270 = vdwg.mxu0
        %3271 = vmatpush.xpose.msra.mxu0 %v2785
        %3272 = vmatpush.xpose.msra.mxu0 %v2773
        %3273 = vmatpush.xpose.msra.mxu0 %v2761
        %3274 = vmatpush.xpose.msra.mxu0 %v2749
        %3275 = vmatpush.xpose.msra.mxu0 %v2737
        %3276 = vmatpush.xpose.msra.mxu0 %v2725
        %3277 = vmatpush.xpose.msra.mxu0 %v2713
        %3278 = vmatpush.xpose.msra.mxu0 %v2701
        %3279 = vmatpush.xpose.msra.mxu0 %v2689
        %3280 = vmatpush.xpose.msra.mxu0 %v2677
        %3281 = vmatpush.xpose.msra.mxu0 %v2665
        %3282 = vmatpush.xpose.msra.mxu0 %v2653
        %3283 = vmatpush.xpose.msra.mxu0 %v2641
        %3284 = vmatpush.xpose.msra.mxu0 %v2629
        %3285 = vmatpush.xpose.msra.mxu0 %v2617
        %3286 = vmatpush.xpose.msra.mxu0 %v2605
        %3287 = vmatmul.f32.gmra.mxu0 %v3170
        %v3288 = vpop.f32.mrf.mxu0
        %v3289 = vadd.f32 0.0, %v3288
        %3290 = vdwg.mxu0
        %3291 = vmatpush.xpose.msra.mxu0 %v2977
        %3292 = vmatpush.xpose.msra.mxu0 %v2965
        %3293 = vmatpush.xpose.msra.mxu0 %v2953
        %3294 = vmatpush.xpose.msra.mxu0 %v2941
        %3295 = vmatpush.xpose.msra.mxu0 %v2929
        %3296 = vmatpush.xpose.msra.mxu0 %v2917
        %3297 = vmatpush.xpose.msra.mxu0 %v2905
        %3298 = vmatpush.xpose.msra.mxu0 %v2893
        %3299 = vmatpush.xpose.msra.mxu0 %v2881
        %3300 = vmatpush.xpose.msra.mxu0 %v2869
        %3301 = vmatpush.xpose.msra.mxu0 %v2857
        %3302 = vmatpush.xpose.msra.mxu0 %v2845
        %3303 = vmatpush.xpose.msra.mxu0 %v2833
        %3304 = vmatpush.xpose.msra.mxu0 %v2821
        %3305 = vmatpush.xpose.msra.mxu0 %v2809
        %3306 = vmatpush.xpose.msra.mxu0 %v2797
        %3307 = vmatmul.f32.gmra.mxu0 %v3170
        %v3308 = vpop.f32.mrf.mxu0
        %v3309 = vadd.f32 0.0, %v3308
        %3310 = vdwg.mxu0
        %3311 = vmatpush.xpose.msra.mxu0 %v3169
        %3312 = vmatpush.xpose.msra.mxu0 %v3157
        %3313 = vmatpush.xpose.msra.mxu0 %v3145
        %3314 = vmatpush.xpose.msra.mxu0 %v3133
        %3315 = vmatpush.xpose.msra.mxu0 %v3121
        %3316 = vmatpush.xpose.msra.mxu0 %v3109
        %3317 = vmatpush.xpose.msra.mxu0 %v3097
        %3318 = vmatpush.xpose.msra.mxu0 %v3085
        %3319 = vmatpush.xpose.msra.mxu0 %v3073
        %3320 = vmatpush.xpose.msra.mxu0 %v3061
        %3321 = vmatpush.xpose.msra.mxu0 %v3049
        %3322 = vmatpush.xpose.msra.mxu0 %v3037
        %3323 = vmatpush.xpose.msra.mxu0 %v3025
        %3324 = vmatpush.xpose.msra.mxu0 %v3013
        %3325 = vmatpush.xpose.msra.mxu0 %v3001
        %3326 = vmatpush.xpose.msra.mxu0 %v2989
        %3327 = vmatmul.f32.gmra.mxu0 %v3170
        %v3328 = vpop.f32.mrf.mxu0
        %v3329 = vadd.f32 0.0, %v3328
        %3330 = vdwg.mxu0
        %v3331 = vmax.f32 %v3189, 1e-05
        %v3332 = vmax.f32 %v3209, 1e-05
        %v3333 = vmax.f32 %v3229, 1e-05
        %v3334 = vmax.f32 %v3249, 1e-05
        %v3335 = vmax.f32 %v3269, 1e-05
        %v3336 = vmax.f32 %v3289, 1e-05
        %v3337 = vmax.f32 %v3309, 1e-05
        %v3338 = vmax.f32 %v3329, 1e-05
        %v3339 = vlog2.pop %v3331
        %v3340 = vmul.f32 %v3339, 0.6931472
        %v3341 = vlog2.pop %v3332
        %v3342 = vmul.f32 %v3341, 0.6931472
        %v3343 = vlog2.pop %v3333
        %v3344 = vmul.f32 %v3343, 0.6931472
        %v3345 = vlog2.pop %v3334
        %v3346 = vmul.f32 %v3345, 0.6931472
        %v3347 = vlog2.pop %v3335
        %v3348 = vmul.f32 %v3347, 0.6931472
        %v3349 = vlog2.pop %v3336
        %v3350 = vmul.f32 %v3349, 0.6931472
        %v3351 = vlog2.pop %v3337
        %v3352 = vmul.f32 %v3351, 0.6931472
        %v3353 = vlog2.pop %v3338
        %v3354 = vmul.f32 %v3353, 0.6931472
        %3355 = vst [vmem:[%s188] sm:$0xff] %v3340
        %3356 = vst [vmem:[%s188 + $0x8] sm:$0xff] %v3342
        %3357 = vst [vmem:[%s188 + $0x10] sm:$0xff] %v3344
        %3358 = vst [vmem:[%s188 + $0x18] sm:$0xff] %v3346
        %3359 = vst [vmem:[%s188 + $0x20] sm:$0xff] %v3348
        %3360 = vst [vmem:[%s188 + $0x28] sm:$0xff] %v3350
        %3361 = vst [vmem:[%s188 + $0x30] sm:$0xff] %v3352
        %3362 = vst [vmem:[%s188 + $0x38] sm:$0xff] %v3354
        %s3363 = sand.u32 %s109, 1
        %s3364 = scalar_lea.sflag [#allocation3], %s3363
        %s3365 = sand.u32 %s109, 1
        %s3366 = smul.addr %s3365, 64
        %s3367 = scalar_lea.vmem [#allocation2], %s3366
        // Predicated region
        $region33: #{tpu_custom_call.1} parent=31 // pred_check
          %p3368 = pneg %p119
        $region34: #{tpu_custom_call.1} parent=31 // pred_check_branch
          %3370 = sbr.rel (%p3368) target = $region36
        $region35: #{tpu_custom_call.1} parent=31 // pred_region
          %s3371 = smul.u32 8, %s22
          %3373 = vsyncadd %s3364, 0
          %s3374 = smul.addr %s21, 16
          %s3375 = sadd.s32 %s3371, %s3374
          %s3376 = smul.addr %s3375, 8
          %s3377 = scalar_lea.hbm %s3, %s3376
          %s3379 = sshll.u32 %s3367, 4
          %s3380 = int_to_ptr.vmem [resolvable:$true] %s3379
          %s3381 = sshll.u32 %s3377, 4
          %s3382 = int_to_ptr.hbm [resolvable:$true] %s3381
          %3384 = dma.vmem_to_hbm [thread:$0]  %s3380, 1024, %s3382, %s3364
        $region36: #{tpu_custom_call.1} parent=31 // pred_fallthru
          _
      $region32: #{tpu_custom_call.1} parent=5 // pred_fallthru
        _
      %p3385 = scmp.le.s32.totalorder 2, %s12
      // Predicated region
      $region37: #{tpu_custom_call.1} parent=5 // pred_check
        %p3386 = pneg %p3385
      $region38: #{tpu_custom_call.1} parent=5 // pred_check_branch
        %3388 = sbr.rel (%p3386) target = $region40
      $region39: #{tpu_custom_call.1} parent=5 // pred_region
        %s3389 = ssub.s32 %s12, 2
        // Predicated region
        $region41: #{tpu_custom_call.1} parent=39 // pred_check
          %p3390 = pneg %p125
        $region42: #{tpu_custom_call.1} parent=39 // pred_check_branch
          %3392 = sbr.rel (%p3390) target = $region44
        $region43: #{tpu_custom_call.1} parent=39 // pred_region
          %s3393 = sand.u32 %s110, 1
          %s3394 = scalar_lea.sflag [#allocation3], %s3393
          %s3395 = sand.u32 %s110, 1
          %s3396 = smul.addr %s3395, 64
          %s3397 = scalar_lea.vmem [#allocation2], %s3396
          %3399 = dma.done %s3394, 1024
        $region44: #{tpu_custom_call.1} parent=39 // pred_fallthru
          _
      $region40: #{tpu_custom_call.1} parent=5 // pred_fallthru
        _
    $region6: #{tpu_custom_call.1} parent=1 // loop_footer
      %s16 = sadd.s32 1, %s12
    $region7: #{tpu_custom_call.1} parent=1 // loop_footer_branch
      %11 = sbr.rel target = $region3
    $region8: #{tpu_custom_call.1} parent=1 // loop_exit
      _
    %3400 = vsyncpa [#allocation3], 1
    %s3401 = scalar_lea.sflag [#allocation3], 1
    %3402 = vsyncpa %s3401, 1

</llo_original>
